<compile_context>
chip_gen: v7x
topology: tpu7x:2x2x1
jax: 0.10.0
libtpu: 0.0.40
codegen_flags: <defaults>
</compile_context>

<pallas_src>
import functools

import jax
import jax.numpy as jnp
from jax import lax
from jax.experimental import pallas as pl
from jax.experimental.pallas import tpu as pltpu

Z_DIM = 100                      # latent size (constructor arg of Generator)
DIMS = [Z_DIM, 128, 256, 512, 1024, 784]
Z_PAD = 128                      # lane-aligned latent padding (done once)
LRELU_SLOPE = 0.2
BN_EPS = 1e-5                    # PyTorch BatchNorm1d default


def _round_up(n, m):
    return (n + m - 1) // m * m


def _lrelu(x):
    return jnp.where(x > 0, x, LRELU_SLOPE * x)


def generator_kernel(x_ref, w1, b1, w2, b2, w3, b3, w4, b4, w5, b5, o_ref):
    """Whole 5-layer MLP on one batch tile: bf16 MXU inputs, f32 accum/math."""
    h = x_ref[...].astype(jnp.bfloat16)
    h = _lrelu(jnp.dot(h, w1[...], preferred_element_type=jnp.float32) + b1[...])
    h = _lrelu(jnp.dot(h.astype(jnp.bfloat16), w2[...],
                       preferred_element_type=jnp.float32) + b2[...])
    h = _lrelu(jnp.dot(h.astype(jnp.bfloat16), w3[...],
                       preferred_element_type=jnp.float32) + b3[...])
    h = _lrelu(jnp.dot(h.astype(jnp.bfloat16), w4[...],
                       preferred_element_type=jnp.float32) + b4[...])
    h = jnp.dot(h.astype(jnp.bfloat16), w5[...],
                preferred_element_type=jnp.float32) + b5[...]
    o_ref[...] = jnp.tanh(h)


def prepare_params(raw_params):
    """One-time parameter prep (hoisted out of the hot path).

    raw_params: list of 5 tuples (W[in,out] f32, b[out] f32, bn) where bn is
    None or (gamma, beta, running_mean, running_var).

    Folds eval-mode BatchNorm into the linear (W*scale, (b-mean)*scale+beta),
    zero-pads layer-1 input rows z_dim -> Z_PAD, casts weights to bf16 and
    reshapes biases to (1, out) f32.
    """
    prepped = []
    for li, (w, b, bn) in enumerate(raw_params):
        w = w.astype(jnp.float32)
        b = b.astype(jnp.float32)
        if bn is not None:
            gamma, beta, mean, var = (a.astype(jnp.float32) for a in bn)
            scale = gamma * lax.rsqrt(var + BN_EPS)
            w = w * scale[None, :]
            b = (b - mean) * scale + beta
        if li == 0:
            w = jnp.zeros((Z_PAD, w.shape[1]), jnp.float32).at[:w.shape[0], :].set(w)
        prepped.append((w.astype(jnp.bfloat16), b.reshape(1, -1)))
    return tuple(prepped)


@jax.jit
def generator_forward(x, prepped):
    """x: (B, z_dim) f32 latent.  Returns (B, 784) f32 in [-1, 1]."""
    B, z_dim = x.shape
    TB = min(256, _round_up(B, 8))          # batch tile: fills MXU M dim
    B_pad = _round_up(B, TB)
    grid = (B_pad // TB,)

    # Only the (small) latent input is padded per call; weights are pre-padded.
    x_pad = jnp.zeros((B_pad, Z_PAD), jnp.float32).at[:B, :z_dim].set(
        x.astype(jnp.float32))

    in_specs = [pl.BlockSpec((TB, Z_PAD), lambda i: (i, 0))]
    flat_args = [x_pad]
    for w, b in prepped:
        in_specs.append(pl.BlockSpec(w.shape, lambda i: (0, 0)))   # VMEM-resident
        in_specs.append(pl.BlockSpec(b.shape, lambda i: (0, 0)))
        flat_args.extend([w, b])

    flops = 2 * B_pad * sum(DIMS[i] * DIMS[i + 1] for i in range(5))
    bytes_accessed = (sum(w.size * 2 + b.size * 4 for w, b in prepped)
                      + x_pad.size * 4 + B_pad * DIMS[-1] * 4)
    transcendentals = B_pad * DIMS[-1]       # final tanh

    out = pl.pallas_call(
        generator_kernel,
        out_shape=jax.ShapeDtypeStruct((B_pad, DIMS[-1]), jnp.float32),
        grid=grid,
        in_specs=in_specs,
        out_specs=pl.BlockSpec((TB, DIMS[-1]), lambda i: (i, 0)),
        compiler_params=pltpu.CompilerParams(
            dimension_semantics=("parallel",)),
        cost_estimate=pl.CostEstimate(
            flops=flops, transcendentals=transcendentals,
            bytes_accessed=bytes_accessed),
    )(*flat_args)

    return out[:B, :]


def init_raw_params(key, z_dim=Z_DIM):
    """PyTorch-style init: Linear U(-1/sqrt(fan_in), +1/sqrt(fan_in)),
    BatchNorm gamma=1 / beta=0, with non-trivial running stats so the
    eval-mode BN folding is actually exercised."""
    dims = list(DIMS)
    dims[0] = z_dim
    has_bn = [False, True, True, True, False]
    raw = []
    for li in range(5):
        fan_in, fan_out = dims[li], dims[li + 1]
        key, kw, kb, km, kv = jax.random.split(key, 5)
        bound = 1.0 / float(jnp.sqrt(fan_in))
        w = jax.random.uniform(kw, (fan_in, fan_out), jnp.float32, -bound, bound)
        b = jax.random.uniform(kb, (fan_out,), jnp.float32, -bound, bound)
        if has_bn[li]:
            gamma = jnp.ones((fan_out,), jnp.float32)
            beta = jnp.zeros((fan_out,), jnp.float32)
            mean = 0.1 * jax.random.normal(km, (fan_out,), jnp.float32)
            var = jnp.abs(jax.random.normal(kv, (fan_out,), jnp.float32)) + 0.5
            raw.append((w, b, (gamma, beta, mean, var)))
        else:
            raw.append((w, b, None))
    return raw


def reference_forward(x, prepped, z_dim=Z_DIM):
    """Pure-JAX reference mirroring the kernel arithmetic (bf16 matmul inputs,
    f32 accumulation) — i.e. the eval-mode Generator forward."""
    B = x.shape[0]
    h = jnp.zeros((B, Z_PAD), jnp.float32).at[:, :z_dim].set(x.astype(jnp.float32))
    n = len(prepped)
    for li, (w, b) in enumerate(prepped):
        h = jnp.dot(h.astype(jnp.bfloat16), w,
                    preferred_element_type=jnp.float32) + b[0]
        h = _lrelu(h) if li < n - 1 else jnp.tanh(h)
    return h


if __name__ == "__main__":
    key = jax.random.PRNGKey(0)
    key, kx = jax.random.split(key)

    B = 2
    x = jax.random.normal(kx, (B, Z_DIM), jnp.float32)

    raw = init_raw_params(key)
    prepped = prepare_params(raw)        # one-time prep, outside the hot path
    prepped = jax.block_until_ready(prepped)

    out = generator_forward(x, prepped)
    out = jax.block_until_ready(out)

    ref = reference_forward(x, prepped)
    assert out.shape == (B, 784), out.shape
    assert jnp.allclose(out, ref, atol=1e-2, rtol=1e-2), \
        float(jnp.max(jnp.abs(out - ref)))
    assert bool(jnp.all(jnp.abs(out) <= 1.0 + 1e-5))   # tanh range sanity

    print("KERNEL_OK")
</pallas_src>

<mosaic_0001>
module attributes {stable_mosaic.version = 11 : i64} {
  func.func @generator_kernel(%arg0: i32, %arg1: memref<8x128xf32, #tpu.memory_space<vmem>>, %arg2: memref<128x128xbf16, #tpu.memory_space<vmem>>, %arg3: memref<1x128xf32, #tpu.memory_space<vmem>>, %arg4: memref<128x256xbf16, #tpu.memory_space<vmem>>, %arg5: memref<1x256xf32, #tpu.memory_space<vmem>>, %arg6: memref<256x512xbf16, #tpu.memory_space<vmem>>, %arg7: memref<1x512xf32, #tpu.memory_space<vmem>>, %arg8: memref<512x1024xbf16, #tpu.memory_space<vmem>>, %arg9: memref<1x1024xf32, #tpu.memory_space<vmem>>, %arg10: memref<1024x784xbf16, #tpu.memory_space<vmem>>, %arg11: memref<1x784xf32, #tpu.memory_space<vmem>>, %arg12: memref<8x784xf32, #tpu.memory_space<vmem>>) attributes {dimension_semantics = [#tpu.dimension_semantics<parallel>], iteration_bounds = array<i64: 1>, scalar_prefetch = 0 : i64, scratch_operands = 0 : i64, tpu.core_type = #tpu.core_type<tc>, window_params = [{transform_indices = @transform_0, window_bounds = array<i64: 8, 128>}, {pipeline_mode = #tpu.pipeline_mode<synchronous>, transform_indices = @transform_1, window_bounds = array<i64: 128, 128>}, {pipeline_mode = #tpu.pipeline_mode<synchronous>, transform_indices = @transform_2, window_bounds = array<i64: 1, 128>}, {pipeline_mode = #tpu.pipeline_mode<synchronous>, transform_indices = @transform_3, window_bounds = array<i64: 128, 256>}, {pipeline_mode = #tpu.pipeline_mode<synchronous>, transform_indices = @transform_4, window_bounds = array<i64: 1, 256>}, {pipeline_mode = #tpu.pipeline_mode<synchronous>, transform_indices = @transform_5, window_bounds = array<i64: 256, 512>}, {pipeline_mode = #tpu.pipeline_mode<synchronous>, transform_indices = @transform_6, window_bounds = array<i64: 1, 512>}, {pipeline_mode = #tpu.pipeline_mode<synchronous>, transform_indices = @transform_7, window_bounds = array<i64: 512, 1024>}, {pipeline_mode = #tpu.pipeline_mode<synchronous>, transform_indices = @transform_8, window_bounds = array<i64: 1, 1024>}, {pipeline_mode = #tpu.pipeline_mode<synchronous>, transform_indices = @transform_9, window_bounds = array<i64: 1024, 784>}, {pipeline_mode = #tpu.pipeline_mode<synchronous>, transform_indices = @transform_10, window_bounds = array<i64: 1, 784>}, {transform_indices = @transform_11, window_bounds = array<i64: 8, 784>}]} {
    %c0 = arith.constant 0 : index
    %c0_0 = arith.constant 0 : index
    %0 = vector.load %arg1[%c0, %c0_0] : memref<8x128xf32, #tpu.memory_space<vmem>>, vector<8x128xf32>
    %1 = arith.truncf %0 : vector<8x128xf32> to vector<8x128xbf16>
    %c0_1 = arith.constant 0 : index
    %c0_2 = arith.constant 0 : index
    %2 = vector.load %arg2[%c0_1, %c0_2] : memref<128x128xbf16, #tpu.memory_space<vmem>>, vector<128x128xbf16>
    %cst = arith.constant dense<0.000000e+00> : vector<8x128xf32>
    %3 = tpu.matmul %1, %2, %cst {dimension_numbers = #tpu.dot_dimension_numbers<[1], [0], [0], [1], [0, 0, 1, 1], [], []>} : vector<8x128xbf16>, vector<128x128xbf16>, vector<8x128xf32> -> vector<8x128xf32>
    %c0_3 = arith.constant 0 : index
    %c0_4 = arith.constant 0 : index
    %4 = vector.load %arg3[%c0_3, %c0_4] : memref<1x128xf32, #tpu.memory_space<vmem>>, vector<1x128xf32>
    %5 = vector.broadcast %4 : vector<1x128xf32> to vector<8x128xf32>
    %6 = arith.addf %3, %5 : vector<8x128xf32>
    %cst_5 = arith.constant 0.000000e+00 : f32
    %7 = vector.broadcast %cst_5 : f32 to vector<8x128xf32>
    %8 = arith.cmpf ogt, %6, %7 : vector<8x128xf32>
    %cst_6 = arith.constant 2.000000e-01 : f32
    %9 = vector.broadcast %cst_6 : f32 to vector<8x128xf32>
    %10 = arith.mulf %9, %6 : vector<8x128xf32>
    %11 = arith.select %8, %6, %10 : vector<8x128xi1>, vector<8x128xf32>
    %12 = arith.truncf %11 : vector<8x128xf32> to vector<8x128xbf16>
    %c0_7 = arith.constant 0 : index
    %c0_8 = arith.constant 0 : index
    %13 = vector.load %arg4[%c0_7, %c0_8] : memref<128x256xbf16, #tpu.memory_space<vmem>>, vector<128x256xbf16>
    %cst_9 = arith.constant dense<0.000000e+00> : vector<8x256xf32>
    %14 = tpu.matmul %12, %13, %cst_9 {dimension_numbers = #tpu.dot_dimension_numbers<[1], [0], [0], [1], [0, 0, 1, 1], [], []>} : vector<8x128xbf16>, vector<128x256xbf16>, vector<8x256xf32> -> vector<8x256xf32>
    %c0_10 = arith.constant 0 : index
    %c0_11 = arith.constant 0 : index
    %15 = vector.load %arg5[%c0_10, %c0_11] : memref<1x256xf32, #tpu.memory_space<vmem>>, vector<1x256xf32>
    %16 = vector.broadcast %15 : vector<1x256xf32> to vector<8x256xf32>
    %17 = arith.addf %14, %16 : vector<8x256xf32>
    %cst_12 = arith.constant 0.000000e+00 : f32
    %18 = vector.broadcast %cst_12 : f32 to vector<8x256xf32>
    %19 = arith.cmpf ogt, %17, %18 : vector<8x256xf32>
    %cst_13 = arith.constant 2.000000e-01 : f32
    %20 = vector.broadcast %cst_13 : f32 to vector<8x256xf32>
    %21 = arith.mulf %20, %17 : vector<8x256xf32>
    %22 = arith.select %19, %17, %21 : vector<8x256xi1>, vector<8x256xf32>
    %23 = arith.truncf %22 : vector<8x256xf32> to vector<8x256xbf16>
    %c0_14 = arith.constant 0 : index
    %c0_15 = arith.constant 0 : index
    %24 = vector.load %arg6[%c0_14, %c0_15] : memref<256x512xbf16, #tpu.memory_space<vmem>>, vector<256x512xbf16>
    %cst_16 = arith.constant dense<0.000000e+00> : vector<8x512xf32>
    %25 = tpu.matmul %23, %24, %cst_16 {dimension_numbers = #tpu.dot_dimension_numbers<[1], [0], [0], [1], [0, 0, 1, 1], [], []>} : vector<8x256xbf16>, vector<256x512xbf16>, vector<8x512xf32> -> vector<8x512xf32>
    %c0_17 = arith.constant 0 : index
    %c0_18 = arith.constant 0 : index
    %26 = vector.load %arg7[%c0_17, %c0_18] : memref<1x512xf32, #tpu.memory_space<vmem>>, vector<1x512xf32>
    %27 = vector.broadcast %26 : vector<1x512xf32> to vector<8x512xf32>
    %28 = arith.addf %25, %27 : vector<8x512xf32>
    %cst_19 = arith.constant 0.000000e+00 : f32
    %29 = vector.broadcast %cst_19 : f32 to vector<8x512xf32>
    %30 = arith.cmpf ogt, %28, %29 : vector<8x512xf32>
    %cst_20 = arith.constant 2.000000e-01 : f32
    %31 = vector.broadcast %cst_20 : f32 to vector<8x512xf32>
    %32 = arith.mulf %31, %28 : vector<8x512xf32>
    %33 = arith.select %30, %28, %32 : vector<8x512xi1>, vector<8x512xf32>
    %34 = arith.truncf %33 : vector<8x512xf32> to vector<8x512xbf16>
    %c0_21 = arith.constant 0 : index
    %c0_22 = arith.constant 0 : index
    %35 = vector.load %arg8[%c0_21, %c0_22] : memref<512x1024xbf16, #tpu.memory_space<vmem>>, vector<512x1024xbf16>
    %cst_23 = arith.constant dense<0.000000e+00> : vector<8x1024xf32>
    %36 = tpu.matmul %34, %35, %cst_23 {dimension_numbers = #tpu.dot_dimension_numbers<[1], [0], [0], [1], [0, 0, 1, 1], [], []>} : vector<8x512xbf16>, vector<512x1024xbf16>, vector<8x1024xf32> -> vector<8x1024xf32>
    %c0_24 = arith.constant 0 : index
    %c0_25 = arith.constant 0 : index
    %37 = vector.load %arg9[%c0_24, %c0_25] : memref<1x1024xf32, #tpu.memory_space<vmem>>, vector<1x1024xf32>
    %38 = vector.broadcast %37 : vector<1x1024xf32> to vector<8x1024xf32>
    %39 = arith.addf %36, %38 : vector<8x1024xf32>
    %cst_26 = arith.constant 0.000000e+00 : f32
    %40 = vector.broadcast %cst_26 : f32 to vector<8x1024xf32>
    %41 = arith.cmpf ogt, %39, %40 : vector<8x1024xf32>
    %cst_27 = arith.constant 2.000000e-01 : f32
    %42 = vector.broadcast %cst_27 : f32 to vector<8x1024xf32>
    %43 = arith.mulf %42, %39 : vector<8x1024xf32>
    %44 = arith.select %41, %39, %43 : vector<8x1024xi1>, vector<8x1024xf32>
    %45 = arith.truncf %44 : vector<8x1024xf32> to vector<8x1024xbf16>
    %c0_28 = arith.constant 0 : index
    %c0_29 = arith.constant 0 : index
    %46 = vector.load %arg10[%c0_28, %c0_29] : memref<1024x784xbf16, #tpu.memory_space<vmem>>, vector<1024x784xbf16>
    %cst_30 = arith.constant dense<0.000000e+00> : vector<8x784xf32>
    %47 = tpu.matmul %45, %46, %cst_30 {dimension_numbers = #tpu.dot_dimension_numbers<[1], [0], [0], [1], [0, 0, 1, 1], [], []>} : vector<8x1024xbf16>, vector<1024x784xbf16>, vector<8x784xf32> -> vector<8x784xf32>
    %c0_31 = arith.constant 0 : index
    %c0_32 = arith.constant 0 : index
    %48 = vector.load %arg11[%c0_31, %c0_32] : memref<1x784xf32, #tpu.memory_space<vmem>>, vector<1x784xf32>
    %49 = vector.broadcast %48 : vector<1x784xf32> to vector<8x784xf32>
    %50 = arith.addf %47, %49 : vector<8x784xf32>
    %51 = math.tanh %50 : vector<8x784xf32>
    %c0_33 = arith.constant 0 : index
    %c0_34 = arith.constant 0 : index
    %52 = vector.load %arg12[%c0_33, %c0_34] : memref<8x784xf32, #tpu.memory_space<vmem>>, vector<8x784xf32>
    tpu.vector_store %arg12[%c0_33, %c0_34], %51 {strides = array<i32>} : memref<8x784xf32, #tpu.memory_space<vmem>>, vector<8x784xf32>,
    return
  }
  func.func @transform_0(%arg0: i32) -> (i32, i32) {
    %c0_i32 = arith.constant 0 : i32
    %c0_i32_0 = arith.constant 0 : i32
    return %arg0, %c0_i32 : i32, i32
  }
  func.func @transform_1(%arg0: i32) -> (i32, i32) {
    %c0_i32 = arith.constant 0 : i32
    %c0_i32_0 = arith.constant 0 : i32
    %c0_i32_1 = arith.constant 0 : i32
    return %c0_i32, %c0_i32_0 : i32, i32
  }
  func.func @transform_2(%arg0: i32) -> (i32, i32) {
    %c0_i32 = arith.constant 0 : i32
    %c0_i32_0 = arith.constant 0 : i32
    %c0_i32_1 = arith.constant 0 : i32
    return %c0_i32, %c0_i32_0 : i32, i32
  }
  func.func @transform_3(%arg0: i32) -> (i32, i32) {
    %c0_i32 = arith.constant 0 : i32
    %c0_i32_0 = arith.constant 0 : i32
    %c0_i32_1 = arith.constant 0 : i32
    return %c0_i32, %c0_i32_0 : i32, i32
  }
  func.func @transform_4(%arg0: i32) -> (i32, i32) {
    %c0_i32 = arith.constant 0 : i32
    %c0_i32_0 = arith.constant 0 : i32
    %c0_i32_1 = arith.constant 0 : i32
    return %c0_i32, %c0_i32_0 : i32, i32
  }
  func.func @transform_5(%arg0: i32) -> (i32, i32) {
    %c0_i32 = arith.constant 0 : i32
    %c0_i32_0 = arith.constant 0 : i32
    %c0_i32_1 = arith.constant 0 : i32
    return %c0_i32, %c0_i32_0 : i32, i32
  }
  func.func @transform_6(%arg0: i32) -> (i32, i32) {
    %c0_i32 = arith.constant 0 : i32
    %c0_i32_0 = arith.constant 0 : i32
    %c0_i32_1 = arith.constant 0 : i32
    return %c0_i32, %c0_i32_0 : i32, i32
  }
  func.func @transform_7(%arg0: i32) -> (i32, i32) {
    %c0_i32 = arith.constant 0 : i32
    %c0_i32_0 = arith.constant 0 : i32
    %c0_i32_1 = arith.constant 0 : i32
    return %c0_i32, %c0_i32_0 : i32, i32
  }
  func.func @transform_8(%arg0: i32) -> (i32, i32) {
    %c0_i32 = arith.constant 0 : i32
    %c0_i32_0 = arith.constant 0 : i32
    %c0_i32_1 = arith.constant 0 : i32
    return %c0_i32, %c0_i32_0 : i32, i32
  }
  func.func @transform_9(%arg0: i32) -> (i32, i32) {
    %c0_i32 = arith.constant 0 : i32
    %c0_i32_0 = arith.constant 0 : i32
    %c0_i32_1 = arith.constant 0 : i32
    return %c0_i32, %c0_i32_0 : i32, i32
  }
  func.func @transform_10(%arg0: i32) -> (i32, i32) {
    %c0_i32 = arith.constant 0 : i32
    %c0_i32_0 = arith.constant 0 : i32
    %c0_i32_1 = arith.constant 0 : i32
    return %c0_i32, %c0_i32_0 : i32, i32
  }
  func.func @transform_11(%arg0: i32) -> (i32, i32) {
    %c0_i32 = arith.constant 0 : i32
    %c0_i32_0 = arith.constant 0 : i32
    return %arg0, %c0_i32 : i32, i32
  }
}

</mosaic_0001>

<llo_original>
// kernel: generator_forward.1
$region0: #{generator_forward.1}
  #allocation0 [shape = 'u32[]', space=smem, size = 0x4, offset = 0x4, fixed_abs, tag = 'smem constant byte address 0x4 - core index']
  #allocation1 [shape = 'u32[144,128]{1,0:T(1,128)}', space=vmem, size = 0x12000, scoped, tag = 'internal scratch']
  %s0 = inlined_call_operand.vmem [shape: f32[8,128], index: 0, kind: input, shape index: {}]
  %s1 = inlined_call_operand.vmem [shape: bf16[128,128], index: 1, kind: input, shape index: {}]
  %s2 = inlined_call_operand.vmem [shape: f32[1,128], index: 2, kind: input, shape index: {}]
  %s3 = inlined_call_operand.vmem [shape: bf16[128,256], index: 3, kind: input, shape index: {}]
  %s4 = inlined_call_operand.vmem [shape: f32[1,256], index: 4, kind: input, shape index: {}]
  %s5 = inlined_call_operand.vmem [shape: bf16[256,512], index: 5, kind: input, shape index: {}]
  %s6 = inlined_call_operand.vmem [shape: f32[1,512], index: 6, kind: input, shape index: {}]
  %s7 = inlined_call_operand.vmem [shape: bf16[512,1024], index: 7, kind: input, shape index: {}]
  %s8 = inlined_call_operand.vmem [shape: f32[1,1024], index: 8, kind: input, shape index: {}]
  %s9 = inlined_call_operand.vmem [shape: bf16[1024,784], index: 9, kind: input, shape index: {}]
  %s10 = inlined_call_operand.vmem [shape: f32[1,784], index: 10, kind: input, shape index: {}]
  %s11 = inlined_call_operand.vmem [shape: f32[8,784], index: 11, kind: output, shape index: {}]
  %s12 = sld [smem:[#allocation0]]
  $region54: #{generator_forward.1} parent=0
    _
  %s14 = ssub.s32 1, %s12
  %s15 = scalar_select 0, %s14, %s12
  // Predicated region
  $region2: #{generator_forward.1} parent=0 // pred_check
    _
  $region3: #{generator_forward.1} parent=0 // pred_check_branch
    %17 = sbr.rel (0) target = $region5
  $region4: #{generator_forward.1} parent=0 // pred_region
    _
  $region5: #{generator_forward.1} parent=0 // pred_fallthru
    _
  // Predicated region
  $region6: #{generator_forward.1} parent=0 // pred_check
    _
  $region7: #{generator_forward.1} parent=0 // pred_check_branch
    %19 = sbr.rel (0) target = $region9
  $region8: #{generator_forward.1} parent=0 // pred_region
    _
  $region9: #{generator_forward.1} parent=0 // pred_fallthru
    _
  // Predicated region
  $region10: #{generator_forward.1} parent=0 // pred_check
    _
  $region11: #{generator_forward.1} parent=0 // pred_check_branch
    %21 = sbr.rel (0) target = $region13
  $region12: #{generator_forward.1} parent=0 // pred_region
    _
  $region13: #{generator_forward.1} parent=0 // pred_fallthru
    _
  // Predicated region
  $region14: #{generator_forward.1} parent=0 // pred_check
    _
  $region15: #{generator_forward.1} parent=0 // pred_check_branch
    %23 = sbr.rel (0) target = $region17
  $region16: #{generator_forward.1} parent=0 // pred_region
    _
  $region17: #{generator_forward.1} parent=0 // pred_fallthru
    _
  // Predicated region
  $region18: #{generator_forward.1} parent=0 // pred_check
    _
  $region19: #{generator_forward.1} parent=0 // pred_check_branch
    %25 = sbr.rel (0) target = $region21
  $region20: #{generator_forward.1} parent=0 // pred_region
    _
  $region21: #{generator_forward.1} parent=0 // pred_fallthru
    _
  // Predicated region
  $region22: #{generator_forward.1} parent=0 // pred_check
    _
  $region23: #{generator_forward.1} parent=0 // pred_check_branch
    %27 = sbr.rel (0) target = $region25
  $region24: #{generator_forward.1} parent=0 // pred_region
    _
  $region25: #{generator_forward.1} parent=0 // pred_fallthru
    _
  // Predicated region
  $region26: #{generator_forward.1} parent=0 // pred_check
    _
  $region27: #{generator_forward.1} parent=0 // pred_check_branch
    %29 = sbr.rel (0) target = $region29
  $region28: #{generator_forward.1} parent=0 // pred_region
    _
  $region29: #{generator_forward.1} parent=0 // pred_fallthru
    _
  // Predicated region
  $region30: #{generator_forward.1} parent=0 // pred_check
    _
  $region31: #{generator_forward.1} parent=0 // pred_check_branch
    %31 = sbr.rel (0) target = $region33
  $region32: #{generator_forward.1} parent=0 // pred_region
    _
  $region33: #{generator_forward.1} parent=0 // pred_fallthru
    _
  // Predicated region
  $region34: #{generator_forward.1} parent=0 // pred_check
    _
  $region35: #{generator_forward.1} parent=0 // pred_check_branch
    %33 = sbr.rel (0) target = $region37
  $region36: #{generator_forward.1} parent=0 // pred_region
    _
  $region37: #{generator_forward.1} parent=0 // pred_fallthru
    _
  // Predicated region
  $region38: #{generator_forward.1} parent=0 // pred_check
    _
  $region39: #{generator_forward.1} parent=0 // pred_check_branch
    %35 = sbr.rel (0) target = $region41
  $region40: #{generator_forward.1} parent=0 // pred_region
    _
  $region41: #{generator_forward.1} parent=0 // pred_fallthru
    _
  // Predicated region
  $region42: #{generator_forward.1} parent=0 // pred_check
    _
  $region43: #{generator_forward.1} parent=0 // pred_check_branch
    %37 = sbr.rel (0) target = $region45
  $region44: #{generator_forward.1} parent=0 // pred_region
    _
  $region45: #{generator_forward.1} parent=0 // pred_fallthru
    _
  %v39 = vld [vmem:[%s0] sm:$0xff]
  %v40 = vpack.c.bf16 %v39, %v39
  %v41 = vld [vmem:[%s1] sm:$0xf]
  %v42 = vld [vmem:[%s1 + $0x4] sm:$0xf]
  %v43 = vld [vmem:[%s1 + $0x8] sm:$0xf]
  %v44 = vld [vmem:[%s1 + $0xc] sm:$0xf]
  %v45 = vld [vmem:[%s1 + $0x10] sm:$0xf]
  %v46 = vld [vmem:[%s1 + $0x14] sm:$0xf]
  %v47 = vld [vmem:[%s1 + $0x18] sm:$0xf]
  %v48 = vld [vmem:[%s1 + $0x1c] sm:$0xf]
  %v49 = vld [vmem:[%s1 + $0x20] sm:$0xf]
  %v50 = vld [vmem:[%s1 + $0x24] sm:$0xf]
  %v51 = vld [vmem:[%s1 + $0x28] sm:$0xf]
  %v52 = vld [vmem:[%s1 + $0x2c] sm:$0xf]
  %v53 = vld [vmem:[%s1 + $0x30] sm:$0xf]
  %v54 = vld [vmem:[%s1 + $0x34] sm:$0xf]
  %v55 = vld [vmem:[%s1 + $0x38] sm:$0xf]
  %v56 = vld [vmem:[%s1 + $0x3c] sm:$0xf]
  %v57 = vld [vmem:[%s2] sm:$0x1]
  %v59 = vlaneseq
  %v60 = vshrl.u32 %v59, 7
  %v61 = vsub.s32 0, %v60
  %v62 = vrot.slane %v57, %v61
  %v80 = vunpack.c.l.b16 %v41
  %v81 = vunpack.c.l.b16 %v42
  %v82 = vunpack.c.l.b16 %v43
  %v83 = vunpack.c.l.b16 %v44
  %v84 = vunpack.c.l.b16 %v45
  %v85 = vunpack.c.l.b16 %v46
  %v86 = vunpack.c.l.b16 %v47
  %v87 = vunpack.c.l.b16 %v48
  %v88 = vunpack.c.l.b16 %v49
  %v89 = vunpack.c.l.b16 %v50
  %v90 = vunpack.c.l.b16 %v51
  %v91 = vunpack.c.l.b16 %v52
  %v92 = vunpack.c.l.b16 %v53
  %v93 = vunpack.c.l.b16 %v54
  %v94 = vunpack.c.l.b16 %v55
  %v95 = vunpack.c.l.b16 %v56
  %v96 = vpack.c.b16 %v81, %v80
  %v97 = vpack.c.b16 %v83, %v82
  %v98 = vpack.c.b16 %v85, %v84
  %v99 = vpack.c.b16 %v87, %v86
  %v100 = vpack.c.b16 %v89, %v88
  %v101 = vpack.c.b16 %v91, %v90
  %v102 = vpack.c.b16 %v93, %v92
  %v103 = vpack.c.b16 %v95, %v94
  %112 = vmatprep.subr.bf16.mxu0 0
  %113 = vmatpush1.bf16.msra.mxu0 %v96
  %114 = vmatprep.subr.bf16.mxu0 0
  %115 = vmatpush1.bf16.msra.mxu0 %v97
  %116 = vmatprep.subr.bf16.mxu0 0
  %117 = vmatpush1.bf16.msra.mxu0 %v98
  %118 = vmatprep.subr.bf16.mxu0 0
  %119 = vmatpush1.bf16.msra.mxu0 %v99
  %120 = vmatprep.subr.bf16.mxu0 0
  %121 = vmatpush1.bf16.msra.mxu0 %v100
  %122 = vmatprep.subr.bf16.mxu0 0
  %123 = vmatpush1.bf16.msra.mxu0 %v101
  %124 = vmatprep.subr.bf16.mxu0 0
  %125 = vmatpush1.bf16.msra.mxu0 %v102
  %126 = vmatprep.subr.bf16.mxu0 0
  %127 = vmatpush1.bf16.msra.mxu0 %v103
  %128 = vmatprep.subr.bf16.mxu0 0
  %129 = vmatpush1.bf16.msra.mxu0 0
  %130 = vmatprep.subr.bf16.mxu0 0
  %131 = vmatpush1.bf16.msra.mxu0 0
  %132 = vmatprep.subr.bf16.mxu0 0
  %133 = vmatpush1.bf16.msra.mxu0 0
  %134 = vmatprep.subr.bf16.mxu0 0
  %135 = vmatpush1.bf16.msra.mxu0 0
  %136 = vmatprep.subr.bf16.mxu0 0
  %137 = vmatpush1.bf16.msra.mxu0 0
  %138 = vmatprep.subr.bf16.mxu0 0
  %139 = vmatpush1.bf16.msra.mxu0 0
  %140 = vmatprep.subr.bf16.mxu0 0
  %141 = vmatpush1.bf16.msra.mxu0 0
  %142 = vmatprep.subr.bf16.mxu0 0
  %143 = vmatpush1.bf16.msra.mxu0 0
  %144 = vmatprep.mubr.bf16.mxu0 0
  %145 = vmatmul.mubr.bf16.gmra.mrb[0].mxu0 %v40
  %v146 = vpop.f32.mrb[0].mxu0
  %v147 = vadd.f32 %v62, %v146
  %v148 = vpop.f32.mrb[0].mxu0
  %v149 = vpop.f32.mrb[0].mxu0
  %v150 = vpop.f32.mrb[0].mxu0
  %151 = vdwg.mxu0
  %vm152 = vcmp.gt.f32.partialorder %v147, 0.0
  %v153 = vmul.f32 %v147, 0.2
  %v154 = vsel %vm152, %v147, %v153
  %v155 = vpack.c.bf16 %v154, %v154
  %v156 = vld [vmem:[%s3] sm:$0xff]
  %v157 = vld [vmem:[%s3 + $0x8] sm:$0xff]
  %v158 = vld [vmem:[%s3 + $0x10] sm:$0xff]
  %v159 = vld [vmem:[%s3 + $0x18] sm:$0xff]
  %v160 = vld [vmem:[%s3 + $0x20] sm:$0xff]
  %v161 = vld [vmem:[%s3 + $0x28] sm:$0xff]
  %v162 = vld [vmem:[%s3 + $0x30] sm:$0xff]
  %v163 = vld [vmem:[%s3 + $0x38] sm:$0xff]
  %v164 = vld [vmem:[%s3 + $0x40] sm:$0xff]
  %v165 = vld [vmem:[%s3 + $0x48] sm:$0xff]
  %v166 = vld [vmem:[%s3 + $0x50] sm:$0xff]
  %v167 = vld [vmem:[%s3 + $0x58] sm:$0xff]
  %v168 = vld [vmem:[%s3 + $0x60] sm:$0xff]
  %v169 = vld [vmem:[%s3 + $0x68] sm:$0xff]
  %v170 = vld [vmem:[%s3 + $0x70] sm:$0xff]
  %v171 = vld [vmem:[%s3 + $0x78] sm:$0xff]
  %v172 = vld [vmem:[%s4] sm:$0x3]
  %v174 = vlaneseq
  %v175 = vshrl.u32 %v174, 7
  %v176 = vsub.s32 0, %v175
  %v177 = vrot.slane %v172, %v176
  %v178 = vlaneseq
  %v179 = vshrl.u32 %v178, 7
  %v180 = vsub.s32 1, %v179
  %v181 = vrot.slane %v172, %v180
  %v200 = vunpack.c.l.b16 %v156
  %v201 = vunpack.c.h.b16 %v156
  %v202 = vunpack.c.l.b16 %v157
  %v203 = vunpack.c.h.b16 %v157
  %v204 = vunpack.c.l.b16 %v158
  %v205 = vunpack.c.h.b16 %v158
  %v206 = vunpack.c.l.b16 %v159
  %v207 = vunpack.c.h.b16 %v159
  %v208 = vunpack.c.l.b16 %v160
  %v209 = vunpack.c.h.b16 %v160
  %v210 = vunpack.c.l.b16 %v161
  %v211 = vunpack.c.h.b16 %v161
  %v212 = vunpack.c.l.b16 %v162
  %v213 = vunpack.c.h.b16 %v162
  %v214 = vunpack.c.l.b16 %v163
  %v215 = vunpack.c.h.b16 %v163
  %v216 = vunpack.c.l.b16 %v164
  %v217 = vunpack.c.h.b16 %v164
  %v218 = vunpack.c.l.b16 %v165
  %v219 = vunpack.c.h.b16 %v165
  %v220 = vunpack.c.l.b16 %v166
  %v221 = vunpack.c.h.b16 %v166
  %v222 = vunpack.c.l.b16 %v167
  %v223 = vunpack.c.h.b16 %v167
  %v224 = vunpack.c.l.b16 %v168
  %v225 = vunpack.c.h.b16 %v168
  %v226 = vunpack.c.l.b16 %v169
  %v227 = vunpack.c.h.b16 %v169
  %v228 = vunpack.c.l.b16 %v170
  %v229 = vunpack.c.h.b16 %v170
  %v230 = vunpack.c.l.b16 %v171
  %v231 = vunpack.c.h.b16 %v171
  %v232 = vpack.c.b16 %v202, %v200
  %v233 = vpack.c.b16 %v203, %v201
  %v234 = vpack.c.b16 %v206, %v204
  %v235 = vpack.c.b16 %v207, %v205
  %v236 = vpack.c.b16 %v210, %v208
  %v237 = vpack.c.b16 %v211, %v209
  %v238 = vpack.c.b16 %v214, %v212
  %v239 = vpack.c.b16 %v215, %v213
  %v240 = vpack.c.b16 %v218, %v216
  %v241 = vpack.c.b16 %v219, %v217
  %v242 = vpack.c.b16 %v222, %v220
  %v243 = vpack.c.b16 %v223, %v221
  %v244 = vpack.c.b16 %v226, %v224
  %v245 = vpack.c.b16 %v227, %v225
  %v246 = vpack.c.b16 %v230, %v228
  %v247 = vpack.c.b16 %v231, %v229
  %264 = vmatprep.subr.bf16.mxu0 %v233
  %265 = vmatpush1.bf16.msra.mxu0 %v232
  %266 = vmatprep.subr.bf16.mxu0 %v235
  %267 = vmatpush1.bf16.msra.mxu0 %v234
  %268 = vmatprep.subr.bf16.mxu0 %v237
  %269 = vmatpush1.bf16.msra.mxu0 %v236
  %270 = vmatprep.subr.bf16.mxu0 %v239
  %271 = vmatpush1.bf16.msra.mxu0 %v238
  %272 = vmatprep.subr.bf16.mxu0 %v241
  %273 = vmatpush1.bf16.msra.mxu0 %v240
  %274 = vmatprep.subr.bf16.mxu0 %v243
  %275 = vmatpush1.bf16.msra.mxu0 %v242
  %276 = vmatprep.subr.bf16.mxu0 %v245
  %277 = vmatpush1.bf16.msra.mxu0 %v244
  %278 = vmatprep.subr.bf16.mxu0 %v247
  %279 = vmatpush1.bf16.msra.mxu0 %v246
  %280 = vmatprep.subr.bf16.mxu0 0
  %281 = vmatpush1.bf16.msra.mxu0 0
  %282 = vmatprep.subr.bf16.mxu0 0
  %283 = vmatpush1.bf16.msra.mxu0 0
  %284 = vmatprep.subr.bf16.mxu0 0
  %285 = vmatpush1.bf16.msra.mxu0 0
  %286 = vmatprep.subr.bf16.mxu0 0
  %287 = vmatpush1.bf16.msra.mxu0 0
  %288 = vmatprep.subr.bf16.mxu0 0
  %289 = vmatpush1.bf16.msra.mxu0 0
  %290 = vmatprep.subr.bf16.mxu0 0
  %291 = vmatpush1.bf16.msra.mxu0 0
  %292 = vmatprep.subr.bf16.mxu0 0
  %293 = vmatpush1.bf16.msra.mxu0 0
  %294 = vmatprep.subr.bf16.mxu0 0
  %295 = vmatpush1.bf16.msra.mxu0 0
  %296 = vmatprep.mubr.bf16.mxu0 0
  %297 = vmatmul.mubr.bf16.gmra.mrb[0].mxu0 %v155
  %v298 = vpop.f32.mrb[0].mxu0
  %v299 = vadd.f32 %v177, %v298
  %v300 = vpop.f32.mrb[0].mxu0
  %v301 = vadd.f32 %v181, %v300
  %v302 = vpop.f32.mrb[0].mxu0
  %v303 = vpop.f32.mrb[0].mxu0
  %304 = vdwg.mxu0
  %vm305 = vcmp.gt.f32.partialorder %v299, 0.0
  %vm306 = vcmp.gt.f32.partialorder %v301, 0.0
  %v307 = vmul.f32 %v299, 0.2
  %v308 = vmul.f32 %v301, 0.2
  %v309 = vsel %vm305, %v299, %v307
  %v310 = vsel %vm306, %v301, %v308
  %v311 = vpack.c.bf16 %v309, %v309
  %v312 = vpack.c.bf16 %v310, %v310
  %v313 = vld [vmem:[%s5] sm:$0xff]
  %v314 = vld [vmem:[%s5 + $0x8] sm:$0xff]
  %v315 = vld [vmem:[%s5 + $0x10] sm:$0xff]
  %v316 = vld [vmem:[%s5 + $0x18] sm:$0xff]
  %v317 = vld [vmem:[%s5 + $0x20] sm:$0xff]
  %v318 = vld [vmem:[%s5 + $0x28] sm:$0xff]
  %v319 = vld [vmem:[%s5 + $0x30] sm:$0xff]
  %v320 = vld [vmem:[%s5 + $0x38] sm:$0xff]
  %v321 = vld [vmem:[%s5 + $0x40] sm:$0xff]
  %v322 = vld [vmem:[%s5 + $0x48] sm:$0xff]
  %v323 = vld [vmem:[%s5 + $0x50] sm:$0xff]
  %v324 = vld [vmem:[%s5 + $0x58] sm:$0xff]
  %v325 = vld [vmem:[%s5 + $0x60] sm:$0xff]
  %v326 = vld [vmem:[%s5 + $0x68] sm:$0xff]
  %v327 = vld [vmem:[%s5 + $0x70] sm:$0xff]
  %v328 = vld [vmem:[%s5 + $0x78] sm:$0xff]
  %v329 = vld [vmem:[%s5 + $0x80] sm:$0xff]
  %v330 = vld [vmem:[%s5 + $0x88] sm:$0xff]
  %v331 = vld [vmem:[%s5 + $0x90] sm:$0xff]
  %v332 = vld [vmem:[%s5 + $0x98] sm:$0xff]
  %v333 = vld [vmem:[%s5 + $0xa0] sm:$0xff]
  %v334 = vld [vmem:[%s5 + $0xa8] sm:$0xff]
  %v335 = vld [vmem:[%s5 + $0xb0] sm:$0xff]
  %v336 = vld [vmem:[%s5 + $0xb8] sm:$0xff]
  %v337 = vld [vmem:[%s5 + $0xc0] sm:$0xff]
  %v338 = vld [vmem:[%s5 + $0xc8] sm:$0xff]
  %v339 = vld [vmem:[%s5 + $0xd0] sm:$0xff]
  %v340 = vld [vmem:[%s5 + $0xd8] sm:$0xff]
  %v341 = vld [vmem:[%s5 + $0xe0] sm:$0xff]
  %v342 = vld [vmem:[%s5 + $0xe8] sm:$0xff]
  %v343 = vld [vmem:[%s5 + $0xf0] sm:$0xff]
  %v344 = vld [vmem:[%s5 + $0xf8] sm:$0xff]
  %v345 = vld [vmem:[%s5 + $0x100] sm:$0xff]
  %v346 = vld [vmem:[%s5 + $0x108] sm:$0xff]
  %v347 = vld [vmem:[%s5 + $0x110] sm:$0xff]
  %v348 = vld [vmem:[%s5 + $0x118] sm:$0xff]
  %v349 = vld [vmem:[%s5 + $0x120] sm:$0xff]
  %v350 = vld [vmem:[%s5 + $0x128] sm:$0xff]
  %v351 = vld [vmem:[%s5 + $0x130] sm:$0xff]
  %v352 = vld [vmem:[%s5 + $0x138] sm:$0xff]
  %v353 = vld [vmem:[%s5 + $0x140] sm:$0xff]
  %v354 = vld [vmem:[%s5 + $0x148] sm:$0xff]
  %v355 = vld [vmem:[%s5 + $0x150] sm:$0xff]
  %v356 = vld [vmem:[%s5 + $0x158] sm:$0xff]
  %v357 = vld [vmem:[%s5 + $0x160] sm:$0xff]
  %v358 = vld [vmem:[%s5 + $0x168] sm:$0xff]
  %v359 = vld [vmem:[%s5 + $0x170] sm:$0xff]
  %v360 = vld [vmem:[%s5 + $0x178] sm:$0xff]
  %v361 = vld [vmem:[%s5 + $0x180] sm:$0xff]
  %v362 = vld [vmem:[%s5 + $0x188] sm:$0xff]
  %v363 = vld [vmem:[%s5 + $0x190] sm:$0xff]
  %v364 = vld [vmem:[%s5 + $0x198] sm:$0xff]
  %v365 = vld [vmem:[%s5 + $0x1a0] sm:$0xff]
  %v366 = vld [vmem:[%s5 + $0x1a8] sm:$0xff]
  %v367 = vld [vmem:[%s5 + $0x1b0] sm:$0xff]
  %v368 = vld [vmem:[%s5 + $0x1b8] sm:$0xff]
  %v369 = vld [vmem:[%s5 + $0x1c0] sm:$0xff]
  %v370 = vld [vmem:[%s5 + $0x1c8] sm:$0xff]
  %v371 = vld [vmem:[%s5 + $0x1d0] sm:$0xff]
  %v372 = vld [vmem:[%s5 + $0x1d8] sm:$0xff]
  %v373 = vld [vmem:[%s5 + $0x1e0] sm:$0xff]
  %v374 = vld [vmem:[%s5 + $0x1e8] sm:$0xff]
  %v375 = vld [vmem:[%s5 + $0x1f0] sm:$0xff]
  %v376 = vld [vmem:[%s5 + $0x1f8] sm:$0xff]
  %v377 = vld [vmem:[%s6] sm:$0xf]
  %v379 = vlaneseq
  %v380 = vshrl.u32 %v379, 7
  %v381 = vsub.s32 0, %v380
  %v382 = vrot.slane %v377, %v381
  %v383 = vlaneseq
  %v384 = vshrl.u32 %v383, 7
  %v385 = vsub.s32 1, %v384
  %v386 = vrot.slane %v377, %v385
  %v387 = vlaneseq
  %v388 = vshrl.u32 %v387, 7
  %v389 = vsub.s32 2, %v388
  %v390 = vrot.slane %v377, %v389
  %v391 = vlaneseq
  %v392 = vshrl.u32 %v391, 7
  %v393 = vsub.s32 3, %v392
  %v394 = vrot.slane %v377, %v393
  %v463 = vunpack.c.l.b16 %v313
  %v464 = vunpack.c.h.b16 %v313
  %v465 = vunpack.c.l.b16 %v314
  %v466 = vunpack.c.h.b16 %v314
  %v467 = vunpack.c.l.b16 %v315
  %v468 = vunpack.c.h.b16 %v315
  %v469 = vunpack.c.l.b16 %v316
  %v470 = vunpack.c.h.b16 %v316
  %v471 = vunpack.c.l.b16 %v317
  %v472 = vunpack.c.h.b16 %v317
  %v473 = vunpack.c.l.b16 %v318
  %v474 = vunpack.c.h.b16 %v318
  %v475 = vunpack.c.l.b16 %v319
  %v476 = vunpack.c.h.b16 %v319
  %v477 = vunpack.c.l.b16 %v320
  %v478 = vunpack.c.h.b16 %v320
  %v479 = vunpack.c.l.b16 %v321
  %v480 = vunpack.c.h.b16 %v321
  %v481 = vunpack.c.l.b16 %v322
  %v482 = vunpack.c.h.b16 %v322
  %v483 = vunpack.c.l.b16 %v323
  %v484 = vunpack.c.h.b16 %v323
  %v485 = vunpack.c.l.b16 %v324
  %v486 = vunpack.c.h.b16 %v324
  %v487 = vunpack.c.l.b16 %v325
  %v488 = vunpack.c.h.b16 %v325
  %v489 = vunpack.c.l.b16 %v326
  %v490 = vunpack.c.h.b16 %v326
  %v491 = vunpack.c.l.b16 %v327
  %v492 = vunpack.c.h.b16 %v327
  %v493 = vunpack.c.l.b16 %v328
  %v494 = vunpack.c.h.b16 %v328
  %v495 = vunpack.c.l.b16 %v329
  %v496 = vunpack.c.h.b16 %v329
  %v497 = vunpack.c.l.b16 %v330
  %v498 = vunpack.c.h.b16 %v330
  %v499 = vunpack.c.l.b16 %v331
  %v500 = vunpack.c.h.b16 %v331
  %v501 = vunpack.c.l.b16 %v332
  %v502 = vunpack.c.h.b16 %v332
  %v503 = vunpack.c.l.b16 %v333
  %v504 = vunpack.c.h.b16 %v333
  %v505 = vunpack.c.l.b16 %v334
  %v506 = vunpack.c.h.b16 %v334
  %v507 = vunpack.c.l.b16 %v335
  %v508 = vunpack.c.h.b16 %v335
  %v509 = vunpack.c.l.b16 %v336
  %v510 = vunpack.c.h.b16 %v336
  %v511 = vunpack.c.l.b16 %v337
  %v512 = vunpack.c.h.b16 %v337
  %v513 = vunpack.c.l.b16 %v338
  %v514 = vunpack.c.h.b16 %v338
  %v515 = vunpack.c.l.b16 %v339
  %v516 = vunpack.c.h.b16 %v339
  %v517 = vunpack.c.l.b16 %v340
  %v518 = vunpack.c.h.b16 %v340
  %v519 = vunpack.c.l.b16 %v341
  %v520 = vunpack.c.h.b16 %v341
  %v521 = vunpack.c.l.b16 %v342
  %v522 = vunpack.c.h.b16 %v342
  %v523 = vunpack.c.l.b16 %v343
  %v524 = vunpack.c.h.b16 %v343
  %v525 = vunpack.c.l.b16 %v344
  %v526 = vunpack.c.h.b16 %v344
  %v527 = vunpack.c.l.b16 %v345
  %v528 = vunpack.c.h.b16 %v345
  %v529 = vunpack.c.l.b16 %v346
  %v530 = vunpack.c.h.b16 %v346
  %v531 = vunpack.c.l.b16 %v347
  %v532 = vunpack.c.h.b16 %v347
  %v533 = vunpack.c.l.b16 %v348
  %v534 = vunpack.c.h.b16 %v348
  %v535 = vunpack.c.l.b16 %v349
  %v536 = vunpack.c.h.b16 %v349
  %v537 = vunpack.c.l.b16 %v350
  %v538 = vunpack.c.h.b16 %v350
  %v539 = vunpack.c.l.b16 %v351
  %v540 = vunpack.c.h.b16 %v351
  %v541 = vunpack.c.l.b16 %v352
  %v542 = vunpack.c.h.b16 %v352
  %v543 = vunpack.c.l.b16 %v353
  %v544 = vunpack.c.h.b16 %v353
  %v545 = vunpack.c.l.b16 %v354
  %v546 = vunpack.c.h.b16 %v354
  %v547 = vunpack.c.l.b16 %v355
  %v548 = vunpack.c.h.b16 %v355
  %v549 = vunpack.c.l.b16 %v356
  %v550 = vunpack.c.h.b16 %v356
  %v551 = vunpack.c.l.b16 %v357
  %v552 = vunpack.c.h.b16 %v357
  %v553 = vunpack.c.l.b16 %v358
  %v554 = vunpack.c.h.b16 %v358
  %v555 = vunpack.c.l.b16 %v359
  %v556 = vunpack.c.h.b16 %v359
  %v557 = vunpack.c.l.b16 %v360
  %v558 = vunpack.c.h.b16 %v360
  %v559 = vunpack.c.l.b16 %v361
  %v560 = vunpack.c.h.b16 %v361
  %v561 = vunpack.c.l.b16 %v362
  %v562 = vunpack.c.h.b16 %v362
  %v563 = vunpack.c.l.b16 %v363
  %v564 = vunpack.c.h.b16 %v363
  %v565 = vunpack.c.l.b16 %v364
  %v566 = vunpack.c.h.b16 %v364
  %v567 = vunpack.c.l.b16 %v365
  %v568 = vunpack.c.h.b16 %v365
  %v569 = vunpack.c.l.b16 %v366
  %v570 = vunpack.c.h.b16 %v366
  %v571 = vunpack.c.l.b16 %v367
  %v572 = vunpack.c.h.b16 %v367
  %v573 = vunpack.c.l.b16 %v368
  %v574 = vunpack.c.h.b16 %v368
  %v575 = vunpack.c.l.b16 %v369
  %v576 = vunpack.c.h.b16 %v369
  %v577 = vunpack.c.l.b16 %v370
  %v578 = vunpack.c.h.b16 %v370
  %v579 = vunpack.c.l.b16 %v371
  %v580 = vunpack.c.h.b16 %v371
  %v581 = vunpack.c.l.b16 %v372
  %v582 = vunpack.c.h.b16 %v372
  %v583 = vunpack.c.l.b16 %v373
  %v584 = vunpack.c.h.b16 %v373
  %v585 = vunpack.c.l.b16 %v374
  %v586 = vunpack.c.h.b16 %v374
  %v587 = vunpack.c.l.b16 %v375
  %v588 = vunpack.c.h.b16 %v375
  %v589 = vunpack.c.l.b16 %v376
  %v590 = vunpack.c.h.b16 %v376
  %v591 = vpack.c.b16 %v467, %v463
  %v592 = vpack.c.b16 %v468, %v464
  %v593 = vpack.c.b16 %v469, %v465
  %v594 = vpack.c.b16 %v470, %v466
  %v595 = vpack.c.b16 %v475, %v471
  %v596 = vpack.c.b16 %v476, %v472
  %v597 = vpack.c.b16 %v477, %v473
  %v598 = vpack.c.b16 %v478, %v474
  %v599 = vpack.c.b16 %v483, %v479
  %v600 = vpack.c.b16 %v484, %v480
  %v601 = vpack.c.b16 %v485, %v481
  %v602 = vpack.c.b16 %v486, %v482
  %v603 = vpack.c.b16 %v491, %v487
  %v604 = vpack.c.b16 %v492, %v488
  %v605 = vpack.c.b16 %v493, %v489
  %v606 = vpack.c.b16 %v494, %v490
  %v607 = vpack.c.b16 %v499, %v495
  %v608 = vpack.c.b16 %v500, %v496
  %v609 = vpack.c.b16 %v501, %v497
  %v610 = vpack.c.b16 %v502, %v498
  %v611 = vpack.c.b16 %v507, %v503
  %v612 = vpack.c.b16 %v508, %v504
  %v613 = vpack.c.b16 %v509, %v505
  %v614 = vpack.c.b16 %v510, %v506
  %v615 = vpack.c.b16 %v515, %v511
  %v616 = vpack.c.b16 %v516, %v512
  %v617 = vpack.c.b16 %v517, %v513
  %v618 = vpack.c.b16 %v518, %v514
  %v619 = vpack.c.b16 %v523, %v519
  %v620 = vpack.c.b16 %v524, %v520
  %v621 = vpack.c.b16 %v525, %v521
  %v622 = vpack.c.b16 %v526, %v522
  %v623 = vpack.c.b16 %v531, %v527
  %v624 = vpack.c.b16 %v532, %v528
  %v625 = vpack.c.b16 %v533, %v529
  %v626 = vpack.c.b16 %v534, %v530
  %v627 = vpack.c.b16 %v539, %v535
  %v628 = vpack.c.b16 %v540, %v536
  %v629 = vpack.c.b16 %v541, %v537
  %v630 = vpack.c.b16 %v542, %v538
  %v631 = vpack.c.b16 %v547, %v543
  %v632 = vpack.c.b16 %v548, %v544
  %v633 = vpack.c.b16 %v549, %v545
  %v634 = vpack.c.b16 %v550, %v546
  %v635 = vpack.c.b16 %v555, %v551
  %v636 = vpack.c.b16 %v556, %v552
  %v637 = vpack.c.b16 %v557, %v553
  %v638 = vpack.c.b16 %v558, %v554
  %v639 = vpack.c.b16 %v563, %v559
  %v640 = vpack.c.b16 %v564, %v560
  %v641 = vpack.c.b16 %v565, %v561
  %v642 = vpack.c.b16 %v566, %v562
  %v643 = vpack.c.b16 %v571, %v567
  %v644 = vpack.c.b16 %v572, %v568
  %v645 = vpack.c.b16 %v573, %v569
  %v646 = vpack.c.b16 %v574, %v570
  %v647 = vpack.c.b16 %v579, %v575
  %v648 = vpack.c.b16 %v580, %v576
  %v649 = vpack.c.b16 %v581, %v577
  %v650 = vpack.c.b16 %v582, %v578
  %v651 = vpack.c.b16 %v587, %v583
  %v652 = vpack.c.b16 %v588, %v584
  %v653 = vpack.c.b16 %v589, %v585
  %v654 = vpack.c.b16 %v590, %v586
  %719 = vmatprep.subr.bf16.mxu0 %v592
  %720 = vmatpush1.bf16.msra.mxu0 %v591
  %721 = vmatprep.subr.bf16.mxu0 %v596
  %722 = vmatpush1.bf16.msra.mxu0 %v595
  %723 = vmatprep.subr.bf16.mxu0 %v600
  %724 = vmatpush1.bf16.msra.mxu0 %v599
  %725 = vmatprep.subr.bf16.mxu0 %v604
  %726 = vmatpush1.bf16.msra.mxu0 %v603
  %727 = vmatprep.subr.bf16.mxu0 %v608
  %728 = vmatpush1.bf16.msra.mxu0 %v607
  %729 = vmatprep.subr.bf16.mxu0 %v612
  %730 = vmatpush1.bf16.msra.mxu0 %v611
  %731 = vmatprep.subr.bf16.mxu0 %v616
  %732 = vmatpush1.bf16.msra.mxu0 %v615
  %733 = vmatprep.subr.bf16.mxu0 %v620
  %734 = vmatpush1.bf16.msra.mxu0 %v619
  %735 = vmatprep.subr.bf16.mxu0 %v624
  %736 = vmatpush1.bf16.msra.mxu0 %v623
  %737 = vmatprep.subr.bf16.mxu0 %v628
  %738 = vmatpush1.bf16.msra.mxu0 %v627
  %739 = vmatprep.subr.bf16.mxu0 %v632
  %740 = vmatpush1.bf16.msra.mxu0 %v631
  %741 = vmatprep.subr.bf16.mxu0 %v636
  %742 = vmatpush1.bf16.msra.mxu0 %v635
  %743 = vmatprep.subr.bf16.mxu0 %v640
  %744 = vmatpush1.bf16.msra.mxu0 %v639
  %745 = vmatprep.subr.bf16.mxu0 %v644
  %746 = vmatpush1.bf16.msra.mxu0 %v643
  %747 = vmatprep.subr.bf16.mxu0 %v648
  %748 = vmatpush1.bf16.msra.mxu0 %v647
  %749 = vmatprep.subr.bf16.mxu0 %v652
  %750 = vmatpush1.bf16.msra.mxu0 %v651
  %751 = vmatprep.mubr.bf16.mxu0 %v312
  %752 = vmatmul.mubr.bf16.gmra.mrb[0].mxu0 %v311
  %v753 = vpop.f32.mrb[0].mxu0
  %v754 = vadd.f32 %v382, %v753
  %v755 = vpop.f32.mrb[0].mxu0
  %v756 = vadd.f32 %v386, %v755
  %v757 = vpop.f32.mrb[0].mxu0
  %v758 = vpop.f32.mrb[0].mxu0
  %759 = vdwg.mxu0
  %760 = vmatprep.subr.bf16.mxu0 %v594
  %761 = vmatpush1.bf16.msra.mxu0 %v593
  %762 = vmatprep.subr.bf16.mxu0 %v598
  %763 = vmatpush1.bf16.msra.mxu0 %v597
  %764 = vmatprep.subr.bf16.mxu0 %v602
  %765 = vmatpush1.bf16.msra.mxu0 %v601
  %766 = vmatprep.subr.bf16.mxu0 %v606
  %767 = vmatpush1.bf16.msra.mxu0 %v605
  %768 = vmatprep.subr.bf16.mxu0 %v610
  %769 = vmatpush1.bf16.msra.mxu0 %v609
  %770 = vmatprep.subr.bf16.mxu0 %v614
  %771 = vmatpush1.bf16.msra.mxu0 %v613
  %772 = vmatprep.subr.bf16.mxu0 %v618
  %773 = vmatpush1.bf16.msra.mxu0 %v617
  %774 = vmatprep.subr.bf16.mxu0 %v622
  %775 = vmatpush1.bf16.msra.mxu0 %v621
  %776 = vmatprep.subr.bf16.mxu0 %v626
  %777 = vmatpush1.bf16.msra.mxu0 %v625
  %778 = vmatprep.subr.bf16.mxu0 %v630
  %779 = vmatpush1.bf16.msra.mxu0 %v629
  %780 = vmatprep.subr.bf16.mxu0 %v634
  %781 = vmatpush1.bf16.msra.mxu0 %v633
  %782 = vmatprep.subr.bf16.mxu0 %v638
  %783 = vmatpush1.bf16.msra.mxu0 %v637
  %784 = vmatprep.subr.bf16.mxu0 %v642
  %785 = vmatpush1.bf16.msra.mxu0 %v641
  %786 = vmatprep.subr.bf16.mxu0 %v646
  %787 = vmatpush1.bf16.msra.mxu0 %v645
  %788 = vmatprep.subr.bf16.mxu0 %v650
  %789 = vmatpush1.bf16.msra.mxu0 %v649
  %790 = vmatprep.subr.bf16.mxu0 %v654
  %791 = vmatpush1.bf16.msra.mxu0 %v653
  %792 = vmatprep.mubr.bf16.mxu0 %v312
  %793 = vmatmul.mubr.bf16.gmra.mrb[0].mxu0 %v311
  %v794 = vpop.f32.mrb[0].mxu0
  %v795 = vadd.f32 %v390, %v794
  %v796 = vpop.f32.mrb[0].mxu0
  %v797 = vadd.f32 %v394, %v796
  %v798 = vpop.f32.mrb[0].mxu0
  %v799 = vpop.f32.mrb[0].mxu0
  %800 = vdwg.mxu0
  %vm801 = vcmp.gt.f32.partialorder %v754, 0.0
  %vm802 = vcmp.gt.f32.partialorder %v756, 0.0
  %vm803 = vcmp.gt.f32.partialorder %v795, 0.0
  %vm804 = vcmp.gt.f32.partialorder %v797, 0.0
  %v805 = vmul.f32 %v754, 0.2
  %v806 = vmul.f32 %v756, 0.2
  %v807 = vmul.f32 %v795, 0.2
  %v808 = vmul.f32 %v797, 0.2
  %v809 = vsel %vm801, %v754, %v805
  %v810 = vsel %vm802, %v756, %v806
  %v811 = vsel %vm803, %v795, %v807
  %v812 = vsel %vm804, %v797, %v808
  %v813 = vpack.c.bf16 %v809, %v809
  %v814 = vpack.c.bf16 %v810, %v810
  %v815 = vpack.c.bf16 %v811, %v811
  %v816 = vpack.c.bf16 %v812, %v812
  %v817 = vld [vmem:[%s7] sm:$0xff]
  %v818 = vld [vmem:[%s7 + $0x8] sm:$0xff]
  %v819 = vld [vmem:[%s7 + $0x10] sm:$0xff]
  %v820 = vld [vmem:[%s7 + $0x18] sm:$0xff]
  %v821 = vld [vmem:[%s7 + $0x20] sm:$0xff]
  %v822 = vld [vmem:[%s7 + $0x28] sm:$0xff]
  %v823 = vld [vmem:[%s7 + $0x30] sm:$0xff]
  %v824 = vld [vmem:[%s7 + $0x38] sm:$0xff]
  %v825 = vld [vmem:[%s7 + $0x40] sm:$0xff]
  %v826 = vld [vmem:[%s7 + $0x48] sm:$0xff]
  %v827 = vld [vmem:[%s7 + $0x50] sm:$0xff]
  %v828 = vld [vmem:[%s7 + $0x58] sm:$0xff]
  %v829 = vld [vmem:[%s7 + $0x60] sm:$0xff]
  %v830 = vld [vmem:[%s7 + $0x68] sm:$0xff]
  %v831 = vld [vmem:[%s7 + $0x70] sm:$0xff]
  %v832 = vld [vmem:[%s7 + $0x78] sm:$0xff]
  %v833 = vld [vmem:[%s7 + $0x80] sm:$0xff]
  %v834 = vld [vmem:[%s7 + $0x88] sm:$0xff]
  %v835 = vld [vmem:[%s7 + $0x90] sm:$0xff]
  %v836 = vld [vmem:[%s7 + $0x98] sm:$0xff]
  %v837 = vld [vmem:[%s7 + $0xa0] sm:$0xff]
  %v838 = vld [vmem:[%s7 + $0xa8] sm:$0xff]
  %v839 = vld [vmem:[%s7 + $0xb0] sm:$0xff]
  %v840 = vld [vmem:[%s7 + $0xb8] sm:$0xff]
  %v841 = vld [vmem:[%s7 + $0xc0] sm:$0xff]
  %v842 = vld [vmem:[%s7 + $0xc8] sm:$0xff]
  %v843 = vld [vmem:[%s7 + $0xd0] sm:$0xff]
  %v844 = vld [vmem:[%s7 + $0xd8] sm:$0xff]
  %v845 = vld [vmem:[%s7 + $0xe0] sm:$0xff]
  %v846 = vld [vmem:[%s7 + $0xe8] sm:$0xff]
  %v847 = vld [vmem:[%s7 + $0xf0] sm:$0xff]
  %v848 = vld [vmem:[%s7 + $0xf8] sm:$0xff]
  %v849 = vld [vmem:[%s7 + $0x100] sm:$0xff]
  %v850 = vld [vmem:[%s7 + $0x108] sm:$0xff]
  %v851 = vld [vmem:[%s7 + $0x110] sm:$0xff]
  %v852 = vld [vmem:[%s7 + $0x118] sm:$0xff]
  %v853 = vld [vmem:[%s7 + $0x120] sm:$0xff]
  %v854 = vld [vmem:[%s7 + $0x128] sm:$0xff]
  %v855 = vld [vmem:[%s7 + $0x130] sm:$0xff]
  %v856 = vld [vmem:[%s7 + $0x138] sm:$0xff]
  %v857 = vld [vmem:[%s7 + $0x140] sm:$0xff]
  %v858 = vld [vmem:[%s7 + $0x148] sm:$0xff]
  %v859 = vld [vmem:[%s7 + $0x150] sm:$0xff]
  %v860 = vld [vmem:[%s7 + $0x158] sm:$0xff]
  %v861 = vld [vmem:[%s7 + $0x160] sm:$0xff]
  %v862 = vld [vmem:[%s7 + $0x168] sm:$0xff]
  %v863 = vld [vmem:[%s7 + $0x170] sm:$0xff]
  %v864 = vld [vmem:[%s7 + $0x178] sm:$0xff]
  %v865 = vld [vmem:[%s7 + $0x180] sm:$0xff]
  %v866 = vld [vmem:[%s7 + $0x188] sm:$0xff]
  %v867 = vld [vmem:[%s7 + $0x190] sm:$0xff]
  %v868 = vld [vmem:[%s7 + $0x198] sm:$0xff]
  %v869 = vld [vmem:[%s7 + $0x1a0] sm:$0xff]
  %v870 = vld [vmem:[%s7 + $0x1a8] sm:$0xff]
  %v871 = vld [vmem:[%s7 + $0x1b0] sm:$0xff]
  %v872 = vld [vmem:[%s7 + $0x1b8] sm:$0xff]
  %v873 = vld [vmem:[%s7 + $0x1c0] sm:$0xff]
  %v874 = vld [vmem:[%s7 + $0x1c8] sm:$0xff]
  %v875 = vld [vmem:[%s7 + $0x1d0] sm:$0xff]
  %v876 = vld [vmem:[%s7 + $0x1d8] sm:$0xff]
  %v877 = vld [vmem:[%s7 + $0x1e0] sm:$0xff]
  %v878 = vld [vmem:[%s7 + $0x1e8] sm:$0xff]
  %v879 = vld [vmem:[%s7 + $0x1f0] sm:$0xff]
  %v880 = vld [vmem:[%s7 + $0x1f8] sm:$0xff]
  %v881 = vld [vmem:[%s7 + $0x200] sm:$0xff]
  %v882 = vld [vmem:[%s7 + $0x208] sm:$0xff]
  %v883 = vld [vmem:[%s7 + $0x210] sm:$0xff]
  %v884 = vld [vmem:[%s7 + $0x218] sm:$0xff]
  %v885 = vld [vmem:[%s7 + $0x220] sm:$0xff]
  %v886 = vld [vmem:[%s7 + $0x228] sm:$0xff]
  %v887 = vld [vmem:[%s7 + $0x230] sm:$0xff]
  %v888 = vld [vmem:[%s7 + $0x238] sm:$0xff]
  %v889 = vld [vmem:[%s7 + $0x240] sm:$0xff]
  %v890 = vld [vmem:[%s7 + $0x248] sm:$0xff]
  %v891 = vld [vmem:[%s7 + $0x250] sm:$0xff]
  %v892 = vld [vmem:[%s7 + $0x258] sm:$0xff]
  %v893 = vld [vmem:[%s7 + $0x260] sm:$0xff]
  %v894 = vld [vmem:[%s7 + $0x268] sm:$0xff]
  %v895 = vld [vmem:[%s7 + $0x270] sm:$0xff]
  %v896 = vld [vmem:[%s7 + $0x278] sm:$0xff]
  %v897 = vld [vmem:[%s7 + $0x280] sm:$0xff]
  %v898 = vld [vmem:[%s7 + $0x288] sm:$0xff]
  %v899 = vld [vmem:[%s7 + $0x290] sm:$0xff]
  %v900 = vld [vmem:[%s7 + $0x298] sm:$0xff]
  %v901 = vld [vmem:[%s7 + $0x2a0] sm:$0xff]
  %v902 = vld [vmem:[%s7 + $0x2a8] sm:$0xff]
  %v903 = vld [vmem:[%s7 + $0x2b0] sm:$0xff]
  %v904 = vld [vmem:[%s7 + $0x2b8] sm:$0xff]
  %v905 = vld [vmem:[%s7 + $0x2c0] sm:$0xff]
  %v906 = vld [vmem:[%s7 + $0x2c8] sm:$0xff]
  %v907 = vld [vmem:[%s7 + $0x2d0] sm:$0xff]
  %v908 = vld [vmem:[%s7 + $0x2d8] sm:$0xff]
  %v909 = vld [vmem:[%s7 + $0x2e0] sm:$0xff]
  %v910 = vld [vmem:[%s7 + $0x2e8] sm:$0xff]
  %v911 = vld [vmem:[%s7 + $0x2f0] sm:$0xff]
  %v912 = vld [vmem:[%s7 + $0x2f8] sm:$0xff]
  %v913 = vld [vmem:[%s7 + $0x300] sm:$0xff]
  %v914 = vld [vmem:[%s7 + $0x308] sm:$0xff]
  %v915 = vld [vmem:[%s7 + $0x310] sm:$0xff]
  %v916 = vld [vmem:[%s7 + $0x318] sm:$0xff]
  %v917 = vld [vmem:[%s7 + $0x320] sm:$0xff]
  %v918 = vld [vmem:[%s7 + $0x328] sm:$0xff]
  %v919 = vld [vmem:[%s7 + $0x330] sm:$0xff]
  %v920 = vld [vmem:[%s7 + $0x338] sm:$0xff]
  %v921 = vld [vmem:[%s7 + $0x340] sm:$0xff]
  %v922 = vld [vmem:[%s7 + $0x348] sm:$0xff]
  %v923 = vld [vmem:[%s7 + $0x350] sm:$0xff]
  %v924 = vld [vmem:[%s7 + $0x358] sm:$0xff]
  %v925 = vld [vmem:[%s7 + $0x360] sm:$0xff]
  %v926 = vld [vmem:[%s7 + $0x368] sm:$0xff]
  %v927 = vld [vmem:[%s7 + $0x370] sm:$0xff]
  %v928 = vld [vmem:[%s7 + $0x378] sm:$0xff]
  %v929 = vld [vmem:[%s7 + $0x380] sm:$0xff]
  %v930 = vld [vmem:[%s7 + $0x388] sm:$0xff]
  %v931 = vld [vmem:[%s7 + $0x390] sm:$0xff]
  %v932 = vld [vmem:[%s7 + $0x398] sm:$0xff]
  %v933 = vld [vmem:[%s7 + $0x3a0] sm:$0xff]
  %v934 = vld [vmem:[%s7 + $0x3a8] sm:$0xff]
  %v935 = vld [vmem:[%s7 + $0x3b0] sm:$0xff]
  %v936 = vld [vmem:[%s7 + $0x3b8] sm:$0xff]
  %v937 = vld [vmem:[%s7 + $0x3c0] sm:$0xff]
  %v938 = vld [vmem:[%s7 + $0x3c8] sm:$0xff]
  %v939 = vld [vmem:[%s7 + $0x3d0] sm:$0xff]
  %v940 = vld [vmem:[%s7 + $0x3d8] sm:$0xff]
  %v941 = vld [vmem:[%s7 + $0x3e0] sm:$0xff]
  %v942 = vld [vmem:[%s7 + $0x3e8] sm:$0xff]
  %v943 = vld [vmem:[%s7 + $0x3f0] sm:$0xff]
  %v944 = vld [vmem:[%s7 + $0x3f8] sm:$0xff]
  %v945 = vld [vmem:[%s7 + $0x400] sm:$0xff]
  %v946 = vld [vmem:[%s7 + $0x408] sm:$0xff]
  %v947 = vld [vmem:[%s7 + $0x410] sm:$0xff]
  %v948 = vld [vmem:[%s7 + $0x418] sm:$0xff]
  %v949 = vld [vmem:[%s7 + $0x420] sm:$0xff]
  %v950 = vld [vmem:[%s7 + $0x428] sm:$0xff]
  %v951 = vld [vmem:[%s7 + $0x430] sm:$0xff]
  %v952 = vld [vmem:[%s7 + $0x438] sm:$0xff]
  %v953 = vld [vmem:[%s7 + $0x440] sm:$0xff]
  %v954 = vld [vmem:[%s7 + $0x448] sm:$0xff]
  %v955 = vld [vmem:[%s7 + $0x450] sm:$0xff]
  %v956 = vld [vmem:[%s7 + $0x458] sm:$0xff]
  %v957 = vld [vmem:[%s7 + $0x460] sm:$0xff]
  %v958 = vld [vmem:[%s7 + $0x468] sm:$0xff]
  %v959 = vld [vmem:[%s7 + $0x470] sm:$0xff]
  %v960 = vld [vmem:[%s7 + $0x478] sm:$0xff]
  %v961 = vld [vmem:[%s7 + $0x480] sm:$0xff]
  %v962 = vld [vmem:[%s7 + $0x488] sm:$0xff]
  %v963 = vld [vmem:[%s7 + $0x490] sm:$0xff]
  %v964 = vld [vmem:[%s7 + $0x498] sm:$0xff]
  %v965 = vld [vmem:[%s7 + $0x4a0] sm:$0xff]
  %v966 = vld [vmem:[%s7 + $0x4a8] sm:$0xff]
  %v967 = vld [vmem:[%s7 + $0x4b0] sm:$0xff]
  %v968 = vld [vmem:[%s7 + $0x4b8] sm:$0xff]
  %v969 = vld [vmem:[%s7 + $0x4c0] sm:$0xff]
  %v970 = vld [vmem:[%s7 + $0x4c8] sm:$0xff]
  %v971 = vld [vmem:[%s7 + $0x4d0] sm:$0xff]
  %v972 = vld [vmem:[%s7 + $0x4d8] sm:$0xff]
  %v973 = vld [vmem:[%s7 + $0x4e0] sm:$0xff]
  %v974 = vld [vmem:[%s7 + $0x4e8] sm:$0xff]
  %v975 = vld [vmem:[%s7 + $0x4f0] sm:$0xff]
  %v976 = vld [vmem:[%s7 + $0x4f8] sm:$0xff]
  %v977 = vld [vmem:[%s7 + $0x500] sm:$0xff]
  %v978 = vld [vmem:[%s7 + $0x508] sm:$0xff]
  %v979 = vld [vmem:[%s7 + $0x510] sm:$0xff]
  %v980 = vld [vmem:[%s7 + $0x518] sm:$0xff]
  %v981 = vld [vmem:[%s7 + $0x520] sm:$0xff]
  %v982 = vld [vmem:[%s7 + $0x528] sm:$0xff]
  %v983 = vld [vmem:[%s7 + $0x530] sm:$0xff]
  %v984 = vld [vmem:[%s7 + $0x538] sm:$0xff]
  %v985 = vld [vmem:[%s7 + $0x540] sm:$0xff]
  %v986 = vld [vmem:[%s7 + $0x548] sm:$0xff]
  %v987 = vld [vmem:[%s7 + $0x550] sm:$0xff]
  %v988 = vld [vmem:[%s7 + $0x558] sm:$0xff]
  %v989 = vld [vmem:[%s7 + $0x560] sm:$0xff]
  %v990 = vld [vmem:[%s7 + $0x568] sm:$0xff]
  %v991 = vld [vmem:[%s7 + $0x570] sm:$0xff]
  %v992 = vld [vmem:[%s7 + $0x578] sm:$0xff]
  %v993 = vld [vmem:[%s7 + $0x580] sm:$0xff]
  %v994 = vld [vmem:[%s7 + $0x588] sm:$0xff]
  %v995 = vld [vmem:[%s7 + $0x590] sm:$0xff]
  %v996 = vld [vmem:[%s7 + $0x598] sm:$0xff]
  %v997 = vld [vmem:[%s7 + $0x5a0] sm:$0xff]
  %v998 = vld [vmem:[%s7 + $0x5a8] sm:$0xff]
  %v999 = vld [vmem:[%s7 + $0x5b0] sm:$0xff]
  %v1000 = vld [vmem:[%s7 + $0x5b8] sm:$0xff]
  %v1001 = vld [vmem:[%s7 + $0x5c0] sm:$0xff]
  %v1002 = vld [vmem:[%s7 + $0x5c8] sm:$0xff]
  %v1003 = vld [vmem:[%s7 + $0x5d0] sm:$0xff]
  %v1004 = vld [vmem:[%s7 + $0x5d8] sm:$0xff]
  %v1005 = vld [vmem:[%s7 + $0x5e0] sm:$0xff]
  %v1006 = vld [vmem:[%s7 + $0x5e8] sm:$0xff]
  %v1007 = vld [vmem:[%s7 + $0x5f0] sm:$0xff]
  %v1008 = vld [vmem:[%s7 + $0x5f8] sm:$0xff]
  %v1009 = vld [vmem:[%s7 + $0x600] sm:$0xff]
  %v1010 = vld [vmem:[%s7 + $0x608] sm:$0xff]
  %v1011 = vld [vmem:[%s7 + $0x610] sm:$0xff]
  %v1012 = vld [vmem:[%s7 + $0x618] sm:$0xff]
  %v1013 = vld [vmem:[%s7 + $0x620] sm:$0xff]
  %v1014 = vld [vmem:[%s7 + $0x628] sm:$0xff]
  %v1015 = vld [vmem:[%s7 + $0x630] sm:$0xff]
  %v1016 = vld [vmem:[%s7 + $0x638] sm:$0xff]
  %v1017 = vld [vmem:[%s7 + $0x640] sm:$0xff]
  %v1018 = vld [vmem:[%s7 + $0x648] sm:$0xff]
  %v1019 = vld [vmem:[%s7 + $0x650] sm:$0xff]
  %v1020 = vld [vmem:[%s7 + $0x658] sm:$0xff]
  %v1021 = vld [vmem:[%s7 + $0x660] sm:$0xff]
  %v1022 = vld [vmem:[%s7 + $0x668] sm:$0xff]
  %v1023 = vld [vmem:[%s7 + $0x670] sm:$0xff]
  %v1024 = vld [vmem:[%s7 + $0x678] sm:$0xff]
  %v1025 = vld [vmem:[%s7 + $0x680] sm:$0xff]
  %v1026 = vld [vmem:[%s7 + $0x688] sm:$0xff]
  %v1027 = vld [vmem:[%s7 + $0x690] sm:$0xff]
  %v1028 = vld [vmem:[%s7 + $0x698] sm:$0xff]
  %v1029 = vld [vmem:[%s7 + $0x6a0] sm:$0xff]
  %v1030 = vld [vmem:[%s7 + $0x6a8] sm:$0xff]
  %v1031 = vld [vmem:[%s7 + $0x6b0] sm:$0xff]
  %v1032 = vld [vmem:[%s7 + $0x6b8] sm:$0xff]
  %v1033 = vld [vmem:[%s7 + $0x6c0] sm:$0xff]
  %v1034 = vld [vmem:[%s7 + $0x6c8] sm:$0xff]
  %v1035 = vld [vmem:[%s7 + $0x6d0] sm:$0xff]
  %v1036 = vld [vmem:[%s7 + $0x6d8] sm:$0xff]
  %v1037 = vld [vmem:[%s7 + $0x6e0] sm:$0xff]
  %v1038 = vld [vmem:[%s7 + $0x6e8] sm:$0xff]
  %v1039 = vld [vmem:[%s7 + $0x6f0] sm:$0xff]
  %v1040 = vld [vmem:[%s7 + $0x6f8] sm:$0xff]
  %v1041 = vld [vmem:[%s7 + $0x700] sm:$0xff]
  %v1042 = vld [vmem:[%s7 + $0x708] sm:$0xff]
  %v1043 = vld [vmem:[%s7 + $0x710] sm:$0xff]
  %v1044 = vld [vmem:[%s7 + $0x718] sm:$0xff]
  %v1045 = vld [vmem:[%s7 + $0x720] sm:$0xff]
  %v1046 = vld [vmem:[%s7 + $0x728] sm:$0xff]
  %v1047 = vld [vmem:[%s7 + $0x730] sm:$0xff]
  %v1048 = vld [vmem:[%s7 + $0x738] sm:$0xff]
  %v1049 = vld [vmem:[%s7 + $0x740] sm:$0xff]
  %v1050 = vld [vmem:[%s7 + $0x748] sm:$0xff]
  %v1051 = vld [vmem:[%s7 + $0x750] sm:$0xff]
  %v1052 = vld [vmem:[%s7 + $0x758] sm:$0xff]
  %v1053 = vld [vmem:[%s7 + $0x760] sm:$0xff]
  %v1054 = vld [vmem:[%s7 + $0x768] sm:$0xff]
  %v1055 = vld [vmem:[%s7 + $0x770] sm:$0xff]
  %v1056 = vld [vmem:[%s7 + $0x778] sm:$0xff]
  %v1057 = vld [vmem:[%s7 + $0x780] sm:$0xff]
  %v1058 = vld [vmem:[%s7 + $0x788] sm:$0xff]
  %v1059 = vld [vmem:[%s7 + $0x790] sm:$0xff]
  %v1060 = vld [vmem:[%s7 + $0x798] sm:$0xff]
  %v1061 = vld [vmem:[%s7 + $0x7a0] sm:$0xff]
  %v1062 = vld [vmem:[%s7 + $0x7a8] sm:$0xff]
  %v1063 = vld [vmem:[%s7 + $0x7b0] sm:$0xff]
  %v1064 = vld [vmem:[%s7 + $0x7b8] sm:$0xff]
  %v1065 = vld [vmem:[%s7 + $0x7c0] sm:$0xff]
  %v1066 = vld [vmem:[%s7 + $0x7c8] sm:$0xff]
  %v1067 = vld [vmem:[%s7 + $0x7d0] sm:$0xff]
  %v1068 = vld [vmem:[%s7 + $0x7d8] sm:$0xff]
  %v1069 = vld [vmem:[%s7 + $0x7e0] sm:$0xff]
  %v1070 = vld [vmem:[%s7 + $0x7e8] sm:$0xff]
  %v1071 = vld [vmem:[%s7 + $0x7f0] sm:$0xff]
  %v1072 = vld [vmem:[%s7 + $0x7f8] sm:$0xff]
  %v1073 = vld [vmem:[%s8] sm:$0xff]
  %v1075 = vlaneseq
  %v1076 = vshrl.u32 %v1075, 7
  %v1077 = vsub.s32 0, %v1076
  %v1078 = vrot.slane %v1073, %v1077
  %v1079 = vlaneseq
  %v1080 = vshrl.u32 %v1079, 7
  %v1081 = vsub.s32 1, %v1080
  %v1082 = vrot.slane %v1073, %v1081
  %v1083 = vlaneseq
  %v1084 = vshrl.u32 %v1083, 7
  %v1085 = vsub.s32 2, %v1084
  %v1086 = vrot.slane %v1073, %v1085
  %v1087 = vlaneseq
  %v1088 = vshrl.u32 %v1087, 7
  %v1089 = vsub.s32 3, %v1088
  %v1090 = vrot.slane %v1073, %v1089
  %v1091 = vlaneseq
  %v1092 = vshrl.u32 %v1091, 7
  %v1093 = vsub.s32 4, %v1092
  %v1094 = vrot.slane %v1073, %v1093
  %v1095 = vlaneseq
  %v1096 = vshrl.u32 %v1095, 7
  %v1097 = vsub.s32 5, %v1096
  %v1098 = vrot.slane %v1073, %v1097
  %v1099 = vlaneseq
  %v1100 = vshrl.u32 %v1099, 7
  %v1101 = vsub.s32 6, %v1100
  %v1102 = vrot.slane %v1073, %v1101
  %v1103 = vlaneseq
  %v1104 = vshrl.u32 %v1103, 7
  %v1105 = vsub.s32 7, %v1104
  %v1106 = vrot.slane %v1073, %v1105
  %v1371 = vunpack.c.l.b16 %v817
  %v1372 = vunpack.c.h.b16 %v817
  %v1373 = vunpack.c.l.b16 %v818
  %v1374 = vunpack.c.h.b16 %v818
  %v1375 = vunpack.c.l.b16 %v819
  %v1376 = vunpack.c.h.b16 %v819
  %v1377 = vunpack.c.l.b16 %v820
  %v1378 = vunpack.c.h.b16 %v820
  %v1379 = vunpack.c.l.b16 %v821
  %v1380 = vunpack.c.h.b16 %v821
  %v1381 = vunpack.c.l.b16 %v822
  %v1382 = vunpack.c.h.b16 %v822
  %v1383 = vunpack.c.l.b16 %v823
  %v1384 = vunpack.c.h.b16 %v823
  %v1385 = vunpack.c.l.b16 %v824
  %v1386 = vunpack.c.h.b16 %v824
  %v1387 = vunpack.c.l.b16 %v825
  %v1388 = vunpack.c.h.b16 %v825
  %v1389 = vunpack.c.l.b16 %v826
  %v1390 = vunpack.c.h.b16 %v826
  %v1391 = vunpack.c.l.b16 %v827
  %v1392 = vunpack.c.h.b16 %v827
  %v1393 = vunpack.c.l.b16 %v828
  %v1394 = vunpack.c.h.b16 %v828
  %v1395 = vunpack.c.l.b16 %v829
  %v1396 = vunpack.c.h.b16 %v829
  %v1397 = vunpack.c.l.b16 %v830
  %v1398 = vunpack.c.h.b16 %v830
  %v1399 = vunpack.c.l.b16 %v831
  %v1400 = vunpack.c.h.b16 %v831
  %v1401 = vunpack.c.l.b16 %v832
  %v1402 = vunpack.c.h.b16 %v832
  %v1403 = vunpack.c.l.b16 %v833
  %v1404 = vunpack.c.h.b16 %v833
  %v1405 = vunpack.c.l.b16 %v834
  %v1406 = vunpack.c.h.b16 %v834
  %v1407 = vunpack.c.l.b16 %v835
  %v1408 = vunpack.c.h.b16 %v835
  %v1409 = vunpack.c.l.b16 %v836
  %v1410 = vunpack.c.h.b16 %v836
  %v1411 = vunpack.c.l.b16 %v837
  %v1412 = vunpack.c.h.b16 %v837
  %v1413 = vunpack.c.l.b16 %v838
  %v1414 = vunpack.c.h.b16 %v838
  %v1415 = vunpack.c.l.b16 %v839
  %v1416 = vunpack.c.h.b16 %v839
  %v1417 = vunpack.c.l.b16 %v840
  %v1418 = vunpack.c.h.b16 %v840
  %v1419 = vunpack.c.l.b16 %v841
  %v1420 = vunpack.c.h.b16 %v841
  %v1421 = vunpack.c.l.b16 %v842
  %v1422 = vunpack.c.h.b16 %v842
  %v1423 = vunpack.c.l.b16 %v843
  %v1424 = vunpack.c.h.b16 %v843
  %v1425 = vunpack.c.l.b16 %v844
  %v1426 = vunpack.c.h.b16 %v844
  %v1427 = vunpack.c.l.b16 %v845
  %v1428 = vunpack.c.h.b16 %v845
  %v1429 = vunpack.c.l.b16 %v846
  %v1430 = vunpack.c.h.b16 %v846
  %v1431 = vunpack.c.l.b16 %v847
  %v1432 = vunpack.c.h.b16 %v847
  %v1433 = vunpack.c.l.b16 %v848
  %v1434 = vunpack.c.h.b16 %v848
  %v1435 = vunpack.c.l.b16 %v849
  %v1436 = vunpack.c.h.b16 %v849
  %v1437 = vunpack.c.l.b16 %v850
  %v1438 = vunpack.c.h.b16 %v850
  %v1439 = vunpack.c.l.b16 %v851
  %v1440 = vunpack.c.h.b16 %v851
  %v1441 = vunpack.c.l.b16 %v852
  %v1442 = vunpack.c.h.b16 %v852
  %v1443 = vunpack.c.l.b16 %v853
  %v1444 = vunpack.c.h.b16 %v853
  %v1445 = vunpack.c.l.b16 %v854
  %v1446 = vunpack.c.h.b16 %v854
  %v1447 = vunpack.c.l.b16 %v855
  %v1448 = vunpack.c.h.b16 %v855
  %v1449 = vunpack.c.l.b16 %v856
  %v1450 = vunpack.c.h.b16 %v856
  %v1451 = vunpack.c.l.b16 %v857
  %v1452 = vunpack.c.h.b16 %v857
  %v1453 = vunpack.c.l.b16 %v858
  %v1454 = vunpack.c.h.b16 %v858
  %v1455 = vunpack.c.l.b16 %v859
  %v1456 = vunpack.c.h.b16 %v859
  %v1457 = vunpack.c.l.b16 %v860
  %v1458 = vunpack.c.h.b16 %v860
  %v1459 = vunpack.c.l.b16 %v861
  %v1460 = vunpack.c.h.b16 %v861
  %v1461 = vunpack.c.l.b16 %v862
  %v1462 = vunpack.c.h.b16 %v862
  %v1463 = vunpack.c.l.b16 %v863
  %v1464 = vunpack.c.h.b16 %v863
  %v1465 = vunpack.c.l.b16 %v864
  %v1466 = vunpack.c.h.b16 %v864
  %v1467 = vunpack.c.l.b16 %v865
  %v1468 = vunpack.c.h.b16 %v865
  %v1469 = vunpack.c.l.b16 %v866
  %v1470 = vunpack.c.h.b16 %v866
  %v1471 = vunpack.c.l.b16 %v867
  %v1472 = vunpack.c.h.b16 %v867
  %v1473 = vunpack.c.l.b16 %v868
  %v1474 = vunpack.c.h.b16 %v868
  %v1475 = vunpack.c.l.b16 %v869
  %v1476 = vunpack.c.h.b16 %v869
  %v1477 = vunpack.c.l.b16 %v870
  %v1478 = vunpack.c.h.b16 %v870
  %v1479 = vunpack.c.l.b16 %v871
  %v1480 = vunpack.c.h.b16 %v871
  %v1481 = vunpack.c.l.b16 %v872
  %v1482 = vunpack.c.h.b16 %v872
  %v1483 = vunpack.c.l.b16 %v873
  %v1484 = vunpack.c.h.b16 %v873
  %v1485 = vunpack.c.l.b16 %v874
  %v1486 = vunpack.c.h.b16 %v874
  %v1487 = vunpack.c.l.b16 %v875
  %v1488 = vunpack.c.h.b16 %v875
  %v1489 = vunpack.c.l.b16 %v876
  %v1490 = vunpack.c.h.b16 %v876
  %v1491 = vunpack.c.l.b16 %v877
  %v1492 = vunpack.c.h.b16 %v877
  %v1493 = vunpack.c.l.b16 %v878
  %v1494 = vunpack.c.h.b16 %v878
  %v1495 = vunpack.c.l.b16 %v879
  %v1496 = vunpack.c.h.b16 %v879
  %v1497 = vunpack.c.l.b16 %v880
  %v1498 = vunpack.c.h.b16 %v880
  %v1499 = vunpack.c.l.b16 %v881
  %v1500 = vunpack.c.h.b16 %v881
  %v1501 = vunpack.c.l.b16 %v882
  %v1502 = vunpack.c.h.b16 %v882
  %v1503 = vunpack.c.l.b16 %v883
  %v1504 = vunpack.c.h.b16 %v883
  %v1505 = vunpack.c.l.b16 %v884
  %v1506 = vunpack.c.h.b16 %v884
  %v1507 = vunpack.c.l.b16 %v885
  %v1508 = vunpack.c.h.b16 %v885
  %v1509 = vunpack.c.l.b16 %v886
  %v1510 = vunpack.c.h.b16 %v886
  %v1511 = vunpack.c.l.b16 %v887
  %v1512 = vunpack.c.h.b16 %v887
  %v1513 = vunpack.c.l.b16 %v888
  %v1514 = vunpack.c.h.b16 %v888
  %v1515 = vunpack.c.l.b16 %v889
  %v1516 = vunpack.c.h.b16 %v889
  %v1517 = vunpack.c.l.b16 %v890
  %v1518 = vunpack.c.h.b16 %v890
  %v1519 = vunpack.c.l.b16 %v891
  %v1520 = vunpack.c.h.b16 %v891
  %v1521 = vunpack.c.l.b16 %v892
  %v1522 = vunpack.c.h.b16 %v892
  %v1523 = vunpack.c.l.b16 %v893
  %v1524 = vunpack.c.h.b16 %v893
  %v1525 = vunpack.c.l.b16 %v894
  %v1526 = vunpack.c.h.b16 %v894
  %v1527 = vunpack.c.l.b16 %v895
  %v1528 = vunpack.c.h.b16 %v895
  %v1529 = vunpack.c.l.b16 %v896
  %v1530 = vunpack.c.h.b16 %v896
  %v1531 = vunpack.c.l.b16 %v897
  %v1532 = vunpack.c.h.b16 %v897
  %v1533 = vunpack.c.l.b16 %v898
  %v1534 = vunpack.c.h.b16 %v898
  %v1535 = vunpack.c.l.b16 %v899
  %v1536 = vunpack.c.h.b16 %v899
  %v1537 = vunpack.c.l.b16 %v900
  %v1538 = vunpack.c.h.b16 %v900
  %v1539 = vunpack.c.l.b16 %v901
  %v1540 = vunpack.c.h.b16 %v901
  %v1541 = vunpack.c.l.b16 %v902
  %v1542 = vunpack.c.h.b16 %v902
  %v1543 = vunpack.c.l.b16 %v903
  %v1544 = vunpack.c.h.b16 %v903
  %v1545 = vunpack.c.l.b16 %v904
  %v1546 = vunpack.c.h.b16 %v904
  %v1547 = vunpack.c.l.b16 %v905
  %v1548 = vunpack.c.h.b16 %v905
  %v1549 = vunpack.c.l.b16 %v906
  %v1550 = vunpack.c.h.b16 %v906
  %v1551 = vunpack.c.l.b16 %v907
  %v1552 = vunpack.c.h.b16 %v907
  %v1553 = vunpack.c.l.b16 %v908
  %v1554 = vunpack.c.h.b16 %v908
  %v1555 = vunpack.c.l.b16 %v909
  %v1556 = vunpack.c.h.b16 %v909
  %v1557 = vunpack.c.l.b16 %v910
  %v1558 = vunpack.c.h.b16 %v910
  %v1559 = vunpack.c.l.b16 %v911
  %v1560 = vunpack.c.h.b16 %v911
  %v1561 = vunpack.c.l.b16 %v912
  %v1562 = vunpack.c.h.b16 %v912
  %v1563 = vunpack.c.l.b16 %v913
  %v1564 = vunpack.c.h.b16 %v913
  %v1565 = vunpack.c.l.b16 %v914
  %v1566 = vunpack.c.h.b16 %v914
  %v1567 = vunpack.c.l.b16 %v915
  %v1568 = vunpack.c.h.b16 %v915
  %v1569 = vunpack.c.l.b16 %v916
  %v1570 = vunpack.c.h.b16 %v916
  %v1571 = vunpack.c.l.b16 %v917
  %v1572 = vunpack.c.h.b16 %v917
  %v1573 = vunpack.c.l.b16 %v918
  %v1574 = vunpack.c.h.b16 %v918
  %v1575 = vunpack.c.l.b16 %v919
  %v1576 = vunpack.c.h.b16 %v919
  %v1577 = vunpack.c.l.b16 %v920
  %v1578 = vunpack.c.h.b16 %v920
  %v1579 = vunpack.c.l.b16 %v921
  %v1580 = vunpack.c.h.b16 %v921
  %v1581 = vunpack.c.l.b16 %v922
  %v1582 = vunpack.c.h.b16 %v922
  %v1583 = vunpack.c.l.b16 %v923
  %v1584 = vunpack.c.h.b16 %v923
  %v1585 = vunpack.c.l.b16 %v924
  %v1586 = vunpack.c.h.b16 %v924
  %v1587 = vunpack.c.l.b16 %v925
  %v1588 = vunpack.c.h.b16 %v925
  %v1589 = vunpack.c.l.b16 %v926
  %v1590 = vunpack.c.h.b16 %v926
  %v1591 = vunpack.c.l.b16 %v927
  %v1592 = vunpack.c.h.b16 %v927
  %v1593 = vunpack.c.l.b16 %v928
  %v1594 = vunpack.c.h.b16 %v928
  %v1595 = vunpack.c.l.b16 %v929
  %v1596 = vunpack.c.h.b16 %v929
  %v1597 = vunpack.c.l.b16 %v930
  %v1598 = vunpack.c.h.b16 %v930
  %v1599 = vunpack.c.l.b16 %v931
  %v1600 = vunpack.c.h.b16 %v931
  %v1601 = vunpack.c.l.b16 %v932
  %v1602 = vunpack.c.h.b16 %v932
  %v1603 = vunpack.c.l.b16 %v933
  %v1604 = vunpack.c.h.b16 %v933
  %v1605 = vunpack.c.l.b16 %v934
  %v1606 = vunpack.c.h.b16 %v934
  %v1607 = vunpack.c.l.b16 %v935
  %v1608 = vunpack.c.h.b16 %v935
  %v1609 = vunpack.c.l.b16 %v936
  %v1610 = vunpack.c.h.b16 %v936
  %v1611 = vunpack.c.l.b16 %v937
  %v1612 = vunpack.c.h.b16 %v937
  %v1613 = vunpack.c.l.b16 %v938
  %v1614 = vunpack.c.h.b16 %v938
  %v1615 = vunpack.c.l.b16 %v939
  %v1616 = vunpack.c.h.b16 %v939
  %v1617 = vunpack.c.l.b16 %v940
  %v1618 = vunpack.c.h.b16 %v940
  %v1619 = vunpack.c.l.b16 %v941
  %v1620 = vunpack.c.h.b16 %v941
  %v1621 = vunpack.c.l.b16 %v942
  %v1622 = vunpack.c.h.b16 %v942
  %v1623 = vunpack.c.l.b16 %v943
  %v1624 = vunpack.c.h.b16 %v943
  %v1625 = vunpack.c.l.b16 %v944
  %v1626 = vunpack.c.h.b16 %v944
  %v1627 = vunpack.c.l.b16 %v945
  %v1628 = vunpack.c.h.b16 %v945
  %v1629 = vunpack.c.l.b16 %v946
  %v1630 = vunpack.c.h.b16 %v946
  %v1631 = vunpack.c.l.b16 %v947
  %v1632 = vunpack.c.h.b16 %v947
  %v1633 = vunpack.c.l.b16 %v948
  %v1634 = vunpack.c.h.b16 %v948
  %v1635 = vunpack.c.l.b16 %v949
  %v1636 = vunpack.c.h.b16 %v949
  %v1637 = vunpack.c.l.b16 %v950
  %v1638 = vunpack.c.h.b16 %v950
  %v1639 = vunpack.c.l.b16 %v951
  %v1640 = vunpack.c.h.b16 %v951
  %v1641 = vunpack.c.l.b16 %v952
  %v1642 = vunpack.c.h.b16 %v952
  %v1643 = vunpack.c.l.b16 %v953
  %v1644 = vunpack.c.h.b16 %v953
  %v1645 = vunpack.c.l.b16 %v954
  %v1646 = vunpack.c.h.b16 %v954
  %v1647 = vunpack.c.l.b16 %v955
  %v1648 = vunpack.c.h.b16 %v955
  %v1649 = vunpack.c.l.b16 %v956
  %v1650 = vunpack.c.h.b16 %v956
  %v1651 = vunpack.c.l.b16 %v957
  %v1652 = vunpack.c.h.b16 %v957
  %v1653 = vunpack.c.l.b16 %v958
  %v1654 = vunpack.c.h.b16 %v958
  %v1655 = vunpack.c.l.b16 %v959
  %v1656 = vunpack.c.h.b16 %v959
  %v1657 = vunpack.c.l.b16 %v960
  %v1658 = vunpack.c.h.b16 %v960
  %v1659 = vunpack.c.l.b16 %v961
  %v1660 = vunpack.c.h.b16 %v961
  %v1661 = vunpack.c.l.b16 %v962
  %v1662 = vunpack.c.h.b16 %v962
  %v1663 = vunpack.c.l.b16 %v963
  %v1664 = vunpack.c.h.b16 %v963
  %v1665 = vunpack.c.l.b16 %v964
  %v1666 = vunpack.c.h.b16 %v964
  %v1667 = vunpack.c.l.b16 %v965
  %v1668 = vunpack.c.h.b16 %v965
  %v1669 = vunpack.c.l.b16 %v966
  %v1670 = vunpack.c.h.b16 %v966
  %v1671 = vunpack.c.l.b16 %v967
  %v1672 = vunpack.c.h.b16 %v967
  %v1673 = vunpack.c.l.b16 %v968
  %v1674 = vunpack.c.h.b16 %v968
  %v1675 = vunpack.c.l.b16 %v969
  %v1676 = vunpack.c.h.b16 %v969
  %v1677 = vunpack.c.l.b16 %v970
  %v1678 = vunpack.c.h.b16 %v970
  %v1679 = vunpack.c.l.b16 %v971
  %v1680 = vunpack.c.h.b16 %v971
  %v1681 = vunpack.c.l.b16 %v972
  %v1682 = vunpack.c.h.b16 %v972
  %v1683 = vunpack.c.l.b16 %v973
  %v1684 = vunpack.c.h.b16 %v973
  %v1685 = vunpack.c.l.b16 %v974
  %v1686 = vunpack.c.h.b16 %v974
  %v1687 = vunpack.c.l.b16 %v975
  %v1688 = vunpack.c.h.b16 %v975
  %v1689 = vunpack.c.l.b16 %v976
  %v1690 = vunpack.c.h.b16 %v976
  %v1691 = vunpack.c.l.b16 %v977
  %v1692 = vunpack.c.h.b16 %v977
  %v1693 = vunpack.c.l.b16 %v978
  %v1694 = vunpack.c.h.b16 %v978
  %v1695 = vunpack.c.l.b16 %v979
  %v1696 = vunpack.c.h.b16 %v979
  %v1697 = vunpack.c.l.b16 %v980
  %v1698 = vunpack.c.h.b16 %v980
  %v1699 = vunpack.c.l.b16 %v981
  %v1700 = vunpack.c.h.b16 %v981
  %v1701 = vunpack.c.l.b16 %v982
  %v1702 = vunpack.c.h.b16 %v982
  %v1703 = vunpack.c.l.b16 %v983
  %v1704 = vunpack.c.h.b16 %v983
  %v1705 = vunpack.c.l.b16 %v984
  %v1706 = vunpack.c.h.b16 %v984
  %v1707 = vunpack.c.l.b16 %v985
  %v1708 = vunpack.c.h.b16 %v985
  %v1709 = vunpack.c.l.b16 %v986
  %v1710 = vunpack.c.h.b16 %v986
  %v1711 = vunpack.c.l.b16 %v987
  %v1712 = vunpack.c.h.b16 %v987
  %v1713 = vunpack.c.l.b16 %v988
  %v1714 = vunpack.c.h.b16 %v988
  %v1715 = vunpack.c.l.b16 %v989
  %v1716 = vunpack.c.h.b16 %v989
  %v1717 = vunpack.c.l.b16 %v990
  %v1718 = vunpack.c.h.b16 %v990
  %v1719 = vunpack.c.l.b16 %v991
  %v1720 = vunpack.c.h.b16 %v991
  %v1721 = vunpack.c.l.b16 %v992
  %v1722 = vunpack.c.h.b16 %v992
  %v1723 = vunpack.c.l.b16 %v993
  %v1724 = vunpack.c.h.b16 %v993
  %v1725 = vunpack.c.l.b16 %v994
  %v1726 = vunpack.c.h.b16 %v994
  %v1727 = vunpack.c.l.b16 %v995
  %v1728 = vunpack.c.h.b16 %v995
  %v1729 = vunpack.c.l.b16 %v996
  %v1730 = vunpack.c.h.b16 %v996
  %v1731 = vunpack.c.l.b16 %v997
  %v1732 = vunpack.c.h.b16 %v997
  %v1733 = vunpack.c.l.b16 %v998
  %v1734 = vunpack.c.h.b16 %v998
  %v1735 = vunpack.c.l.b16 %v999
  %v1736 = vunpack.c.h.b16 %v999
  %v1737 = vunpack.c.l.b16 %v1000
  %v1738 = vunpack.c.h.b16 %v1000
  %v1739 = vunpack.c.l.b16 %v1001
  %v1740 = vunpack.c.h.b16 %v1001
  %v1741 = vunpack.c.l.b16 %v1002
  %v1742 = vunpack.c.h.b16 %v1002
  %v1743 = vunpack.c.l.b16 %v1003
  %v1744 = vunpack.c.h.b16 %v1003
  %v1745 = vunpack.c.l.b16 %v1004
  %v1746 = vunpack.c.h.b16 %v1004
  %v1747 = vunpack.c.l.b16 %v1005
  %v1748 = vunpack.c.h.b16 %v1005
  %v1749 = vunpack.c.l.b16 %v1006
  %v1750 = vunpack.c.h.b16 %v1006
  %v1751 = vunpack.c.l.b16 %v1007
  %v1752 = vunpack.c.h.b16 %v1007
  %v1753 = vunpack.c.l.b16 %v1008
  %v1754 = vunpack.c.h.b16 %v1008
  %v1755 = vunpack.c.l.b16 %v1009
  %v1756 = vunpack.c.h.b16 %v1009
  %v1757 = vunpack.c.l.b16 %v1010
  %v1758 = vunpack.c.h.b16 %v1010
  %v1759 = vunpack.c.l.b16 %v1011
  %v1760 = vunpack.c.h.b16 %v1011
  %v1761 = vunpack.c.l.b16 %v1012
  %v1762 = vunpack.c.h.b16 %v1012
  %v1763 = vunpack.c.l.b16 %v1013
  %v1764 = vunpack.c.h.b16 %v1013
  %v1765 = vunpack.c.l.b16 %v1014
  %v1766 = vunpack.c.h.b16 %v1014
  %v1767 = vunpack.c.l.b16 %v1015
  %v1768 = vunpack.c.h.b16 %v1015
  %v1769 = vunpack.c.l.b16 %v1016
  %v1770 = vunpack.c.h.b16 %v1016
  %v1771 = vunpack.c.l.b16 %v1017
  %v1772 = vunpack.c.h.b16 %v1017
  %v1773 = vunpack.c.l.b16 %v1018
  %v1774 = vunpack.c.h.b16 %v1018
  %v1775 = vunpack.c.l.b16 %v1019
  %v1776 = vunpack.c.h.b16 %v1019
  %v1777 = vunpack.c.l.b16 %v1020
  %v1778 = vunpack.c.h.b16 %v1020
  %v1779 = vunpack.c.l.b16 %v1021
  %v1780 = vunpack.c.h.b16 %v1021
  %v1781 = vunpack.c.l.b16 %v1022
  %v1782 = vunpack.c.h.b16 %v1022
  %v1783 = vunpack.c.l.b16 %v1023
  %v1784 = vunpack.c.h.b16 %v1023
  %v1785 = vunpack.c.l.b16 %v1024
  %v1786 = vunpack.c.h.b16 %v1024
  %v1787 = vunpack.c.l.b16 %v1025
  %v1788 = vunpack.c.h.b16 %v1025
  %v1789 = vunpack.c.l.b16 %v1026
  %v1790 = vunpack.c.h.b16 %v1026
  %v1791 = vunpack.c.l.b16 %v1027
  %v1792 = vunpack.c.h.b16 %v1027
  %v1793 = vunpack.c.l.b16 %v1028
  %v1794 = vunpack.c.h.b16 %v1028
  %v1795 = vunpack.c.l.b16 %v1029
  %v1796 = vunpack.c.h.b16 %v1029
  %v1797 = vunpack.c.l.b16 %v1030
  %v1798 = vunpack.c.h.b16 %v1030
  %v1799 = vunpack.c.l.b16 %v1031
  %v1800 = vunpack.c.h.b16 %v1031
  %v1801 = vunpack.c.l.b16 %v1032
  %v1802 = vunpack.c.h.b16 %v1032
  %v1803 = vunpack.c.l.b16 %v1033
  %v1804 = vunpack.c.h.b16 %v1033
  %v1805 = vunpack.c.l.b16 %v1034
  %v1806 = vunpack.c.h.b16 %v1034
  %v1807 = vunpack.c.l.b16 %v1035
  %v1808 = vunpack.c.h.b16 %v1035
  %v1809 = vunpack.c.l.b16 %v1036
  %v1810 = vunpack.c.h.b16 %v1036
  %v1811 = vunpack.c.l.b16 %v1037
  %v1812 = vunpack.c.h.b16 %v1037
  %v1813 = vunpack.c.l.b16 %v1038
  %v1814 = vunpack.c.h.b16 %v1038
  %v1815 = vunpack.c.l.b16 %v1039
  %v1816 = vunpack.c.h.b16 %v1039
  %v1817 = vunpack.c.l.b16 %v1040
  %v1818 = vunpack.c.h.b16 %v1040
  %v1819 = vunpack.c.l.b16 %v1041
  %v1820 = vunpack.c.h.b16 %v1041
  %v1821 = vunpack.c.l.b16 %v1042
  %v1822 = vunpack.c.h.b16 %v1042
  %v1823 = vunpack.c.l.b16 %v1043
  %v1824 = vunpack.c.h.b16 %v1043
  %v1825 = vunpack.c.l.b16 %v1044
  %v1826 = vunpack.c.h.b16 %v1044
  %v1827 = vunpack.c.l.b16 %v1045
  %v1828 = vunpack.c.h.b16 %v1045
  %v1829 = vunpack.c.l.b16 %v1046
  %v1830 = vunpack.c.h.b16 %v1046
  %v1831 = vunpack.c.l.b16 %v1047
  %v1832 = vunpack.c.h.b16 %v1047
  %v1833 = vunpack.c.l.b16 %v1048
  %v1834 = vunpack.c.h.b16 %v1048
  %v1835 = vunpack.c.l.b16 %v1049
  %v1836 = vunpack.c.h.b16 %v1049
  %v1837 = vunpack.c.l.b16 %v1050
  %v1838 = vunpack.c.h.b16 %v1050
  %v1839 = vunpack.c.l.b16 %v1051
  %v1840 = vunpack.c.h.b16 %v1051
  %v1841 = vunpack.c.l.b16 %v1052
  %v1842 = vunpack.c.h.b16 %v1052
  %v1843 = vunpack.c.l.b16 %v1053
  %v1844 = vunpack.c.h.b16 %v1053
  %v1845 = vunpack.c.l.b16 %v1054
  %v1846 = vunpack.c.h.b16 %v1054
  %v1847 = vunpack.c.l.b16 %v1055
  %v1848 = vunpack.c.h.b16 %v1055
  %v1849 = vunpack.c.l.b16 %v1056
  %v1850 = vunpack.c.h.b16 %v1056
  %v1851 = vunpack.c.l.b16 %v1057
  %v1852 = vunpack.c.h.b16 %v1057
  %v1853 = vunpack.c.l.b16 %v1058
  %v1854 = vunpack.c.h.b16 %v1058
  %v1855 = vunpack.c.l.b16 %v1059
  %v1856 = vunpack.c.h.b16 %v1059
  %v1857 = vunpack.c.l.b16 %v1060
  %v1858 = vunpack.c.h.b16 %v1060
  %v1859 = vunpack.c.l.b16 %v1061
  %v1860 = vunpack.c.h.b16 %v1061
  %v1861 = vunpack.c.l.b16 %v1062
  %v1862 = vunpack.c.h.b16 %v1062
  %v1863 = vunpack.c.l.b16 %v1063
  %v1864 = vunpack.c.h.b16 %v1063
  %v1865 = vunpack.c.l.b16 %v1064
  %v1866 = vunpack.c.h.b16 %v1064
  %v1867 = vunpack.c.l.b16 %v1065
  %v1868 = vunpack.c.h.b16 %v1065
  %v1869 = vunpack.c.l.b16 %v1066
  %v1870 = vunpack.c.h.b16 %v1066
  %v1871 = vunpack.c.l.b16 %v1067
  %v1872 = vunpack.c.h.b16 %v1067
  %v1873 = vunpack.c.l.b16 %v1068
  %v1874 = vunpack.c.h.b16 %v1068
  %v1875 = vunpack.c.l.b16 %v1069
  %v1876 = vunpack.c.h.b16 %v1069
  %v1877 = vunpack.c.l.b16 %v1070
  %v1878 = vunpack.c.h.b16 %v1070
  %v1879 = vunpack.c.l.b16 %v1071
  %v1880 = vunpack.c.h.b16 %v1071
  %v1881 = vunpack.c.l.b16 %v1072
  %v1882 = vunpack.c.h.b16 %v1072
  %v1883 = vpack.c.b16 %v1379, %v1371
  %v1884 = vpack.c.b16 %v1380, %v1372
  %v1885 = vpack.c.b16 %v1381, %v1373
  %v1886 = vpack.c.b16 %v1382, %v1374
  %v1887 = vpack.c.b16 %v1383, %v1375
  %v1888 = vpack.c.b16 %v1384, %v1376
  %v1889 = vpack.c.b16 %v1385, %v1377
  %v1890 = vpack.c.b16 %v1386, %v1378
  %v1891 = vpack.c.b16 %v1395, %v1387
  %v1892 = vpack.c.b16 %v1396, %v1388
  %v1893 = vpack.c.b16 %v1397, %v1389
  %v1894 = vpack.c.b16 %v1398, %v1390
  %v1895 = vpack.c.b16 %v1399, %v1391
  %v1896 = vpack.c.b16 %v1400, %v1392
  %v1897 = vpack.c.b16 %v1401, %v1393
  %v1898 = vpack.c.b16 %v1402, %v1394
  %v1899 = vpack.c.b16 %v1411, %v1403
  %v1900 = vpack.c.b16 %v1412, %v1404
  %v1901 = vpack.c.b16 %v1413, %v1405
  %v1902 = vpack.c.b16 %v1414, %v1406
  %v1903 = vpack.c.b16 %v1415, %v1407
  %v1904 = vpack.c.b16 %v1416, %v1408
  %v1905 = vpack.c.b16 %v1417, %v1409
  %v1906 = vpack.c.b16 %v1418, %v1410
  %v1907 = vpack.c.b16 %v1427, %v1419
  %v1908 = vpack.c.b16 %v1428, %v1420
  %v1909 = vpack.c.b16 %v1429, %v1421
  %v1910 = vpack.c.b16 %v1430, %v1422
  %v1911 = vpack.c.b16 %v1431, %v1423
  %v1912 = vpack.c.b16 %v1432, %v1424
  %v1913 = vpack.c.b16 %v1433, %v1425
  %v1914 = vpack.c.b16 %v1434, %v1426
  %v1915 = vpack.c.b16 %v1443, %v1435
  %v1916 = vpack.c.b16 %v1444, %v1436
  %v1917 = vpack.c.b16 %v1445, %v1437
  %v1918 = vpack.c.b16 %v1446, %v1438
  %v1919 = vpack.c.b16 %v1447, %v1439
  %v1920 = vpack.c.b16 %v1448, %v1440
  %v1921 = vpack.c.b16 %v1449, %v1441
  %v1922 = vpack.c.b16 %v1450, %v1442
  %v1923 = vpack.c.b16 %v1459, %v1451
  %v1924 = vpack.c.b16 %v1460, %v1452
  %v1925 = vpack.c.b16 %v1461, %v1453
  %v1926 = vpack.c.b16 %v1462, %v1454
  %v1927 = vpack.c.b16 %v1463, %v1455
  %v1928 = vpack.c.b16 %v1464, %v1456
  %v1929 = vpack.c.b16 %v1465, %v1457
  %v1930 = vpack.c.b16 %v1466, %v1458
  %v1931 = vpack.c.b16 %v1475, %v1467
  %v1932 = vpack.c.b16 %v1476, %v1468
  %v1933 = vpack.c.b16 %v1477, %v1469
  %v1934 = vpack.c.b16 %v1478, %v1470
  %v1935 = vpack.c.b16 %v1479, %v1471
  %v1936 = vpack.c.b16 %v1480, %v1472
  %v1937 = vpack.c.b16 %v1481, %v1473
  %v1938 = vpack.c.b16 %v1482, %v1474
  %v1939 = vpack.c.b16 %v1491, %v1483
  %v1940 = vpack.c.b16 %v1492, %v1484
  %v1941 = vpack.c.b16 %v1493, %v1485
  %v1942 = vpack.c.b16 %v1494, %v1486
  %v1943 = vpack.c.b16 %v1495, %v1487
  %v1944 = vpack.c.b16 %v1496, %v1488
  %v1945 = vpack.c.b16 %v1497, %v1489
  %v1946 = vpack.c.b16 %v1498, %v1490
  %v1947 = vpack.c.b16 %v1507, %v1499
  %v1948 = vpack.c.b16 %v1508, %v1500
  %v1949 = vpack.c.b16 %v1509, %v1501
  %v1950 = vpack.c.b16 %v1510, %v1502
  %v1951 = vpack.c.b16 %v1511, %v1503
  %v1952 = vpack.c.b16 %v1512, %v1504
  %v1953 = vpack.c.b16 %v1513, %v1505
  %v1954 = vpack.c.b16 %v1514, %v1506
  %v1955 = vpack.c.b16 %v1523, %v1515
  %v1956 = vpack.c.b16 %v1524, %v1516
  %v1957 = vpack.c.b16 %v1525, %v1517
  %v1958 = vpack.c.b16 %v1526, %v1518
  %v1959 = vpack.c.b16 %v1527, %v1519
  %v1960 = vpack.c.b16 %v1528, %v1520
  %v1961 = vpack.c.b16 %v1529, %v1521
  %v1962 = vpack.c.b16 %v1530, %v1522
  %v1963 = vpack.c.b16 %v1539, %v1531
  %v1964 = vpack.c.b16 %v1540, %v1532
  %v1965 = vpack.c.b16 %v1541, %v1533
  %v1966 = vpack.c.b16 %v1542, %v1534
  %v1967 = vpack.c.b16 %v1543, %v1535
  %v1968 = vpack.c.b16 %v1544, %v1536
  %v1969 = vpack.c.b16 %v1545, %v1537
  %v1970 = vpack.c.b16 %v1546, %v1538
  %v1971 = vpack.c.b16 %v1555, %v1547
  %v1972 = vpack.c.b16 %v1556, %v1548
  %v1973 = vpack.c.b16 %v1557, %v1549
  %v1974 = vpack.c.b16 %v1558, %v1550
  %v1975 = vpack.c.b16 %v1559, %v1551
  %v1976 = vpack.c.b16 %v1560, %v1552
  %v1977 = vpack.c.b16 %v1561, %v1553
  %v1978 = vpack.c.b16 %v1562, %v1554
  %v1979 = vpack.c.b16 %v1571, %v1563
  %v1980 = vpack.c.b16 %v1572, %v1564
  %v1981 = vpack.c.b16 %v1573, %v1565
  %v1982 = vpack.c.b16 %v1574, %v1566
  %v1983 = vpack.c.b16 %v1575, %v1567
  %v1984 = vpack.c.b16 %v1576, %v1568
  %v1985 = vpack.c.b16 %v1577, %v1569
  %v1986 = vpack.c.b16 %v1578, %v1570
  %v1987 = vpack.c.b16 %v1587, %v1579
  %v1988 = vpack.c.b16 %v1588, %v1580
  %v1989 = vpack.c.b16 %v1589, %v1581
  %v1990 = vpack.c.b16 %v1590, %v1582
  %v1991 = vpack.c.b16 %v1591, %v1583
  %v1992 = vpack.c.b16 %v1592, %v1584
  %v1993 = vpack.c.b16 %v1593, %v1585
  %v1994 = vpack.c.b16 %v1594, %v1586
  %v1995 = vpack.c.b16 %v1603, %v1595
  %v1996 = vpack.c.b16 %v1604, %v1596
  %v1997 = vpack.c.b16 %v1605, %v1597
  %v1998 = vpack.c.b16 %v1606, %v1598
  %v1999 = vpack.c.b16 %v1607, %v1599
  %v2000 = vpack.c.b16 %v1608, %v1600
  %v2001 = vpack.c.b16 %v1609, %v1601
  %v2002 = vpack.c.b16 %v1610, %v1602
  %v2003 = vpack.c.b16 %v1619, %v1611
  %v2004 = vpack.c.b16 %v1620, %v1612
  %v2005 = vpack.c.b16 %v1621, %v1613
  %v2006 = vpack.c.b16 %v1622, %v1614
  %v2007 = vpack.c.b16 %v1623, %v1615
  %v2008 = vpack.c.b16 %v1624, %v1616
  %v2009 = vpack.c.b16 %v1625, %v1617
  %v2010 = vpack.c.b16 %v1626, %v1618
  %v2011 = vpack.c.b16 %v1635, %v1627
  %v2012 = vpack.c.b16 %v1636, %v1628
  %v2013 = vpack.c.b16 %v1637, %v1629
  %v2014 = vpack.c.b16 %v1638, %v1630
  %v2015 = vpack.c.b16 %v1639, %v1631
  %v2016 = vpack.c.b16 %v1640, %v1632
  %v2017 = vpack.c.b16 %v1641, %v1633
  %v2018 = vpack.c.b16 %v1642, %v1634
  %v2019 = vpack.c.b16 %v1651, %v1643
  %v2020 = vpack.c.b16 %v1652, %v1644
  %v2021 = vpack.c.b16 %v1653, %v1645
  %v2022 = vpack.c.b16 %v1654, %v1646
  %v2023 = vpack.c.b16 %v1655, %v1647
  %v2024 = vpack.c.b16 %v1656, %v1648
  %v2025 = vpack.c.b16 %v1657, %v1649
  %v2026 = vpack.c.b16 %v1658, %v1650
  %v2027 = vpack.c.b16 %v1667, %v1659
  %v2028 = vpack.c.b16 %v1668, %v1660
  %v2029 = vpack.c.b16 %v1669, %v1661
  %v2030 = vpack.c.b16 %v1670, %v1662
  %v2031 = vpack.c.b16 %v1671, %v1663
  %v2032 = vpack.c.b16 %v1672, %v1664
  %v2033 = vpack.c.b16 %v1673, %v1665
  %v2034 = vpack.c.b16 %v1674, %v1666
  %v2035 = vpack.c.b16 %v1683, %v1675
  %v2036 = vpack.c.b16 %v1684, %v1676
  %v2037 = vpack.c.b16 %v1685, %v1677
  %v2038 = vpack.c.b16 %v1686, %v1678
  %v2039 = vpack.c.b16 %v1687, %v1679
  %v2040 = vpack.c.b16 %v1688, %v1680
  %v2041 = vpack.c.b16 %v1689, %v1681
  %v2042 = vpack.c.b16 %v1690, %v1682
  %v2043 = vpack.c.b16 %v1699, %v1691
  %v2044 = vpack.c.b16 %v1700, %v1692
  %v2045 = vpack.c.b16 %v1701, %v1693
  %v2046 = vpack.c.b16 %v1702, %v1694
  %v2047 = vpack.c.b16 %v1703, %v1695
  %v2048 = vpack.c.b16 %v1704, %v1696
  %v2049 = vpack.c.b16 %v1705, %v1697
  %v2050 = vpack.c.b16 %v1706, %v1698
  %v2051 = vpack.c.b16 %v1715, %v1707
  %v2052 = vpack.c.b16 %v1716, %v1708
  %v2053 = vpack.c.b16 %v1717, %v1709
  %v2054 = vpack.c.b16 %v1718, %v1710
  %v2055 = vpack.c.b16 %v1719, %v1711
  %v2056 = vpack.c.b16 %v1720, %v1712
  %v2057 = vpack.c.b16 %v1721, %v1713
  %v2058 = vpack.c.b16 %v1722, %v1714
  %v2059 = vpack.c.b16 %v1731, %v1723
  %v2060 = vpack.c.b16 %v1732, %v1724
  %v2061 = vpack.c.b16 %v1733, %v1725
  %v2062 = vpack.c.b16 %v1734, %v1726
  %v2063 = vpack.c.b16 %v1735, %v1727
  %v2064 = vpack.c.b16 %v1736, %v1728
  %v2065 = vpack.c.b16 %v1737, %v1729
  %v2066 = vpack.c.b16 %v1738, %v1730
  %v2067 = vpack.c.b16 %v1747, %v1739
  %v2068 = vpack.c.b16 %v1748, %v1740
  %v2069 = vpack.c.b16 %v1749, %v1741
  %v2070 = vpack.c.b16 %v1750, %v1742
  %v2071 = vpack.c.b16 %v1751, %v1743
  %v2072 = vpack.c.b16 %v1752, %v1744
  %v2073 = vpack.c.b16 %v1753, %v1745
  %v2074 = vpack.c.b16 %v1754, %v1746
  %v2075 = vpack.c.b16 %v1763, %v1755
  %v2076 = vpack.c.b16 %v1764, %v1756
  %v2077 = vpack.c.b16 %v1765, %v1757
  %v2078 = vpack.c.b16 %v1766, %v1758
  %v2079 = vpack.c.b16 %v1767, %v1759
  %v2080 = vpack.c.b16 %v1768, %v1760
  %v2081 = vpack.c.b16 %v1769, %v1761
  %v2082 = vpack.c.b16 %v1770, %v1762
  %v2083 = vpack.c.b16 %v1779, %v1771
  %v2084 = vpack.c.b16 %v1780, %v1772
  %v2085 = vpack.c.b16 %v1781, %v1773
  %v2086 = vpack.c.b16 %v1782, %v1774
  %v2087 = vpack.c.b16 %v1783, %v1775
  %v2088 = vpack.c.b16 %v1784, %v1776
  %v2089 = vpack.c.b16 %v1785, %v1777
  %v2090 = vpack.c.b16 %v1786, %v1778
  %v2091 = vpack.c.b16 %v1795, %v1787
  %v2092 = vpack.c.b16 %v1796, %v1788
  %v2093 = vpack.c.b16 %v1797, %v1789
  %v2094 = vpack.c.b16 %v1798, %v1790
  %v2095 = vpack.c.b16 %v1799, %v1791
  %v2096 = vpack.c.b16 %v1800, %v1792
  %v2097 = vpack.c.b16 %v1801, %v1793
  %v2098 = vpack.c.b16 %v1802, %v1794
  %v2099 = vpack.c.b16 %v1811, %v1803
  %v2100 = vpack.c.b16 %v1812, %v1804
  %v2101 = vpack.c.b16 %v1813, %v1805
  %v2102 = vpack.c.b16 %v1814, %v1806
  %v2103 = vpack.c.b16 %v1815, %v1807
  %v2104 = vpack.c.b16 %v1816, %v1808
  %v2105 = vpack.c.b16 %v1817, %v1809
  %v2106 = vpack.c.b16 %v1818, %v1810
  %v2107 = vpack.c.b16 %v1827, %v1819
  %v2108 = vpack.c.b16 %v1828, %v1820
  %v2109 = vpack.c.b16 %v1829, %v1821
  %v2110 = vpack.c.b16 %v1830, %v1822
  %v2111 = vpack.c.b16 %v1831, %v1823
  %v2112 = vpack.c.b16 %v1832, %v1824
  %v2113 = vpack.c.b16 %v1833, %v1825
  %v2114 = vpack.c.b16 %v1834, %v1826
  %v2115 = vpack.c.b16 %v1843, %v1835
  %v2116 = vpack.c.b16 %v1844, %v1836
  %v2117 = vpack.c.b16 %v1845, %v1837
  %v2118 = vpack.c.b16 %v1846, %v1838
  %v2119 = vpack.c.b16 %v1847, %v1839
  %v2120 = vpack.c.b16 %v1848, %v1840
  %v2121 = vpack.c.b16 %v1849, %v1841
  %v2122 = vpack.c.b16 %v1850, %v1842
  %v2123 = vpack.c.b16 %v1859, %v1851
  %v2124 = vpack.c.b16 %v1860, %v1852
  %v2125 = vpack.c.b16 %v1861, %v1853
  %v2126 = vpack.c.b16 %v1862, %v1854
  %v2127 = vpack.c.b16 %v1863, %v1855
  %v2128 = vpack.c.b16 %v1864, %v1856
  %v2129 = vpack.c.b16 %v1865, %v1857
  %v2130 = vpack.c.b16 %v1866, %v1858
  %v2131 = vpack.c.b16 %v1875, %v1867
  %v2132 = vpack.c.b16 %v1876, %v1868
  %v2133 = vpack.c.b16 %v1877, %v1869
  %v2134 = vpack.c.b16 %v1878, %v1870
  %v2135 = vpack.c.b16 %v1879, %v1871
  %v2136 = vpack.c.b16 %v1880, %v1872
  %v2137 = vpack.c.b16 %v1881, %v1873
  %v2138 = vpack.c.b16 %v1882, %v1874
  %2395 = vmatprep.subr.bf16.mxu0 %v1884
  %2396 = vmatpush1.bf16.msra.mxu0 %v1883
  %2397 = vmatprep.subr.bf16.mxu0 %v1892
  %2398 = vmatpush1.bf16.msra.mxu0 %v1891
  %2399 = vmatprep.subr.bf16.mxu0 %v1900
  %2400 = vmatpush1.bf16.msra.mxu0 %v1899
  %2401 = vmatprep.subr.bf16.mxu0 %v1908
  %2402 = vmatpush1.bf16.msra.mxu0 %v1907
  %2403 = vmatprep.subr.bf16.mxu0 %v1916
  %2404 = vmatpush1.bf16.msra.mxu0 %v1915
  %2405 = vmatprep.subr.bf16.mxu0 %v1924
  %2406 = vmatpush1.bf16.msra.mxu0 %v1923
  %2407 = vmatprep.subr.bf16.mxu0 %v1932
  %2408 = vmatpush1.bf16.msra.mxu0 %v1931
  %2409 = vmatprep.subr.bf16.mxu0 %v1940
  %2410 = vmatpush1.bf16.msra.mxu0 %v1939
  %2411 = vmatprep.subr.bf16.mxu0 %v1948
  %2412 = vmatpush1.bf16.msra.mxu0 %v1947
  %2413 = vmatprep.subr.bf16.mxu0 %v1956
  %2414 = vmatpush1.bf16.msra.mxu0 %v1955
  %2415 = vmatprep.subr.bf16.mxu0 %v1964
  %2416 = vmatpush1.bf16.msra.mxu0 %v1963
  %2417 = vmatprep.subr.bf16.mxu0 %v1972
  %2418 = vmatpush1.bf16.msra.mxu0 %v1971
  %2419 = vmatprep.subr.bf16.mxu0 %v1980
  %2420 = vmatpush1.bf16.msra.mxu0 %v1979
  %2421 = vmatprep.subr.bf16.mxu0 %v1988
  %2422 = vmatpush1.bf16.msra.mxu0 %v1987
  %2423 = vmatprep.subr.bf16.mxu0 %v1996
  %2424 = vmatpush1.bf16.msra.mxu0 %v1995
  %2425 = vmatprep.subr.bf16.mxu0 %v2004
  %2426 = vmatpush1.bf16.msra.mxu0 %v2003
  %2427 = vmatprep.mubr.bf16.mxu0 %v814
  %2428 = vmatmul.mubr.bf16.gmra.mrb[0].mxu0 %v813
  %v2429 = vpop.f32.mrb[0].mxu0
  %v2430 = vadd.f32 %v1078, %v2429
  %v2431 = vpop.f32.mrb[0].mxu0
  %v2432 = vadd.f32 %v1082, %v2431
  %v2433 = vpop.f32.mrb[0].mxu0
  %v2434 = vpop.f32.mrb[0].mxu0
  %2435 = vdwg.mxu0
  %2436 = vmatprep.subr.bf16.mxu0 %v2012
  %2437 = vmatpush1.bf16.msra.mxu0 %v2011
  %2438 = vmatprep.subr.bf16.mxu0 %v2020
  %2439 = vmatpush1.bf16.msra.mxu0 %v2019
  %2440 = vmatprep.subr.bf16.mxu0 %v2028
  %2441 = vmatpush1.bf16.msra.mxu0 %v2027
  %2442 = vmatprep.subr.bf16.mxu0 %v2036
  %2443 = vmatpush1.bf16.msra.mxu0 %v2035
  %2444 = vmatprep.subr.bf16.mxu0 %v2044
  %2445 = vmatpush1.bf16.msra.mxu0 %v2043
  %2446 = vmatprep.subr.bf16.mxu0 %v2052
  %2447 = vmatpush1.bf16.msra.mxu0 %v2051
  %2448 = vmatprep.subr.bf16.mxu0 %v2060
  %2449 = vmatpush1.bf16.msra.mxu0 %v2059
  %2450 = vmatprep.subr.bf16.mxu0 %v2068
  %2451 = vmatpush1.bf16.msra.mxu0 %v2067
  %2452 = vmatprep.subr.bf16.mxu0 %v2076
  %2453 = vmatpush1.bf16.msra.mxu0 %v2075
  %2454 = vmatprep.subr.bf16.mxu0 %v2084
  %2455 = vmatpush1.bf16.msra.mxu0 %v2083
  %2456 = vmatprep.subr.bf16.mxu0 %v2092
  %2457 = vmatpush1.bf16.msra.mxu0 %v2091
  %2458 = vmatprep.subr.bf16.mxu0 %v2100
  %2459 = vmatpush1.bf16.msra.mxu0 %v2099
  %2460 = vmatprep.subr.bf16.mxu0 %v2108
  %2461 = vmatpush1.bf16.msra.mxu0 %v2107
  %2462 = vmatprep.subr.bf16.mxu0 %v2116
  %2463 = vmatpush1.bf16.msra.mxu0 %v2115
  %2464 = vmatprep.subr.bf16.mxu0 %v2124
  %2465 = vmatpush1.bf16.msra.mxu0 %v2123
  %2466 = vmatprep.subr.bf16.mxu0 %v2132
  %2467 = vmatpush1.bf16.msra.mxu0 %v2131
  %2468 = vmatprep.mubr.bf16.mxu0 %v816
  %2469 = vmatmul.mubr.bf16.gmra.mrb[0].mxu0 %v815
  %v2470 = vpop.f32.mrb[0].mxu0
  %v2471 = vadd.f32 %v2430, %v2470
  %v2472 = vpop.f32.mrb[0].mxu0
  %v2473 = vadd.f32 %v2432, %v2472
  %v2474 = vpop.f32.mrb[0].mxu0
  %v2475 = vpop.f32.mrb[0].mxu0
  %2476 = vdwg.mxu0
  %2477 = vmatprep.subr.bf16.mxu0 %v1886
  %2478 = vmatpush1.bf16.msra.mxu0 %v1885
  %2479 = vmatprep.subr.bf16.mxu0 %v1894
  %2480 = vmatpush1.bf16.msra.mxu0 %v1893
  %2481 = vmatprep.subr.bf16.mxu0 %v1902
  %2482 = vmatpush1.bf16.msra.mxu0 %v1901
  %2483 = vmatprep.subr.bf16.mxu0 %v1910
  %2484 = vmatpush1.bf16.msra.mxu0 %v1909
  %2485 = vmatprep.subr.bf16.mxu0 %v1918
  %2486 = vmatpush1.bf16.msra.mxu0 %v1917
  %2487 = vmatprep.subr.bf16.mxu0 %v1926
  %2488 = vmatpush1.bf16.msra.mxu0 %v1925
  %2489 = vmatprep.subr.bf16.mxu0 %v1934
  %2490 = vmatpush1.bf16.msra.mxu0 %v1933
  %2491 = vmatprep.subr.bf16.mxu0 %v1942
  %2492 = vmatpush1.bf16.msra.mxu0 %v1941
  %2493 = vmatprep.subr.bf16.mxu0 %v1950
  %2494 = vmatpush1.bf16.msra.mxu0 %v1949
  %2495 = vmatprep.subr.bf16.mxu0 %v1958
  %2496 = vmatpush1.bf16.msra.mxu0 %v1957
  %2497 = vmatprep.subr.bf16.mxu0 %v1966
  %2498 = vmatpush1.bf16.msra.mxu0 %v1965
  %2499 = vmatprep.subr.bf16.mxu0 %v1974
  %2500 = vmatpush1.bf16.msra.mxu0 %v1973
  %2501 = vmatprep.subr.bf16.mxu0 %v1982
  %2502 = vmatpush1.bf16.msra.mxu0 %v1981
  %2503 = vmatprep.subr.bf16.mxu0 %v1990
  %2504 = vmatpush1.bf16.msra.mxu0 %v1989
  %2505 = vmatprep.subr.bf16.mxu0 %v1998
  %2506 = vmatpush1.bf16.msra.mxu0 %v1997
  %2507 = vmatprep.subr.bf16.mxu0 %v2006
  %2508 = vmatpush1.bf16.msra.mxu0 %v2005
  %2509 = vmatprep.mubr.bf16.mxu0 %v814
  %2510 = vmatmul.mubr.bf16.gmra.mrb[0].mxu0 %v813
  %v2511 = vpop.f32.mrb[0].mxu0
  %v2512 = vadd.f32 %v1086, %v2511
  %v2513 = vpop.f32.mrb[0].mxu0
  %v2514 = vadd.f32 %v1090, %v2513
  %v2515 = vpop.f32.mrb[0].mxu0
  %v2516 = vpop.f32.mrb[0].mxu0
  %2517 = vdwg.mxu0
  %2518 = vmatprep.subr.bf16.mxu0 %v2014
  %2519 = vmatpush1.bf16.msra.mxu0 %v2013
  %2520 = vmatprep.subr.bf16.mxu0 %v2022
  %2521 = vmatpush1.bf16.msra.mxu0 %v2021
  %2522 = vmatprep.subr.bf16.mxu0 %v2030
  %2523 = vmatpush1.bf16.msra.mxu0 %v2029
  %2524 = vmatprep.subr.bf16.mxu0 %v2038
  %2525 = vmatpush1.bf16.msra.mxu0 %v2037
  %2526 = vmatprep.subr.bf16.mxu0 %v2046
  %2527 = vmatpush1.bf16.msra.mxu0 %v2045
  %2528 = vmatprep.subr.bf16.mxu0 %v2054
  %2529 = vmatpush1.bf16.msra.mxu0 %v2053
  %2530 = vmatprep.subr.bf16.mxu0 %v2062
  %2531 = vmatpush1.bf16.msra.mxu0 %v2061
  %2532 = vmatprep.subr.bf16.mxu0 %v2070
  %2533 = vmatpush1.bf16.msra.mxu0 %v2069
  %2534 = vmatprep.subr.bf16.mxu0 %v2078
  %2535 = vmatpush1.bf16.msra.mxu0 %v2077
  %2536 = vmatprep.subr.bf16.mxu0 %v2086
  %2537 = vmatpush1.bf16.msra.mxu0 %v2085
  %2538 = vmatprep.subr.bf16.mxu0 %v2094
  %2539 = vmatpush1.bf16.msra.mxu0 %v2093
  %2540 = vmatprep.subr.bf16.mxu0 %v2102
  %2541 = vmatpush1.bf16.msra.mxu0 %v2101
  %2542 = vmatprep.subr.bf16.mxu0 %v2110
  %2543 = vmatpush1.bf16.msra.mxu0 %v2109
  %2544 = vmatprep.subr.bf16.mxu0 %v2118
  %2545 = vmatpush1.bf16.msra.mxu0 %v2117
  %2546 = vmatprep.subr.bf16.mxu0 %v2126
  %2547 = vmatpush1.bf16.msra.mxu0 %v2125
  %2548 = vmatprep.subr.bf16.mxu0 %v2134
  %2549 = vmatpush1.bf16.msra.mxu0 %v2133
  %2550 = vmatprep.mubr.bf16.mxu0 %v816
  %2551 = vmatmul.mubr.bf16.gmra.mrb[0].mxu0 %v815
  %v2552 = vpop.f32.mrb[0].mxu0
  %v2553 = vadd.f32 %v2512, %v2552
  %v2554 = vpop.f32.mrb[0].mxu0
  %v2555 = vadd.f32 %v2514, %v2554
  %v2556 = vpop.f32.mrb[0].mxu0
  %v2557 = vpop.f32.mrb[0].mxu0
  %2558 = vdwg.mxu0
  %2559 = vmatprep.subr.bf16.mxu0 %v1888
  %2560 = vmatpush1.bf16.msra.mxu0 %v1887
  %2561 = vmatprep.subr.bf16.mxu0 %v1896
  %2562 = vmatpush1.bf16.msra.mxu0 %v1895
  %2563 = vmatprep.subr.bf16.mxu0 %v1904
  %2564 = vmatpush1.bf16.msra.mxu0 %v1903
  %2565 = vmatprep.subr.bf16.mxu0 %v1912
  %2566 = vmatpush1.bf16.msra.mxu0 %v1911
  %2567 = vmatprep.subr.bf16.mxu0 %v1920
  %2568 = vmatpush1.bf16.msra.mxu0 %v1919
  %2569 = vmatprep.subr.bf16.mxu0 %v1928
  %2570 = vmatpush1.bf16.msra.mxu0 %v1927
  %2571 = vmatprep.subr.bf16.mxu0 %v1936
  %2572 = vmatpush1.bf16.msra.mxu0 %v1935
  %2573 = vmatprep.subr.bf16.mxu0 %v1944
  %2574 = vmatpush1.bf16.msra.mxu0 %v1943
  %2575 = vmatprep.subr.bf16.mxu0 %v1952
  %2576 = vmatpush1.bf16.msra.mxu0 %v1951
  %2577 = vmatprep.subr.bf16.mxu0 %v1960
  %2578 = vmatpush1.bf16.msra.mxu0 %v1959
  %2579 = vmatprep.subr.bf16.mxu0 %v1968
  %2580 = vmatpush1.bf16.msra.mxu0 %v1967
  %2581 = vmatprep.subr.bf16.mxu0 %v1976
  %2582 = vmatpush1.bf16.msra.mxu0 %v1975
  %2583 = vmatprep.subr.bf16.mxu0 %v1984
  %2584 = vmatpush1.bf16.msra.mxu0 %v1983
  %2585 = vmatprep.subr.bf16.mxu0 %v1992
  %2586 = vmatpush1.bf16.msra.mxu0 %v1991
  %2587 = vmatprep.subr.bf16.mxu0 %v2000
  %2588 = vmatpush1.bf16.msra.mxu0 %v1999
  %2589 = vmatprep.subr.bf16.mxu0 %v2008
  %2590 = vmatpush1.bf16.msra.mxu0 %v2007
  %2591 = vmatprep.mubr.bf16.mxu0 %v814
  %2592 = vmatmul.mubr.bf16.gmra.mrb[0].mxu0 %v813
  %v2593 = vpop.f32.mrb[0].mxu0
  %v2594 = vadd.f32 %v1094, %v2593
  %v2595 = vpop.f32.mrb[0].mxu0
  %v2596 = vadd.f32 %v1098, %v2595
  %v2597 = vpop.f32.mrb[0].mxu0
  %v2598 = vpop.f32.mrb[0].mxu0
  %2599 = vdwg.mxu0
  %2600 = vmatprep.subr.bf16.mxu0 %v2016
  %2601 = vmatpush1.bf16.msra.mxu0 %v2015
  %2602 = vmatprep.subr.bf16.mxu0 %v2024
  %2603 = vmatpush1.bf16.msra.mxu0 %v2023
  %2604 = vmatprep.subr.bf16.mxu0 %v2032
  %2605 = vmatpush1.bf16.msra.mxu0 %v2031
  %2606 = vmatprep.subr.bf16.mxu0 %v2040
  %2607 = vmatpush1.bf16.msra.mxu0 %v2039
  %2608 = vmatprep.subr.bf16.mxu0 %v2048
  %2609 = vmatpush1.bf16.msra.mxu0 %v2047
  %2610 = vmatprep.subr.bf16.mxu0 %v2056
  %2611 = vmatpush1.bf16.msra.mxu0 %v2055
  %2612 = vmatprep.subr.bf16.mxu0 %v2064
  %2613 = vmatpush1.bf16.msra.mxu0 %v2063
  %2614 = vmatprep.subr.bf16.mxu0 %v2072
  %2615 = vmatpush1.bf16.msra.mxu0 %v2071
  %2616 = vmatprep.subr.bf16.mxu0 %v2080
  %2617 = vmatpush1.bf16.msra.mxu0 %v2079
  %2618 = vmatprep.subr.bf16.mxu0 %v2088
  %2619 = vmatpush1.bf16.msra.mxu0 %v2087
  %2620 = vmatprep.subr.bf16.mxu0 %v2096
  %2621 = vmatpush1.bf16.msra.mxu0 %v2095
  %2622 = vmatprep.subr.bf16.mxu0 %v2104
  %2623 = vmatpush1.bf16.msra.mxu0 %v2103
  %2624 = vmatprep.subr.bf16.mxu0 %v2112
  %2625 = vmatpush1.bf16.msra.mxu0 %v2111
  %2626 = vmatprep.subr.bf16.mxu0 %v2120
  %2627 = vmatpush1.bf16.msra.mxu0 %v2119
  %2628 = vmatprep.subr.bf16.mxu0 %v2128
  %2629 = vmatpush1.bf16.msra.mxu0 %v2127
  %2630 = vmatprep.subr.bf16.mxu0 %v2136
  %2631 = vmatpush1.bf16.msra.mxu0 %v2135
  %2632 = vmatprep.mubr.bf16.mxu0 %v816
  %2633 = vmatmul.mubr.bf16.gmra.mrb[0].mxu0 %v815
  %v2634 = vpop.f32.mrb[0].mxu0
  %v2635 = vadd.f32 %v2594, %v2634
  %v2636 = vpop.f32.mrb[0].mxu0
  %v2637 = vadd.f32 %v2596, %v2636
  %v2638 = vpop.f32.mrb[0].mxu0
  %v2639 = vpop.f32.mrb[0].mxu0
  %2640 = vdwg.mxu0
  %2641 = vmatprep.subr.bf16.mxu0 %v1890
  %2642 = vmatpush1.bf16.msra.mxu0 %v1889
  %2643 = vmatprep.subr.bf16.mxu0 %v1898
  %2644 = vmatpush1.bf16.msra.mxu0 %v1897
  %2645 = vmatprep.subr.bf16.mxu0 %v1906
  %2646 = vmatpush1.bf16.msra.mxu0 %v1905
  %2647 = vmatprep.subr.bf16.mxu0 %v1914
  %2648 = vmatpush1.bf16.msra.mxu0 %v1913
  %2649 = vmatprep.subr.bf16.mxu0 %v1922
  %2650 = vmatpush1.bf16.msra.mxu0 %v1921
  %2651 = vmatprep.subr.bf16.mxu0 %v1930
  %2652 = vmatpush1.bf16.msra.mxu0 %v1929
  %2653 = vmatprep.subr.bf16.mxu0 %v1938
  %2654 = vmatpush1.bf16.msra.mxu0 %v1937
  %2655 = vmatprep.subr.bf16.mxu0 %v1946
  %2656 = vmatpush1.bf16.msra.mxu0 %v1945
  %2657 = vmatprep.subr.bf16.mxu0 %v1954
  %2658 = vmatpush1.bf16.msra.mxu0 %v1953
  %2659 = vmatprep.subr.bf16.mxu0 %v1962
  %2660 = vmatpush1.bf16.msra.mxu0 %v1961
  %2661 = vmatprep.subr.bf16.mxu0 %v1970
  %2662 = vmatpush1.bf16.msra.mxu0 %v1969
  %2663 = vmatprep.subr.bf16.mxu0 %v1978
  %2664 = vmatpush1.bf16.msra.mxu0 %v1977
  %2665 = vmatprep.subr.bf16.mxu0 %v1986
  %2666 = vmatpush1.bf16.msra.mxu0 %v1985
  %2667 = vmatprep.subr.bf16.mxu0 %v1994
  %2668 = vmatpush1.bf16.msra.mxu0 %v1993
  %2669 = vmatprep.subr.bf16.mxu0 %v2002
  %2670 = vmatpush1.bf16.msra.mxu0 %v2001
  %2671 = vmatprep.subr.bf16.mxu0 %v2010
  %2672 = vmatpush1.bf16.msra.mxu0 %v2009
  %2673 = vmatprep.mubr.bf16.mxu0 %v814
  %2674 = vmatmul.mubr.bf16.gmra.mrb[0].mxu0 %v813
  %v2675 = vpop.f32.mrb[0].mxu0
  %v2676 = vadd.f32 %v1102, %v2675
  %v2677 = vpop.f32.mrb[0].mxu0
  %v2678 = vadd.f32 %v1106, %v2677
  %v2679 = vpop.f32.mrb[0].mxu0
  %v2680 = vpop.f32.mrb[0].mxu0
  %2681 = vdwg.mxu0
  %2682 = vmatprep.subr.bf16.mxu0 %v2018
  %2683 = vmatpush1.bf16.msra.mxu0 %v2017
  %2684 = vmatprep.subr.bf16.mxu0 %v2026
  %2685 = vmatpush1.bf16.msra.mxu0 %v2025
  %2686 = vmatprep.subr.bf16.mxu0 %v2034
  %2687 = vmatpush1.bf16.msra.mxu0 %v2033
  %2688 = vmatprep.subr.bf16.mxu0 %v2042
  %2689 = vmatpush1.bf16.msra.mxu0 %v2041
  %2690 = vmatprep.subr.bf16.mxu0 %v2050
  %2691 = vmatpush1.bf16.msra.mxu0 %v2049
  %2692 = vmatprep.subr.bf16.mxu0 %v2058
  %2693 = vmatpush1.bf16.msra.mxu0 %v2057
  %2694 = vmatprep.subr.bf16.mxu0 %v2066
  %2695 = vmatpush1.bf16.msra.mxu0 %v2065
  %2696 = vmatprep.subr.bf16.mxu0 %v2074
  %2697 = vmatpush1.bf16.msra.mxu0 %v2073
  %2698 = vmatprep.subr.bf16.mxu0 %v2082
  %2699 = vmatpush1.bf16.msra.mxu0 %v2081
  %2700 = vmatprep.subr.bf16.mxu0 %v2090
  %2701 = vmatpush1.bf16.msra.mxu0 %v2089
  %2702 = vmatprep.subr.bf16.mxu0 %v2098
  %2703 = vmatpush1.bf16.msra.mxu0 %v2097
  %2704 = vmatprep.subr.bf16.mxu0 %v2106
  %2705 = vmatpush1.bf16.msra.mxu0 %v2105
  %2706 = vmatprep.subr.bf16.mxu0 %v2114
  %2707 = vmatpush1.bf16.msra.mxu0 %v2113
  %2708 = vmatprep.subr.bf16.mxu0 %v2122
  %2709 = vmatpush1.bf16.msra.mxu0 %v2121
  %2710 = vmatprep.subr.bf16.mxu0 %v2130
  %2711 = vmatpush1.bf16.msra.mxu0 %v2129
  %2712 = vmatprep.subr.bf16.mxu0 %v2138
  %2713 = vmatpush1.bf16.msra.mxu0 %v2137
  %2714 = vmatprep.mubr.bf16.mxu0 %v816
  %2715 = vmatmul.mubr.bf16.gmra.mrb[0].mxu0 %v815
  %v2716 = vpop.f32.mrb[0].mxu0
  %v2717 = vadd.f32 %v2676, %v2716
  %v2718 = vpop.f32.mrb[0].mxu0
  %v2719 = vadd.f32 %v2678, %v2718
  %v2720 = vpop.f32.mrb[0].mxu0
  %v2721 = vpop.f32.mrb[0].mxu0
  %2722 = vdwg.mxu0
  %vm2723 = vcmp.gt.f32.partialorder %v2471, 0.0
  %vm2724 = vcmp.gt.f32.partialorder %v2473, 0.0
  %vm2725 = vcmp.gt.f32.partialorder %v2553, 0.0
  %vm2726 = vcmp.gt.f32.partialorder %v2555, 0.0
  %vm2727 = vcmp.gt.f32.partialorder %v2635, 0.0
  %vm2728 = vcmp.gt.f32.partialorder %v2637, 0.0
  %vm2729 = vcmp.gt.f32.partialorder %v2717, 0.0
  %vm2730 = vcmp.gt.f32.partialorder %v2719, 0.0
  %v2731 = vmul.f32 %v2471, 0.2
  %v2732 = vmul.f32 %v2473, 0.2
  %v2733 = vmul.f32 %v2553, 0.2
  %v2734 = vmul.f32 %v2555, 0.2
  %v2735 = vmul.f32 %v2635, 0.2
  %v2736 = vmul.f32 %v2637, 0.2
  %v2737 = vmul.f32 %v2717, 0.2
  %v2738 = vmul.f32 %v2719, 0.2
  %v2739 = vsel %vm2723, %v2471, %v2731
  %v2740 = vsel %vm2724, %v2473, %v2732
  %v2741 = vsel %vm2725, %v2553, %v2733
  %v2742 = vsel %vm2726, %v2555, %v2734
  %v2743 = vsel %vm2727, %v2635, %v2735
  %v2744 = vsel %vm2728, %v2637, %v2736
  %v2745 = vsel %vm2729, %v2717, %v2737
  %v2746 = vsel %vm2730, %v2719, %v2738
  %v2747 = vpack.c.bf16 %v2739, %v2739
  %v2748 = vpack.c.bf16 %v2740, %v2740
  %v2749 = vpack.c.bf16 %v2741, %v2741
  %v2750 = vpack.c.bf16 %v2742, %v2742
  %v2751 = vpack.c.bf16 %v2743, %v2743
  %v2752 = vpack.c.bf16 %v2744, %v2744
  %v2753 = vpack.c.bf16 %v2745, %v2745
  %v2754 = vpack.c.bf16 %v2746, %v2746
  %v2755 = vld [vmem:[%s9] sm:$0xff]
  %v2756 = vld [vmem:[%s9 + $0x8] sm:$0xff]
  %v2757 = vld [vmem:[%s9 + $0x10] sm:$0xff]
  %v2758 = vld [vmem:[%s9 + $0x18] sm:$0xf]
  %v2759 = vld [vmem:[%s9 + $0x1c] sm:$0xff]
  %v2760 = vld [vmem:[%s9 + $0x24] sm:$0xff]
  %v2761 = vld [vmem:[%s9 + $0x2c] sm:$0xff]
  %v2762 = vld [vmem:[%s9 + $0x34] sm:$0xf]
  %v2763 = vld [vmem:[%s9 + $0x38] sm:$0xff]
  %v2764 = vld [vmem:[%s9 + $0x40] sm:$0xff]
  %v2765 = vld [vmem:[%s9 + $0x48] sm:$0xff]
  %v2766 = vld [vmem:[%s9 + $0x50] sm:$0xf]
  %v2767 = vld [vmem:[%s9 + $0x54] sm:$0xff]
  %v2768 = vld [vmem:[%s9 + $0x5c] sm:$0xff]
  %v2769 = vld [vmem:[%s9 + $0x64] sm:$0xff]
  %v2770 = vld [vmem:[%s9 + $0x6c] sm:$0xf]
  %v2771 = vld [vmem:[%s9 + $0x70] sm:$0xff]
  %v2772 = vld [vmem:[%s9 + $0x78] sm:$0xff]
  %v2773 = vld [vmem:[%s9 + $0x80] sm:$0xff]
  %v2774 = vld [vmem:[%s9 + $0x88] sm:$0xf]
  %v2775 = vld [vmem:[%s9 + $0x8c] sm:$0xff]
  %v2776 = vld [vmem:[%s9 + $0x94] sm:$0xff]
  %v2777 = vld [vmem:[%s9 + $0x9c] sm:$0xff]
  %v2778 = vld [vmem:[%s9 + $0xa4] sm:$0xf]
  %v2779 = vld [vmem:[%s9 + $0xa8] sm:$0xff]
  %v2780 = vld [vmem:[%s9 + $0xb0] sm:$0xff]
  %v2781 = vld [vmem:[%s9 + $0xb8] sm:$0xff]
  %v2782 = vld [vmem:[%s9 + $0xc0] sm:$0xf]
  %v2783 = vld [vmem:[%s9 + $0xc4] sm:$0xff]
  %v2784 = vld [vmem:[%s9 + $0xcc] sm:$0xff]
  %v2785 = vld [vmem:[%s9 + $0xd4] sm:$0xff]
  %v2786 = vld [vmem:[%s9 + $0xdc] sm:$0xf]
  %v2787 = vld [vmem:[%s9 + $0xe0] sm:$0xff]
  %v2788 = vld [vmem:[%s9 + $0xe8] sm:$0xff]
  %v2789 = vld [vmem:[%s9 + $0xf0] sm:$0xff]
  %v2790 = vld [vmem:[%s9 + $0xf8] sm:$0xf]
  %v2791 = vld [vmem:[%s9 + $0xfc] sm:$0xff]
  %v2792 = vld [vmem:[%s9 + $0x104] sm:$0xff]
  %v2793 = vld [vmem:[%s9 + $0x10c] sm:$0xff]
  %v2794 = vld [vmem:[%s9 + $0x114] sm:$0xf]
  %v2795 = vld [vmem:[%s9 + $0x118] sm:$0xff]
  %v2796 = vld [vmem:[%s9 + $0x120] sm:$0xff]
  %v2797 = vld [vmem:[%s9 + $0x128] sm:$0xff]
  %v2798 = vld [vmem:[%s9 + $0x130] sm:$0xf]
  %v2799 = vld [vmem:[%s9 + $0x134] sm:$0xff]
  %v2800 = vld [vmem:[%s9 + $0x13c] sm:$0xff]
  %v2801 = vld [vmem:[%s9 + $0x144] sm:$0xff]
  %v2802 = vld [vmem:[%s9 + $0x14c] sm:$0xf]
  %v2803 = vld [vmem:[%s9 + $0x150] sm:$0xff]
  %v2804 = vld [vmem:[%s9 + $0x158] sm:$0xff]
  %v2805 = vld [vmem:[%s9 + $0x160] sm:$0xff]
  %v2806 = vld [vmem:[%s9 + $0x168] sm:$0xf]
  %v2807 = vld [vmem:[%s9 + $0x16c] sm:$0xff]
  %v2808 = vld [vmem:[%s9 + $0x174] sm:$0xff]
  %v2809 = vld [vmem:[%s9 + $0x17c] sm:$0xff]
  %v2810 = vld [vmem:[%s9 + $0x184] sm:$0xf]
  %v2811 = vld [vmem:[%s9 + $0x188] sm:$0xff]
  %v2812 = vld [vmem:[%s9 + $0x190] sm:$0xff]
  %v2813 = vld [vmem:[%s9 + $0x198] sm:$0xff]
  %v2814 = vld [vmem:[%s9 + $0x1a0] sm:$0xf]
  %v2815 = vld [vmem:[%s9 + $0x1a4] sm:$0xff]
  %v2816 = vld [vmem:[%s9 + $0x1ac] sm:$0xff]
  %v2817 = vld [vmem:[%s9 + $0x1b4] sm:$0xff]
  %v2818 = vld [vmem:[%s9 + $0x1bc] sm:$0xf]
  %v2819 = vld [vmem:[%s9 + $0x1c0] sm:$0xff]
  %v2820 = vld [vmem:[%s9 + $0x1c8] sm:$0xff]
  %v2821 = vld [vmem:[%s9 + $0x1d0] sm:$0xff]
  %v2822 = vld [vmem:[%s9 + $0x1d8] sm:$0xf]
  %v2823 = vld [vmem:[%s9 + $0x1dc] sm:$0xff]
  %v2824 = vld [vmem:[%s9 + $0x1e4] sm:$0xff]
  %v2825 = vld [vmem:[%s9 + $0x1ec] sm:$0xff]
  %v2826 = vld [vmem:[%s9 + $0x1f4] sm:$0xf]
  %v2827 = vld [vmem:[%s9 + $0x1f8] sm:$0xff]
  %v2828 = vld [vmem:[%s9 + $0x200] sm:$0xff]
  %v2829 = vld [vmem:[%s9 + $0x208] sm:$0xff]
  %v2830 = vld [vmem:[%s9 + $0x210] sm:$0xf]
  %v2831 = vld [vmem:[%s9 + $0x214] sm:$0xff]
  %v2832 = vld [vmem:[%s9 + $0x21c] sm:$0xff]
  %v2833 = vld [vmem:[%s9 + $0x224] sm:$0xff]
  %v2834 = vld [vmem:[%s9 + $0x22c] sm:$0xf]
  %v2835 = vld [vmem:[%s9 + $0x230] sm:$0xff]
  %v2836 = vld [vmem:[%s9 + $0x238] sm:$0xff]
  %v2837 = vld [vmem:[%s9 + $0x240] sm:$0xff]
  %v2838 = vld [vmem:[%s9 + $0x248] sm:$0xf]
  %v2839 = vld [vmem:[%s9 + $0x24c] sm:$0xff]
  %v2840 = vld [vmem:[%s9 + $0x254] sm:$0xff]
  %v2841 = vld [vmem:[%s9 + $0x25c] sm:$0xff]
  %v2842 = vld [vmem:[%s9 + $0x264] sm:$0xf]
  %v2843 = vld [vmem:[%s9 + $0x268] sm:$0xff]
  %v2844 = vld [vmem:[%s9 + $0x270] sm:$0xff]
  %v2845 = vld [vmem:[%s9 + $0x278] sm:$0xff]
  %v2846 = vld [vmem:[%s9 + $0x280] sm:$0xf]
  %v2847 = vld [vmem:[%s9 + $0x284] sm:$0xff]
  %v2848 = vld [vmem:[%s9 + $0x28c] sm:$0xff]
  %v2849 = vld [vmem:[%s9 + $0x294] sm:$0xff]
  %v2850 = vld [vmem:[%s9 + $0x29c] sm:$0xf]
  %v2851 = vld [vmem:[%s9 + $0x2a0] sm:$0xff]
  %v2852 = vld [vmem:[%s9 + $0x2a8] sm:$0xff]
  %v2853 = vld [vmem:[%s9 + $0x2b0] sm:$0xff]
  %v2854 = vld [vmem:[%s9 + $0x2b8] sm:$0xf]
  %v2855 = vld [vmem:[%s9 + $0x2bc] sm:$0xff]
  %v2856 = vld [vmem:[%s9 + $0x2c4] sm:$0xff]
  %v2857 = vld [vmem:[%s9 + $0x2cc] sm:$0xff]
  %v2858 = vld [vmem:[%s9 + $0x2d4] sm:$0xf]
  %v2859 = vld [vmem:[%s9 + $0x2d8] sm:$0xff]
  %v2860 = vld [vmem:[%s9 + $0x2e0] sm:$0xff]
  %v2861 = vld [vmem:[%s9 + $0x2e8] sm:$0xff]
  %v2862 = vld [vmem:[%s9 + $0x2f0] sm:$0xf]
  %v2863 = vld [vmem:[%s9 + $0x2f4] sm:$0xff]
  %v2864 = vld [vmem:[%s9 + $0x2fc] sm:$0xff]
  %v2865 = vld [vmem:[%s9 + $0x304] sm:$0xff]
  %v2866 = vld [vmem:[%s9 + $0x30c] sm:$0xf]
  %v2867 = vld [vmem:[%s9 + $0x310] sm:$0xff]
  %v2868 = vld [vmem:[%s9 + $0x318] sm:$0xff]
  %v2869 = vld [vmem:[%s9 + $0x320] sm:$0xff]
  %v2870 = vld [vmem:[%s9 + $0x328] sm:$0xf]
  %v2871 = vld [vmem:[%s9 + $0x32c] sm:$0xff]
  %v2872 = vld [vmem:[%s9 + $0x334] sm:$0xff]
  %v2873 = vld [vmem:[%s9 + $0x33c] sm:$0xff]
  %v2874 = vld [vmem:[%s9 + $0x344] sm:$0xf]
  %v2875 = vld [vmem:[%s9 + $0x348] sm:$0xff]
  %v2876 = vld [vmem:[%s9 + $0x350] sm:$0xff]
  %v2877 = vld [vmem:[%s9 + $0x358] sm:$0xff]
  %v2878 = vld [vmem:[%s9 + $0x360] sm:$0xf]
  %v2879 = vld [vmem:[%s9 + $0x364] sm:$0xff]
  %v2880 = vld [vmem:[%s9 + $0x36c] sm:$0xff]
  %v2881 = vld [vmem:[%s9 + $0x374] sm:$0xff]
  %v2882 = vld [vmem:[%s9 + $0x37c] sm:$0xf]
  %v2883 = vld [vmem:[%s9 + $0x380] sm:$0xff]
  %v2884 = vld [vmem:[%s9 + $0x388] sm:$0xff]
  %v2885 = vld [vmem:[%s9 + $0x390] sm:$0xff]
  %v2886 = vld [vmem:[%s9 + $0x398] sm:$0xf]
  %v2887 = vld [vmem:[%s9 + $0x39c] sm:$0xff]
  %v2888 = vld [vmem:[%s9 + $0x3a4] sm:$0xff]
  %v2889 = vld [vmem:[%s9 + $0x3ac] sm:$0xff]
  %v2890 = vld [vmem:[%s9 + $0x3b4] sm:$0xf]
  %v2891 = vld [vmem:[%s9 + $0x3b8] sm:$0xff]
  %v2892 = vld [vmem:[%s9 + $0x3c0] sm:$0xff]
  %v2893 = vld [vmem:[%s9 + $0x3c8] sm:$0xff]
  %v2894 = vld [vmem:[%s9 + $0x3d0] sm:$0xf]
  %v2895 = vld [vmem:[%s9 + $0x3d4] sm:$0xff]
  %v2896 = vld [vmem:[%s9 + $0x3dc] sm:$0xff]
  %v2897 = vld [vmem:[%s9 + $0x3e4] sm:$0xff]
  %v2898 = vld [vmem:[%s9 + $0x3ec] sm:$0xf]
  %v2899 = vld [vmem:[%s9 + $0x3f0] sm:$0xff]
  %v2900 = vld [vmem:[%s9 + $0x3f8] sm:$0xff]
  %v2901 = vld [vmem:[%s9 + $0x400] sm:$0xff]
  %v2902 = vld [vmem:[%s9 + $0x408] sm:$0xf]
  %v2903 = vld [vmem:[%s9 + $0x40c] sm:$0xff]
  %v2904 = vld [vmem:[%s9 + $0x414] sm:$0xff]
  %v2905 = vld [vmem:[%s9 + $0x41c] sm:$0xff]
  %v2906 = vld [vmem:[%s9 + $0x424] sm:$0xf]
  %v2907 = vld [vmem:[%s9 + $0x428] sm:$0xff]
  %v2908 = vld [vmem:[%s9 + $0x430] sm:$0xff]
  %v2909 = vld [vmem:[%s9 + $0x438] sm:$0xff]
  %v2910 = vld [vmem:[%s9 + $0x440] sm:$0xf]
  %v2911 = vld [vmem:[%s9 + $0x444] sm:$0xff]
  %v2912 = vld [vmem:[%s9 + $0x44c] sm:$0xff]
  %v2913 = vld [vmem:[%s9 + $0x454] sm:$0xff]
  %v2914 = vld [vmem:[%s9 + $0x45c] sm:$0xf]
  %v2915 = vld [vmem:[%s9 + $0x460] sm:$0xff]
  %v2916 = vld [vmem:[%s9 + $0x468] sm:$0xff]
  %v2917 = vld [vmem:[%s9 + $0x470] sm:$0xff]
  %v2918 = vld [vmem:[%s9 + $0x478] sm:$0xf]
  %v2919 = vld [vmem:[%s9 + $0x47c] sm:$0xff]
  %v2920 = vld [vmem:[%s9 + $0x484] sm:$0xff]
  %v2921 = vld [vmem:[%s9 + $0x48c] sm:$0xff]
  %v2922 = vld [vmem:[%s9 + $0x494] sm:$0xf]
  %v2923 = vld [vmem:[%s9 + $0x498] sm:$0xff]
  %v2924 = vld [vmem:[%s9 + $0x4a0] sm:$0xff]
  %v2925 = vld [vmem:[%s9 + $0x4a8] sm:$0xff]
  %v2926 = vld [vmem:[%s9 + $0x4b0] sm:$0xf]
  %v2927 = vld [vmem:[%s9 + $0x4b4] sm:$0xff]
  %v2928 = vld [vmem:[%s9 + $0x4bc] sm:$0xff]
  %v2929 = vld [vmem:[%s9 + $0x4c4] sm:$0xff]
  %v2930 = vld [vmem:[%s9 + $0x4cc] sm:$0xf]
  %v2931 = vld [vmem:[%s9 + $0x4d0] sm:$0xff]
  %v2932 = vld [vmem:[%s9 + $0x4d8] sm:$0xff]
  %v2933 = vld [vmem:[%s9 + $0x4e0] sm:$0xff]
  %v2934 = vld [vmem:[%s9 + $0x4e8] sm:$0xf]
  %v2935 = vld [vmem:[%s9 + $0x4ec] sm:$0xff]
  %v2936 = vld [vmem:[%s9 + $0x4f4] sm:$0xff]
  %v2937 = vld [vmem:[%s9 + $0x4fc] sm:$0xff]
  %v2938 = vld [vmem:[%s9 + $0x504] sm:$0xf]
  %v2939 = vld [vmem:[%s9 + $0x508] sm:$0xff]
  %v2940 = vld [vmem:[%s9 + $0x510] sm:$0xff]
  %v2941 = vld [vmem:[%s9 + $0x518] sm:$0xff]
  %v2942 = vld [vmem:[%s9 + $0x520] sm:$0xf]
  %v2943 = vld [vmem:[%s9 + $0x524] sm:$0xff]
  %v2944 = vld [vmem:[%s9 + $0x52c] sm:$0xff]
  %v2945 = vld [vmem:[%s9 + $0x534] sm:$0xff]
  %v2946 = vld [vmem:[%s9 + $0x53c] sm:$0xf]
  %v2947 = vld [vmem:[%s9 + $0x540] sm:$0xff]
  %v2948 = vld [vmem:[%s9 + $0x548] sm:$0xff]
  %v2949 = vld [vmem:[%s9 + $0x550] sm:$0xff]
  %v2950 = vld [vmem:[%s9 + $0x558] sm:$0xf]
  %v2951 = vld [vmem:[%s9 + $0x55c] sm:$0xff]
  %v2952 = vld [vmem:[%s9 + $0x564] sm:$0xff]
  %v2953 = vld [vmem:[%s9 + $0x56c] sm:$0xff]
  %v2954 = vld [vmem:[%s9 + $0x574] sm:$0xf]
  %v2955 = vld [vmem:[%s9 + $0x578] sm:$0xff]
  %v2956 = vld [vmem:[%s9 + $0x580] sm:$0xff]
  %v2957 = vld [vmem:[%s9 + $0x588] sm:$0xff]
  %v2958 = vld [vmem:[%s9 + $0x590] sm:$0xf]
  %v2959 = vld [vmem:[%s9 + $0x594] sm:$0xff]
  %v2960 = vld [vmem:[%s9 + $0x59c] sm:$0xff]
  %v2961 = vld [vmem:[%s9 + $0x5a4] sm:$0xff]
  %v2962 = vld [vmem:[%s9 + $0x5ac] sm:$0xf]
  %v2963 = vld [vmem:[%s9 + $0x5b0] sm:$0xff]
  %v2964 = vld [vmem:[%s9 + $0x5b8] sm:$0xff]
  %v2965 = vld [vmem:[%s9 + $0x5c0] sm:$0xff]
  %v2966 = vld [vmem:[%s9 + $0x5c8] sm:$0xf]
  %v2967 = vld [vmem:[%s9 + $0x5cc] sm:$0xff]
  %v2968 = vld [vmem:[%s9 + $0x5d4] sm:$0xff]
  %v2969 = vld [vmem:[%s9 + $0x5dc] sm:$0xff]
  %v2970 = vld [vmem:[%s9 + $0x5e4] sm:$0xf]
  %v2971 = vld [vmem:[%s9 + $0x5e8] sm:$0xff]
  %v2972 = vld [vmem:[%s9 + $0x5f0] sm:$0xff]
  %v2973 = vld [vmem:[%s9 + $0x5f8] sm:$0xff]
  %v2974 = vld [vmem:[%s9 + $0x600] sm:$0xf]
  %v2975 = vld [vmem:[%s9 + $0x604] sm:$0xff]
  %v2976 = vld [vmem:[%s9 + $0x60c] sm:$0xff]
  %v2977 = vld [vmem:[%s9 + $0x614] sm:$0xff]
  %v2978 = vld [vmem:[%s9 + $0x61c] sm:$0xf]
  %v2979 = vld [vmem:[%s9 + $0x620] sm:$0xff]
  %v2980 = vld [vmem:[%s9 + $0x628] sm:$0xff]
  %v2981 = vld [vmem:[%s9 + $0x630] sm:$0xff]
  %v2982 = vld [vmem:[%s9 + $0x638] sm:$0xf]
  %v2983 = vld [vmem:[%s9 + $0x63c] sm:$0xff]
  %v2984 = vld [vmem:[%s9 + $0x644] sm:$0xff]
  %v2985 = vld [vmem:[%s9 + $0x64c] sm:$0xff]
  %v2986 = vld [vmem:[%s9 + $0x654] sm:$0xf]
  %v2987 = vld [vmem:[%s9 + $0x658] sm:$0xff]
  %v2988 = vld [vmem:[%s9 + $0x660] sm:$0xff]
  %v2989 = vld [vmem:[%s9 + $0x668] sm:$0xff]
  %v2990 = vld [vmem:[%s9 + $0x670] sm:$0xf]
  %v2991 = vld [vmem:[%s9 + $0x674] sm:$0xff]
  %v2992 = vld [vmem:[%s9 + $0x67c] sm:$0xff]
  %v2993 = vld [vmem:[%s9 + $0x684] sm:$0xff]
  %v2994 = vld [vmem:[%s9 + $0x68c] sm:$0xf]
  %v2995 = vld [vmem:[%s9 + $0x690] sm:$0xff]
  %v2996 = vld [vmem:[%s9 + $0x698] sm:$0xff]
  %v2997 = vld [vmem:[%s9 + $0x6a0] sm:$0xff]
  %v2998 = vld [vmem:[%s9 + $0x6a8] sm:$0xf]
  %v2999 = vld [vmem:[%s9 + $0x6ac] sm:$0xff]
  %v3000 = vld [vmem:[%s9 + $0x6b4] sm:$0xff]
  %v3001 = vld [vmem:[%s9 + $0x6bc] sm:$0xff]
  %v3002 = vld [vmem:[%s9 + $0x6c4] sm:$0xf]
  %v3003 = vld [vmem:[%s9 + $0x6c8] sm:$0xff]
  %v3004 = vld [vmem:[%s9 + $0x6d0] sm:$0xff]
  %v3005 = vld [vmem:[%s9 + $0x6d8] sm:$0xff]
  %v3006 = vld [vmem:[%s9 + $0x6e0] sm:$0xf]
  %v3007 = vld [vmem:[%s9 + $0x6e4] sm:$0xff]
  %v3008 = vld [vmem:[%s9 + $0x6ec] sm:$0xff]
  %v3009 = vld [vmem:[%s9 + $0x6f4] sm:$0xff]
  %v3010 = vld [vmem:[%s9 + $0x6fc] sm:$0xf]
  %v3011 = vld [vmem:[%s9 + $0x700] sm:$0xff]
  %v3012 = vld [vmem:[%s9 + $0x708] sm:$0xff]
  %v3013 = vld [vmem:[%s9 + $0x710] sm:$0xff]
  %v3014 = vld [vmem:[%s9 + $0x718] sm:$0xf]
  %v3015 = vld [vmem:[%s9 + $0x71c] sm:$0xff]
  %v3016 = vld [vmem:[%s9 + $0x724] sm:$0xff]
  %v3017 = vld [vmem:[%s9 + $0x72c] sm:$0xff]
  %v3018 = vld [vmem:[%s9 + $0x734] sm:$0xf]
  %v3019 = vld [vmem:[%s9 + $0x738] sm:$0xff]
  %v3020 = vld [vmem:[%s9 + $0x740] sm:$0xff]
  %v3021 = vld [vmem:[%s9 + $0x748] sm:$0xff]
  %v3022 = vld [vmem:[%s9 + $0x750] sm:$0xf]
  %v3023 = vld [vmem:[%s9 + $0x754] sm:$0xff]
  %v3024 = vld [vmem:[%s9 + $0x75c] sm:$0xff]
  %v3025 = vld [vmem:[%s9 + $0x764] sm:$0xff]
  %v3026 = vld [vmem:[%s9 + $0x76c] sm:$0xf]
  %v3027 = vld [vmem:[%s9 + $0x770] sm:$0xff]
  %v3028 = vld [vmem:[%s9 + $0x778] sm:$0xff]
  %v3029 = vld [vmem:[%s9 + $0x780] sm:$0xff]
  %v3030 = vld [vmem:[%s9 + $0x788] sm:$0xf]
  %v3031 = vld [vmem:[%s9 + $0x78c] sm:$0xff]
  %v3032 = vld [vmem:[%s9 + $0x794] sm:$0xff]
  %v3033 = vld [vmem:[%s9 + $0x79c] sm:$0xff]
  %v3034 = vld [vmem:[%s9 + $0x7a4] sm:$0xf]
  %v3035 = vld [vmem:[%s9 + $0x7a8] sm:$0xff]
  %v3036 = vld [vmem:[%s9 + $0x7b0] sm:$0xff]
  %v3037 = vld [vmem:[%s9 + $0x7b8] sm:$0xff]
  %v3038 = vld [vmem:[%s9 + $0x7c0] sm:$0xf]
  %v3039 = vld [vmem:[%s9 + $0x7c4] sm:$0xff]
  %v3040 = vld [vmem:[%s9 + $0x7cc] sm:$0xff]
  %v3041 = vld [vmem:[%s9 + $0x7d4] sm:$0xff]
  %v3042 = vld [vmem:[%s9 + $0x7dc] sm:$0xf]
  %v3043 = vld [vmem:[%s9 + $0x7e0] sm:$0xff]
  %v3044 = vld [vmem:[%s9 + $0x7e8] sm:$0xff]
  %v3045 = vld [vmem:[%s9 + $0x7f0] sm:$0xff]
  %v3046 = vld [vmem:[%s9 + $0x7f8] sm:$0xf]
  %v3047 = vld [vmem:[%s9 + $0x7fc] sm:$0xff]
  %v3048 = vld [vmem:[%s9 + $0x804] sm:$0xff]
  %v3049 = vld [vmem:[%s9 + $0x80c] sm:$0xff]
  %v3050 = vld [vmem:[%s9 + $0x814] sm:$0xf]
  %v3051 = vld [vmem:[%s9 + $0x818] sm:$0xff]
  %v3052 = vld [vmem:[%s9 + $0x820] sm:$0xff]
  %v3053 = vld [vmem:[%s9 + $0x828] sm:$0xff]
  %v3054 = vld [vmem:[%s9 + $0x830] sm:$0xf]
  %v3055 = vld [vmem:[%s9 + $0x834] sm:$0xff]
  %v3056 = vld [vmem:[%s9 + $0x83c] sm:$0xff]
  %v3057 = vld [vmem:[%s9 + $0x844] sm:$0xff]
  %v3058 = vld [vmem:[%s9 + $0x84c] sm:$0xf]
  %v3059 = vld [vmem:[%s9 + $0x850] sm:$0xff]
  %v3060 = vld [vmem:[%s9 + $0x858] sm:$0xff]
  %v3061 = vld [vmem:[%s9 + $0x860] sm:$0xff]
  %v3062 = vld [vmem:[%s9 + $0x868] sm:$0xf]
  %v3063 = vld [vmem:[%s9 + $0x86c] sm:$0xff]
  %v3064 = vld [vmem:[%s9 + $0x874] sm:$0xff]
  %v3065 = vld [vmem:[%s9 + $0x87c] sm:$0xff]
  %v3066 = vld [vmem:[%s9 + $0x884] sm:$0xf]
  %v3067 = vld [vmem:[%s9 + $0x888] sm:$0xff]
  %v3068 = vld [vmem:[%s9 + $0x890] sm:$0xff]
  %v3069 = vld [vmem:[%s9 + $0x898] sm:$0xff]
  %v3070 = vld [vmem:[%s9 + $0x8a0] sm:$0xf]
  %v3071 = vld [vmem:[%s9 + $0x8a4] sm:$0xff]
  %v3072 = vld [vmem:[%s9 + $0x8ac] sm:$0xff]
  %v3073 = vld [vmem:[%s9 + $0x8b4] sm:$0xff]
  %v3074 = vld [vmem:[%s9 + $0x8bc] sm:$0xf]
  %v3075 = vld [vmem:[%s9 + $0x8c0] sm:$0xff]
  %v3076 = vld [vmem:[%s9 + $0x8c8] sm:$0xff]
  %v3077 = vld [vmem:[%s9 + $0x8d0] sm:$0xff]
  %v3078 = vld [vmem:[%s9 + $0x8d8] sm:$0xf]
  %v3079 = vld [vmem:[%s9 + $0x8dc] sm:$0xff]
  %v3080 = vld [vmem:[%s9 + $0x8e4] sm:$0xff]
  %v3081 = vld [vmem:[%s9 + $0x8ec] sm:$0xff]
  %v3082 = vld [vmem:[%s9 + $0x8f4] sm:$0xf]
  %v3083 = vld [vmem:[%s9 + $0x8f8] sm:$0xff]
  %v3084 = vld [vmem:[%s9 + $0x900] sm:$0xff]
  %v3085 = vld [vmem:[%s9 + $0x908] sm:$0xff]
  %v3086 = vld [vmem:[%s9 + $0x910] sm:$0xf]
  %v3087 = vld [vmem:[%s9 + $0x914] sm:$0xff]
  %v3088 = vld [vmem:[%s9 + $0x91c] sm:$0xff]
  %v3089 = vld [vmem:[%s9 + $0x924] sm:$0xff]
  %v3090 = vld [vmem:[%s9 + $0x92c] sm:$0xf]
  %v3091 = vld [vmem:[%s9 + $0x930] sm:$0xff]
  %v3092 = vld [vmem:[%s9 + $0x938] sm:$0xff]
  %v3093 = vld [vmem:[%s9 + $0x940] sm:$0xff]
  %v3094 = vld [vmem:[%s9 + $0x948] sm:$0xf]
  %v3095 = vld [vmem:[%s9 + $0x94c] sm:$0xff]
  %v3096 = vld [vmem:[%s9 + $0x954] sm:$0xff]
  %v3097 = vld [vmem:[%s9 + $0x95c] sm:$0xff]
  %v3098 = vld [vmem:[%s9 + $0x964] sm:$0xf]
  %v3099 = vld [vmem:[%s9 + $0x968] sm:$0xff]
  %v3100 = vld [vmem:[%s9 + $0x970] sm:$0xff]
  %v3101 = vld [vmem:[%s9 + $0x978] sm:$0xff]
  %v3102 = vld [vmem:[%s9 + $0x980] sm:$0xf]
  %v3103 = vld [vmem:[%s9 + $0x984] sm:$0xff]
  %v3104 = vld [vmem:[%s9 + $0x98c] sm:$0xff]
  %v3105 = vld [vmem:[%s9 + $0x994] sm:$0xff]
  %v3106 = vld [vmem:[%s9 + $0x99c] sm:$0xf]
  %v3107 = vld [vmem:[%s9 + $0x9a0] sm:$0xff]
  %v3108 = vld [vmem:[%s9 + $0x9a8] sm:$0xff]
  %v3109 = vld [vmem:[%s9 + $0x9b0] sm:$0xff]
  %v3110 = vld [vmem:[%s9 + $0x9b8] sm:$0xf]
  %v3111 = vld [vmem:[%s9 + $0x9bc] sm:$0xff]
  %v3112 = vld [vmem:[%s9 + $0x9c4] sm:$0xff]
  %v3113 = vld [vmem:[%s9 + $0x9cc] sm:$0xff]
  %v3114 = vld [vmem:[%s9 + $0x9d4] sm:$0xf]
  %v3115 = vld [vmem:[%s9 + $0x9d8] sm:$0xff]
  %v3116 = vld [vmem:[%s9 + $0x9e0] sm:$0xff]
  %v3117 = vld [vmem:[%s9 + $0x9e8] sm:$0xff]
  %v3118 = vld [vmem:[%s9 + $0x9f0] sm:$0xf]
  %v3119 = vld [vmem:[%s9 + $0x9f4] sm:$0xff]
  %v3120 = vld [vmem:[%s9 + $0x9fc] sm:$0xff]
  %v3121 = vld [vmem:[%s9 + $0xa04] sm:$0xff]
  %v3122 = vld [vmem:[%s9 + $0xa0c] sm:$0xf]
  %v3123 = vld [vmem:[%s9 + $0xa10] sm:$0xff]
  %v3124 = vld [vmem:[%s9 + $0xa18] sm:$0xff]
  %v3125 = vld [vmem:[%s9 + $0xa20] sm:$0xff]
  %v3126 = vld [vmem:[%s9 + $0xa28] sm:$0xf]
  %v3127 = vld [vmem:[%s9 + $0xa2c] sm:$0xff]
  %v3128 = vld [vmem:[%s9 + $0xa34] sm:$0xff]
  %v3129 = vld [vmem:[%s9 + $0xa3c] sm:$0xff]
  %v3130 = vld [vmem:[%s9 + $0xa44] sm:$0xf]
  %v3131 = vld [vmem:[%s9 + $0xa48] sm:$0xff]
  %v3132 = vld [vmem:[%s9 + $0xa50] sm:$0xff]
  %v3133 = vld [vmem:[%s9 + $0xa58] sm:$0xff]
  %v3134 = vld [vmem:[%s9 + $0xa60] sm:$0xf]
  %v3135 = vld [vmem:[%s9 + $0xa64] sm:$0xff]
  %v3136 = vld [vmem:[%s9 + $0xa6c] sm:$0xff]
  %v3137 = vld [vmem:[%s9 + $0xa74] sm:$0xff]
  %v3138 = vld [vmem:[%s9 + $0xa7c] sm:$0xf]
  %v3139 = vld [vmem:[%s9 + $0xa80] sm:$0xff]
  %v3140 = vld [vmem:[%s9 + $0xa88] sm:$0xff]
  %v3141 = vld [vmem:[%s9 + $0xa90] sm:$0xff]
  %v3142 = vld [vmem:[%s9 + $0xa98] sm:$0xf]
  %v3143 = vld [vmem:[%s9 + $0xa9c] sm:$0xff]
  %v3144 = vld [vmem:[%s9 + $0xaa4] sm:$0xff]
  %v3145 = vld [vmem:[%s9 + $0xaac] sm:$0xff]
  %v3146 = vld [vmem:[%s9 + $0xab4] sm:$0xf]
  %v3147 = vld [vmem:[%s9 + $0xab8] sm:$0xff]
  %v3148 = vld [vmem:[%s9 + $0xac0] sm:$0xff]
  %v3149 = vld [vmem:[%s9 + $0xac8] sm:$0xff]
  %v3150 = vld [vmem:[%s9 + $0xad0] sm:$0xf]
  %v3151 = vld [vmem:[%s9 + $0xad4] sm:$0xff]
  %v3152 = vld [vmem:[%s9 + $0xadc] sm:$0xff]
  %v3153 = vld [vmem:[%s9 + $0xae4] sm:$0xff]
  %v3154 = vld [vmem:[%s9 + $0xaec] sm:$0xf]
  %v3155 = vld [vmem:[%s9 + $0xaf0] sm:$0xff]
  %v3156 = vld [vmem:[%s9 + $0xaf8] sm:$0xff]
  %v3157 = vld [vmem:[%s9 + $0xb00] sm:$0xff]
  %v3158 = vld [vmem:[%s9 + $0xb08] sm:$0xf]
  %v3159 = vld [vmem:[%s9 + $0xb0c] sm:$0xff]
  %v3160 = vld [vmem:[%s9 + $0xb14] sm:$0xff]
  %v3161 = vld [vmem:[%s9 + $0xb1c] sm:$0xff]
  %v3162 = vld [vmem:[%s9 + $0xb24] sm:$0xf]
  %v3163 = vld [vmem:[%s9 + $0xb28] sm:$0xff]
  %v3164 = vld [vmem:[%s9 + $0xb30] sm:$0xff]
  %v3165 = vld [vmem:[%s9 + $0xb38] sm:$0xff]
  %v3166 = vld [vmem:[%s9 + $0xb40] sm:$0xf]
  %v3167 = vld [vmem:[%s9 + $0xb44] sm:$0xff]
  %v3168 = vld [vmem:[%s9 + $0xb4c] sm:$0xff]
  %v3169 = vld [vmem:[%s9 + $0xb54] sm:$0xff]
  %v3170 = vld [vmem:[%s9 + $0xb5c] sm:$0xf]
  %v3171 = vld [vmem:[%s9 + $0xb60] sm:$0xff]
  %v3172 = vld [vmem:[%s9 + $0xb68] sm:$0xff]
  %v3173 = vld [vmem:[%s9 + $0xb70] sm:$0xff]
  %v3174 = vld [vmem:[%s9 + $0xb78] sm:$0xf]
  %v3175 = vld [vmem:[%s9 + $0xb7c] sm:$0xff]
  %v3176 = vld [vmem:[%s9 + $0xb84] sm:$0xff]
  %v3177 = vld [vmem:[%s9 + $0xb8c] sm:$0xff]
  %v3178 = vld [vmem:[%s9 + $0xb94] sm:$0xf]
  %v3179 = vld [vmem:[%s9 + $0xb98] sm:$0xff]
  %v3180 = vld [vmem:[%s9 + $0xba0] sm:$0xff]
  %v3181 = vld [vmem:[%s9 + $0xba8] sm:$0xff]
  %v3182 = vld [vmem:[%s9 + $0xbb0] sm:$0xf]
  %v3183 = vld [vmem:[%s9 + $0xbb4] sm:$0xff]
  %v3184 = vld [vmem:[%s9 + $0xbbc] sm:$0xff]
  %v3185 = vld [vmem:[%s9 + $0xbc4] sm:$0xff]
  %v3186 = vld [vmem:[%s9 + $0xbcc] sm:$0xf]
  %v3187 = vld [vmem:[%s9 + $0xbd0] sm:$0xff]
  %v3188 = vld [vmem:[%s9 + $0xbd8] sm:$0xff]
  %v3189 = vld [vmem:[%s9 + $0xbe0] sm:$0xff]
  %v3190 = vld [vmem:[%s9 + $0xbe8] sm:$0xf]
  %v3191 = vld [vmem:[%s9 + $0xbec] sm:$0xff]
  %v3192 = vld [vmem:[%s9 + $0xbf4] sm:$0xff]
  %v3193 = vld [vmem:[%s9 + $0xbfc] sm:$0xff]
  %v3194 = vld [vmem:[%s9 + $0xc04] sm:$0xf]
  %v3195 = vld [vmem:[%s9 + $0xc08] sm:$0xff]
  %v3196 = vld [vmem:[%s9 + $0xc10] sm:$0xff]
  %v3197 = vld [vmem:[%s9 + $0xc18] sm:$0xff]
  %v3198 = vld [vmem:[%s9 + $0xc20] sm:$0xf]
  %v3199 = vld [vmem:[%s9 + $0xc24] sm:$0xff]
  %v3200 = vld [vmem:[%s9 + $0xc2c] sm:$0xff]
  %v3201 = vld [vmem:[%s9 + $0xc34] sm:$0xff]
  %v3202 = vld [vmem:[%s9 + $0xc3c] sm:$0xf]
  %v3203 = vld [vmem:[%s9 + $0xc40] sm:$0xff]
  %v3204 = vld [vmem:[%s9 + $0xc48] sm:$0xff]
  %v3205 = vld [vmem:[%s9 + $0xc50] sm:$0xff]
  %v3206 = vld [vmem:[%s9 + $0xc58] sm:$0xf]
  %v3207 = vld [vmem:[%s9 + $0xc5c] sm:$0xff]
  %v3208 = vld [vmem:[%s9 + $0xc64] sm:$0xff]
  %v3209 = vld [vmem:[%s9 + $0xc6c] sm:$0xff]
  %v3210 = vld [vmem:[%s9 + $0xc74] sm:$0xf]
  %v3211 = vld [vmem:[%s9 + $0xc78] sm:$0xff]
  %v3212 = vld [vmem:[%s9 + $0xc80] sm:$0xff]
  %v3213 = vld [vmem:[%s9 + $0xc88] sm:$0xff]
  %v3214 = vld [vmem:[%s9 + $0xc90] sm:$0xf]
  %v3215 = vld [vmem:[%s9 + $0xc94] sm:$0xff]
  %v3216 = vld [vmem:[%s9 + $0xc9c] sm:$0xff]
  %v3217 = vld [vmem:[%s9 + $0xca4] sm:$0xff]
  %v3218 = vld [vmem:[%s9 + $0xcac] sm:$0xf]
  %v3219 = vld [vmem:[%s9 + $0xcb0] sm:$0xff]
  %v3220 = vld [vmem:[%s9 + $0xcb8] sm:$0xff]
  %v3221 = vld [vmem:[%s9 + $0xcc0] sm:$0xff]
  %v3222 = vld [vmem:[%s9 + $0xcc8] sm:$0xf]
  %v3223 = vld [vmem:[%s9 + $0xccc] sm:$0xff]
  %v3224 = vld [vmem:[%s9 + $0xcd4] sm:$0xff]
  %v3225 = vld [vmem:[%s9 + $0xcdc] sm:$0xff]
  %v3226 = vld [vmem:[%s9 + $0xce4] sm:$0xf]
  %v3227 = vld [vmem:[%s9 + $0xce8] sm:$0xff]
  %v3228 = vld [vmem:[%s9 + $0xcf0] sm:$0xff]
  %v3229 = vld [vmem:[%s9 + $0xcf8] sm:$0xff]
  %v3230 = vld [vmem:[%s9 + $0xd00] sm:$0xf]
  %v3231 = vld [vmem:[%s9 + $0xd04] sm:$0xff]
  %v3232 = vld [vmem:[%s9 + $0xd0c] sm:$0xff]
  %v3233 = vld [vmem:[%s9 + $0xd14] sm:$0xff]
  %v3234 = vld [vmem:[%s9 + $0xd1c] sm:$0xf]
  %v3235 = vld [vmem:[%s9 + $0xd20] sm:$0xff]
  %v3236 = vld [vmem:[%s9 + $0xd28] sm:$0xff]
  %v3237 = vld [vmem:[%s9 + $0xd30] sm:$0xff]
  %v3238 = vld [vmem:[%s9 + $0xd38] sm:$0xf]
  %v3239 = vld [vmem:[%s9 + $0xd3c] sm:$0xff]
  %v3240 = vld [vmem:[%s9 + $0xd44] sm:$0xff]
  %v3241 = vld [vmem:[%s9 + $0xd4c] sm:$0xff]
  %v3242 = vld [vmem:[%s9 + $0xd54] sm:$0xf]
  %v3243 = vld [vmem:[%s9 + $0xd58] sm:$0xff]
  %v3244 = vld [vmem:[%s9 + $0xd60] sm:$0xff]
  %v3245 = vld [vmem:[%s9 + $0xd68] sm:$0xff]
  %v3246 = vld [vmem:[%s9 + $0xd70] sm:$0xf]
  %v3247 = vld [vmem:[%s9 + $0xd74] sm:$0xff]
  %v3248 = vld [vmem:[%s9 + $0xd7c] sm:$0xff]
  %v3249 = vld [vmem:[%s9 + $0xd84] sm:$0xff]
  %v3250 = vld [vmem:[%s9 + $0xd8c] sm:$0xf]
  %v3251 = vld [vmem:[%s9 + $0xd90] sm:$0xff]
  %v3252 = vld [vmem:[%s9 + $0xd98] sm:$0xff]
  %v3253 = vld [vmem:[%s9 + $0xda0] sm:$0xff]
  %v3254 = vld [vmem:[%s9 + $0xda8] sm:$0xf]
  %v3255 = vld [vmem:[%s9 + $0xdac] sm:$0xff]
  %v3256 = vld [vmem:[%s9 + $0xdb4] sm:$0xff]
  %v3257 = vld [vmem:[%s9 + $0xdbc] sm:$0xff]
  %v3258 = vld [vmem:[%s9 + $0xdc4] sm:$0xf]
  %v3259 = vld [vmem:[%s9 + $0xdc8] sm:$0xff]
  %v3260 = vld [vmem:[%s9 + $0xdd0] sm:$0xff]
  %v3261 = vld [vmem:[%s9 + $0xdd8] sm:$0xff]
  %v3262 = vld [vmem:[%s9 + $0xde0] sm:$0xf]
  %v3263 = vld [vmem:[%s9 + $0xde4] sm:$0xff]
  %v3264 = vld [vmem:[%s9 + $0xdec] sm:$0xff]
  %v3265 = vld [vmem:[%s9 + $0xdf4] sm:$0xff]
  %v3266 = vld [vmem:[%s9 + $0xdfc] sm:$0xf]
  %v3267 = vld [vmem:[%s10] sm:$0x7f]
  %v3269 = vlaneseq
  %v3270 = vshrl.u32 %v3269, 7
  %v3271 = vsub.s32 0, %v3270
  %v3272 = vrot.slane %v3267, %v3271
  %v3273 = vlaneseq
  %v3274 = vshrl.u32 %v3273, 7
  %v3275 = vsub.s32 1, %v3274
  %v3276 = vrot.slane %v3267, %v3275
  %v3277 = vlaneseq
  %v3278 = vshrl.u32 %v3277, 7
  %v3279 = vsub.s32 2, %v3278
  %v3280 = vrot.slane %v3267, %v3279
  %v3281 = vlaneseq
  %v3282 = vshrl.u32 %v3281, 7
  %v3283 = vsub.s32 3, %v3282
  %v3284 = vrot.slane %v3267, %v3283
  %v3285 = vlaneseq
  %v3286 = vshrl.u32 %v3285, 7
  %v3287 = vsub.s32 4, %v3286
  %v3288 = vrot.slane %v3267, %v3287
  %v3289 = vlaneseq
  %v3290 = vshrl.u32 %v3289, 7
  %v3291 = vsub.s32 5, %v3290
  %v3292 = vrot.slane %v3267, %v3291
  %v3293 = vlaneseq
  %v3294 = vshrl.u32 %v3293, 7
  %v3295 = vsub.s32 6, %v3294
  %v3296 = vrot.slane %v3267, %v3295
  %v3816 = vunpack.c.l.b16 %v2755
  %v3817 = vunpack.c.h.b16 %v2755
  %v3818 = vunpack.c.l.b16 %v2756
  %v3819 = vunpack.c.h.b16 %v2756
  %v3820 = vunpack.c.l.b16 %v2757
  %v3821 = vunpack.c.h.b16 %v2757
  %v3822 = vunpack.c.l.b16 %v2758
  %v3823 = vunpack.c.l.b16 %v2759
  %v3824 = vunpack.c.h.b16 %v2759
  %v3825 = vunpack.c.l.b16 %v2760
  %v3826 = vunpack.c.h.b16 %v2760
  %v3827 = vunpack.c.l.b16 %v2761
  %v3828 = vunpack.c.h.b16 %v2761
  %v3829 = vunpack.c.l.b16 %v2762
  %v3830 = vunpack.c.l.b16 %v2763
  %v3831 = vunpack.c.h.b16 %v2763
  %v3832 = vunpack.c.l.b16 %v2764
  %v3833 = vunpack.c.h.b16 %v2764
  %v3834 = vunpack.c.l.b16 %v2765
  %v3835 = vunpack.c.h.b16 %v2765
  %v3836 = vunpack.c.l.b16 %v2766
  %v3837 = vunpack.c.l.b16 %v2767
  %v3838 = vunpack.c.h.b16 %v2767
  %v3839 = vunpack.c.l.b16 %v2768
  %v3840 = vunpack.c.h.b16 %v2768
  %v3841 = vunpack.c.l.b16 %v2769
  %v3842 = vunpack.c.h.b16 %v2769
  %v3843 = vunpack.c.l.b16 %v2770
  %v3844 = vunpack.c.l.b16 %v2771
  %v3845 = vunpack.c.h.b16 %v2771
  %v3846 = vunpack.c.l.b16 %v2772
  %v3847 = vunpack.c.h.b16 %v2772
  %v3848 = vunpack.c.l.b16 %v2773
  %v3849 = vunpack.c.h.b16 %v2773
  %v3850 = vunpack.c.l.b16 %v2774
  %v3851 = vunpack.c.l.b16 %v2775
  %v3852 = vunpack.c.h.b16 %v2775
  %v3853 = vunpack.c.l.b16 %v2776
  %v3854 = vunpack.c.h.b16 %v2776
  %v3855 = vunpack.c.l.b16 %v2777
  %v3856 = vunpack.c.h.b16 %v2777
  %v3857 = vunpack.c.l.b16 %v2778
  %v3858 = vunpack.c.l.b16 %v2779
  %v3859 = vunpack.c.h.b16 %v2779
  %v3860 = vunpack.c.l.b16 %v2780
  %v3861 = vunpack.c.h.b16 %v2780
  %v3862 = vunpack.c.l.b16 %v2781
  %v3863 = vunpack.c.h.b16 %v2781
  %v3864 = vunpack.c.l.b16 %v2782
  %v3865 = vunpack.c.l.b16 %v2783
  %v3866 = vunpack.c.h.b16 %v2783
  %v3867 = vunpack.c.l.b16 %v2784
  %v3868 = vunpack.c.h.b16 %v2784
  %v3869 = vunpack.c.l.b16 %v2785
  %v3870 = vunpack.c.h.b16 %v2785
  %v3871 = vunpack.c.l.b16 %v2786
  %v3872 = vunpack.c.l.b16 %v2787
  %v3873 = vunpack.c.h.b16 %v2787
  %v3874 = vunpack.c.l.b16 %v2788
  %v3875 = vunpack.c.h.b16 %v2788
  %v3876 = vunpack.c.l.b16 %v2789
  %v3877 = vunpack.c.h.b16 %v2789
  %v3878 = vunpack.c.l.b16 %v2790
  %v3879 = vunpack.c.l.b16 %v2791
  %v3880 = vunpack.c.h.b16 %v2791
  %v3881 = vunpack.c.l.b16 %v2792
  %v3882 = vunpack.c.h.b16 %v2792
  %v3883 = vunpack.c.l.b16 %v2793
  %v3884 = vunpack.c.h.b16 %v2793
  %v3885 = vunpack.c.l.b16 %v2794
  %v3886 = vunpack.c.l.b16 %v2795
  %v3887 = vunpack.c.h.b16 %v2795
  %v3888 = vunpack.c.l.b16 %v2796
  %v3889 = vunpack.c.h.b16 %v2796
  %v3890 = vunpack.c.l.b16 %v2797
  %v3891 = vunpack.c.h.b16 %v2797
  %v3892 = vunpack.c.l.b16 %v2798
  %v3893 = vunpack.c.l.b16 %v2799
  %v3894 = vunpack.c.h.b16 %v2799
  %v3895 = vunpack.c.l.b16 %v2800
  %v3896 = vunpack.c.h.b16 %v2800
  %v3897 = vunpack.c.l.b16 %v2801
  %v3898 = vunpack.c.h.b16 %v2801
  %v3899 = vunpack.c.l.b16 %v2802
  %v3900 = vunpack.c.l.b16 %v2803
  %v3901 = vunpack.c.h.b16 %v2803
  %v3902 = vunpack.c.l.b16 %v2804
  %v3903 = vunpack.c.h.b16 %v2804
  %v3904 = vunpack.c.l.b16 %v2805
  %v3905 = vunpack.c.h.b16 %v2805
  %v3906 = vunpack.c.l.b16 %v2806
  %v3907 = vunpack.c.l.b16 %v2807
  %v3908 = vunpack.c.h.b16 %v2807
  %v3909 = vunpack.c.l.b16 %v2808
  %v3910 = vunpack.c.h.b16 %v2808
  %v3911 = vunpack.c.l.b16 %v2809
  %v3912 = vunpack.c.h.b16 %v2809
  %v3913 = vunpack.c.l.b16 %v2810
  %v3914 = vunpack.c.l.b16 %v2811
  %v3915 = vunpack.c.h.b16 %v2811
  %v3916 = vunpack.c.l.b16 %v2812
  %v3917 = vunpack.c.h.b16 %v2812
  %v3918 = vunpack.c.l.b16 %v2813
  %v3919 = vunpack.c.h.b16 %v2813
  %v3920 = vunpack.c.l.b16 %v2814
  %v3921 = vunpack.c.l.b16 %v2815
  %v3922 = vunpack.c.h.b16 %v2815
  %v3923 = vunpack.c.l.b16 %v2816
  %v3924 = vunpack.c.h.b16 %v2816
  %v3925 = vunpack.c.l.b16 %v2817
  %v3926 = vunpack.c.h.b16 %v2817
  %v3927 = vunpack.c.l.b16 %v2818
  %v3928 = vunpack.c.l.b16 %v2819
  %v3929 = vunpack.c.h.b16 %v2819
  %v3930 = vunpack.c.l.b16 %v2820
  %v3931 = vunpack.c.h.b16 %v2820
  %v3932 = vunpack.c.l.b16 %v2821
  %v3933 = vunpack.c.h.b16 %v2821
  %v3934 = vunpack.c.l.b16 %v2822
  %v3935 = vunpack.c.l.b16 %v2823
  %v3936 = vunpack.c.h.b16 %v2823
  %v3937 = vunpack.c.l.b16 %v2824
  %v3938 = vunpack.c.h.b16 %v2824
  %v3939 = vunpack.c.l.b16 %v2825
  %v3940 = vunpack.c.h.b16 %v2825
  %v3941 = vunpack.c.l.b16 %v2826
  %v3942 = vunpack.c.l.b16 %v2827
  %v3943 = vunpack.c.h.b16 %v2827
  %v3944 = vunpack.c.l.b16 %v2828
  %v3945 = vunpack.c.h.b16 %v2828
  %v3946 = vunpack.c.l.b16 %v2829
  %v3947 = vunpack.c.h.b16 %v2829
  %v3948 = vunpack.c.l.b16 %v2830
  %v3949 = vunpack.c.l.b16 %v2831
  %v3950 = vunpack.c.h.b16 %v2831
  %v3951 = vunpack.c.l.b16 %v2832
  %v3952 = vunpack.c.h.b16 %v2832
  %v3953 = vunpack.c.l.b16 %v2833
  %v3954 = vunpack.c.h.b16 %v2833
  %v3955 = vunpack.c.l.b16 %v2834
  %v3956 = vunpack.c.l.b16 %v2835
  %v3957 = vunpack.c.h.b16 %v2835
  %v3958 = vunpack.c.l.b16 %v2836
  %v3959 = vunpack.c.h.b16 %v2836
  %v3960 = vunpack.c.l.b16 %v2837
  %v3961 = vunpack.c.h.b16 %v2837
  %v3962 = vunpack.c.l.b16 %v2838
  %v3963 = vunpack.c.l.b16 %v2839
  %v3964 = vunpack.c.h.b16 %v2839
  %v3965 = vunpack.c.l.b16 %v2840
  %v3966 = vunpack.c.h.b16 %v2840
  %v3967 = vunpack.c.l.b16 %v2841
  %v3968 = vunpack.c.h.b16 %v2841
  %v3969 = vunpack.c.l.b16 %v2842
  %v3970 = vunpack.c.l.b16 %v2843
  %v3971 = vunpack.c.h.b16 %v2843
  %v3972 = vunpack.c.l.b16 %v2844
  %v3973 = vunpack.c.h.b16 %v2844
  %v3974 = vunpack.c.l.b16 %v2845
  %v3975 = vunpack.c.h.b16 %v2845
  %v3976 = vunpack.c.l.b16 %v2846
  %v3977 = vunpack.c.l.b16 %v2847
  %v3978 = vunpack.c.h.b16 %v2847
  %v3979 = vunpack.c.l.b16 %v2848
  %v3980 = vunpack.c.h.b16 %v2848
  %v3981 = vunpack.c.l.b16 %v2849
  %v3982 = vunpack.c.h.b16 %v2849
  %v3983 = vunpack.c.l.b16 %v2850
  %v3984 = vunpack.c.l.b16 %v2851
  %v3985 = vunpack.c.h.b16 %v2851
  %v3986 = vunpack.c.l.b16 %v2852
  %v3987 = vunpack.c.h.b16 %v2852
  %v3988 = vunpack.c.l.b16 %v2853
  %v3989 = vunpack.c.h.b16 %v2853
  %v3990 = vunpack.c.l.b16 %v2854
  %v3991 = vunpack.c.l.b16 %v2855
  %v3992 = vunpack.c.h.b16 %v2855
  %v3993 = vunpack.c.l.b16 %v2856
  %v3994 = vunpack.c.h.b16 %v2856
  %v3995 = vunpack.c.l.b16 %v2857
  %v3996 = vunpack.c.h.b16 %v2857
  %v3997 = vunpack.c.l.b16 %v2858
  %v3998 = vunpack.c.l.b16 %v2859
  %v3999 = vunpack.c.h.b16 %v2859
  %v4000 = vunpack.c.l.b16 %v2860
  %v4001 = vunpack.c.h.b16 %v2860
  %v4002 = vunpack.c.l.b16 %v2861
  %v4003 = vunpack.c.h.b16 %v2861
  %v4004 = vunpack.c.l.b16 %v2862
  %v4005 = vunpack.c.l.b16 %v2863
  %v4006 = vunpack.c.h.b16 %v2863
  %v4007 = vunpack.c.l.b16 %v2864
  %v4008 = vunpack.c.h.b16 %v2864
  %v4009 = vunpack.c.l.b16 %v2865
  %v4010 = vunpack.c.h.b16 %v2865
  %v4011 = vunpack.c.l.b16 %v2866
  %v4012 = vunpack.c.l.b16 %v2867
  %v4013 = vunpack.c.h.b16 %v2867
  %v4014 = vunpack.c.l.b16 %v2868
  %v4015 = vunpack.c.h.b16 %v2868
  %v4016 = vunpack.c.l.b16 %v2869
  %v4017 = vunpack.c.h.b16 %v2869
  %v4018 = vunpack.c.l.b16 %v2870
  %v4019 = vunpack.c.l.b16 %v2871
  %v4020 = vunpack.c.h.b16 %v2871
  %v4021 = vunpack.c.l.b16 %v2872
  %v4022 = vunpack.c.h.b16 %v2872
  %v4023 = vunpack.c.l.b16 %v2873
  %v4024 = vunpack.c.h.b16 %v2873
  %v4025 = vunpack.c.l.b16 %v2874
  %v4026 = vunpack.c.l.b16 %v2875
  %v4027 = vunpack.c.h.b16 %v2875
  %v4028 = vunpack.c.l.b16 %v2876
  %v4029 = vunpack.c.h.b16 %v2876
  %v4030 = vunpack.c.l.b16 %v2877
  %v4031 = vunpack.c.h.b16 %v2877
  %v4032 = vunpack.c.l.b16 %v2878
  %v4033 = vunpack.c.l.b16 %v2879
  %v4034 = vunpack.c.h.b16 %v2879
  %v4035 = vunpack.c.l.b16 %v2880
  %v4036 = vunpack.c.h.b16 %v2880
  %v4037 = vunpack.c.l.b16 %v2881
  %v4038 = vunpack.c.h.b16 %v2881
  %v4039 = vunpack.c.l.b16 %v2882
  %v4040 = vunpack.c.l.b16 %v2883
  %v4041 = vunpack.c.h.b16 %v2883
  %v4042 = vunpack.c.l.b16 %v2884
  %v4043 = vunpack.c.h.b16 %v2884
  %v4044 = vunpack.c.l.b16 %v2885
  %v4045 = vunpack.c.h.b16 %v2885
  %v4046 = vunpack.c.l.b16 %v2886
  %v4047 = vunpack.c.l.b16 %v2887
  %v4048 = vunpack.c.h.b16 %v2887
  %v4049 = vunpack.c.l.b16 %v2888
  %v4050 = vunpack.c.h.b16 %v2888
  %v4051 = vunpack.c.l.b16 %v2889
  %v4052 = vunpack.c.h.b16 %v2889
  %v4053 = vunpack.c.l.b16 %v2890
  %v4054 = vunpack.c.l.b16 %v2891
  %v4055 = vunpack.c.h.b16 %v2891
  %v4056 = vunpack.c.l.b16 %v2892
  %v4057 = vunpack.c.h.b16 %v2892
  %v4058 = vunpack.c.l.b16 %v2893
  %v4059 = vunpack.c.h.b16 %v2893
  %v4060 = vunpack.c.l.b16 %v2894
  %v4061 = vunpack.c.l.b16 %v2895
  %v4062 = vunpack.c.h.b16 %v2895
  %v4063 = vunpack.c.l.b16 %v2896
  %v4064 = vunpack.c.h.b16 %v2896
  %v4065 = vunpack.c.l.b16 %v2897
  %v4066 = vunpack.c.h.b16 %v2897
  %v4067 = vunpack.c.l.b16 %v2898
  %v4068 = vunpack.c.l.b16 %v2899
  %v4069 = vunpack.c.h.b16 %v2899
  %v4070 = vunpack.c.l.b16 %v2900
  %v4071 = vunpack.c.h.b16 %v2900
  %v4072 = vunpack.c.l.b16 %v2901
  %v4073 = vunpack.c.h.b16 %v2901
  %v4074 = vunpack.c.l.b16 %v2902
  %v4075 = vunpack.c.l.b16 %v2903
  %v4076 = vunpack.c.h.b16 %v2903
  %v4077 = vunpack.c.l.b16 %v2904
  %v4078 = vunpack.c.h.b16 %v2904
  %v4079 = vunpack.c.l.b16 %v2905
  %v4080 = vunpack.c.h.b16 %v2905
  %v4081 = vunpack.c.l.b16 %v2906
  %v4082 = vunpack.c.l.b16 %v2907
  %v4083 = vunpack.c.h.b16 %v2907
  %v4084 = vunpack.c.l.b16 %v2908
  %v4085 = vunpack.c.h.b16 %v2908
  %v4086 = vunpack.c.l.b16 %v2909
  %v4087 = vunpack.c.h.b16 %v2909
  %v4088 = vunpack.c.l.b16 %v2910
  %v4089 = vunpack.c.l.b16 %v2911
  %v4090 = vunpack.c.h.b16 %v2911
  %v4091 = vunpack.c.l.b16 %v2912
  %v4092 = vunpack.c.h.b16 %v2912
  %v4093 = vunpack.c.l.b16 %v2913
  %v4094 = vunpack.c.h.b16 %v2913
  %v4095 = vunpack.c.l.b16 %v2914
  %v4096 = vunpack.c.l.b16 %v2915
  %v4097 = vunpack.c.h.b16 %v2915
  %v4098 = vunpack.c.l.b16 %v2916
  %v4099 = vunpack.c.h.b16 %v2916
  %v4100 = vunpack.c.l.b16 %v2917
  %v4101 = vunpack.c.h.b16 %v2917
  %v4102 = vunpack.c.l.b16 %v2918
  %v4103 = vunpack.c.l.b16 %v2919
  %v4104 = vunpack.c.h.b16 %v2919
  %v4105 = vunpack.c.l.b16 %v2920
  %v4106 = vunpack.c.h.b16 %v2920
  %v4107 = vunpack.c.l.b16 %v2921
  %v4108 = vunpack.c.h.b16 %v2921
  %v4109 = vunpack.c.l.b16 %v2922
  %v4110 = vunpack.c.l.b16 %v2923
  %v4111 = vunpack.c.h.b16 %v2923
  %v4112 = vunpack.c.l.b16 %v2924
  %v4113 = vunpack.c.h.b16 %v2924
  %v4114 = vunpack.c.l.b16 %v2925
  %v4115 = vunpack.c.h.b16 %v2925
  %v4116 = vunpack.c.l.b16 %v2926
  %v4117 = vunpack.c.l.b16 %v2927
  %v4118 = vunpack.c.h.b16 %v2927
  %v4119 = vunpack.c.l.b16 %v2928
  %v4120 = vunpack.c.h.b16 %v2928
  %v4121 = vunpack.c.l.b16 %v2929
  %v4122 = vunpack.c.h.b16 %v2929
  %v4123 = vunpack.c.l.b16 %v2930
  %v4124 = vunpack.c.l.b16 %v2931
  %v4125 = vunpack.c.h.b16 %v2931
  %v4126 = vunpack.c.l.b16 %v2932
  %v4127 = vunpack.c.h.b16 %v2932
  %v4128 = vunpack.c.l.b16 %v2933
  %v4129 = vunpack.c.h.b16 %v2933
  %v4130 = vunpack.c.l.b16 %v2934
  %v4131 = vunpack.c.l.b16 %v2935
  %v4132 = vunpack.c.h.b16 %v2935
  %v4133 = vunpack.c.l.b16 %v2936
  %v4134 = vunpack.c.h.b16 %v2936
  %v4135 = vunpack.c.l.b16 %v2937
  %v4136 = vunpack.c.h.b16 %v2937
  %v4137 = vunpack.c.l.b16 %v2938
  %v4138 = vunpack.c.l.b16 %v2939
  %v4139 = vunpack.c.h.b16 %v2939
  %v4140 = vunpack.c.l.b16 %v2940
  %v4141 = vunpack.c.h.b16 %v2940
  %v4142 = vunpack.c.l.b16 %v2941
  %v4143 = vunpack.c.h.b16 %v2941
  %v4144 = vunpack.c.l.b16 %v2942
  %v4145 = vunpack.c.l.b16 %v2943
  %v4146 = vunpack.c.h.b16 %v2943
  %v4147 = vunpack.c.l.b16 %v2944
  %v4148 = vunpack.c.h.b16 %v2944
  %v4149 = vunpack.c.l.b16 %v2945
  %v4150 = vunpack.c.h.b16 %v2945
  %v4151 = vunpack.c.l.b16 %v2946
  %v4152 = vunpack.c.l.b16 %v2947
  %v4153 = vunpack.c.h.b16 %v2947
  %v4154 = vunpack.c.l.b16 %v2948
  %v4155 = vunpack.c.h.b16 %v2948
  %v4156 = vunpack.c.l.b16 %v2949
  %v4157 = vunpack.c.h.b16 %v2949
  %v4158 = vunpack.c.l.b16 %v2950
  %v4159 = vunpack.c.l.b16 %v2951
  %v4160 = vunpack.c.h.b16 %v2951
  %v4161 = vunpack.c.l.b16 %v2952
  %v4162 = vunpack.c.h.b16 %v2952
  %v4163 = vunpack.c.l.b16 %v2953
  %v4164 = vunpack.c.h.b16 %v2953
  %v4165 = vunpack.c.l.b16 %v2954
  %v4166 = vunpack.c.l.b16 %v2955
  %v4167 = vunpack.c.h.b16 %v2955
  %v4168 = vunpack.c.l.b16 %v2956
  %v4169 = vunpack.c.h.b16 %v2956
  %v4170 = vunpack.c.l.b16 %v2957
  %v4171 = vunpack.c.h.b16 %v2957
  %v4172 = vunpack.c.l.b16 %v2958
  %v4173 = vunpack.c.l.b16 %v2959
  %v4174 = vunpack.c.h.b16 %v2959
  %v4175 = vunpack.c.l.b16 %v2960
  %v4176 = vunpack.c.h.b16 %v2960
  %v4177 = vunpack.c.l.b16 %v2961
  %v4178 = vunpack.c.h.b16 %v2961
  %v4179 = vunpack.c.l.b16 %v2962
  %v4180 = vunpack.c.l.b16 %v2963
  %v4181 = vunpack.c.h.b16 %v2963
  %v4182 = vunpack.c.l.b16 %v2964
  %v4183 = vunpack.c.h.b16 %v2964
  %v4184 = vunpack.c.l.b16 %v2965
  %v4185 = vunpack.c.h.b16 %v2965
  %v4186 = vunpack.c.l.b16 %v2966
  %v4187 = vunpack.c.l.b16 %v2967
  %v4188 = vunpack.c.h.b16 %v2967
  %v4189 = vunpack.c.l.b16 %v2968
  %v4190 = vunpack.c.h.b16 %v2968
  %v4191 = vunpack.c.l.b16 %v2969
  %v4192 = vunpack.c.h.b16 %v2969
  %v4193 = vunpack.c.l.b16 %v2970
  %v4194 = vunpack.c.l.b16 %v2971
  %v4195 = vunpack.c.h.b16 %v2971
  %v4196 = vunpack.c.l.b16 %v2972
  %v4197 = vunpack.c.h.b16 %v2972
  %v4198 = vunpack.c.l.b16 %v2973
  %v4199 = vunpack.c.h.b16 %v2973
  %v4200 = vunpack.c.l.b16 %v2974
  %v4201 = vunpack.c.l.b16 %v2975
  %v4202 = vunpack.c.h.b16 %v2975
  %v4203 = vunpack.c.l.b16 %v2976
  %v4204 = vunpack.c.h.b16 %v2976
  %v4205 = vunpack.c.l.b16 %v2977
  %v4206 = vunpack.c.h.b16 %v2977
  %v4207 = vunpack.c.l.b16 %v2978
  %v4208 = vunpack.c.l.b16 %v2979
  %v4209 = vunpack.c.h.b16 %v2979
  %v4210 = vunpack.c.l.b16 %v2980
  %v4211 = vunpack.c.h.b16 %v2980
  %v4212 = vunpack.c.l.b16 %v2981
  %v4213 = vunpack.c.h.b16 %v2981
  %v4214 = vunpack.c.l.b16 %v2982
  %v4215 = vunpack.c.l.b16 %v2983
  %v4216 = vunpack.c.h.b16 %v2983
  %v4217 = vunpack.c.l.b16 %v2984
  %v4218 = vunpack.c.h.b16 %v2984
  %v4219 = vunpack.c.l.b16 %v2985
  %v4220 = vunpack.c.h.b16 %v2985
  %v4221 = vunpack.c.l.b16 %v2986
  %v4222 = vunpack.c.l.b16 %v2987
  %v4223 = vunpack.c.h.b16 %v2987
  %v4224 = vunpack.c.l.b16 %v2988
  %v4225 = vunpack.c.h.b16 %v2988
  %v4226 = vunpack.c.l.b16 %v2989
  %v4227 = vunpack.c.h.b16 %v2989
  %v4228 = vunpack.c.l.b16 %v2990
  %v4229 = vunpack.c.l.b16 %v2991
  %v4230 = vunpack.c.h.b16 %v2991
  %v4231 = vunpack.c.l.b16 %v2992
  %v4232 = vunpack.c.h.b16 %v2992
  %v4233 = vunpack.c.l.b16 %v2993
  %v4234 = vunpack.c.h.b16 %v2993
  %v4235 = vunpack.c.l.b16 %v2994
  %v4236 = vunpack.c.l.b16 %v2995
  %v4237 = vunpack.c.h.b16 %v2995
  %v4238 = vunpack.c.l.b16 %v2996
  %v4239 = vunpack.c.h.b16 %v2996
  %v4240 = vunpack.c.l.b16 %v2997
  %v4241 = vunpack.c.h.b16 %v2997
  %v4242 = vunpack.c.l.b16 %v2998
  %v4243 = vunpack.c.l.b16 %v2999
  %v4244 = vunpack.c.h.b16 %v2999
  %v4245 = vunpack.c.l.b16 %v3000
  %v4246 = vunpack.c.h.b16 %v3000
  %v4247 = vunpack.c.l.b16 %v3001
  %v4248 = vunpack.c.h.b16 %v3001
  %v4249 = vunpack.c.l.b16 %v3002
  %v4250 = vunpack.c.l.b16 %v3003
  %v4251 = vunpack.c.h.b16 %v3003
  %v4252 = vunpack.c.l.b16 %v3004
  %v4253 = vunpack.c.h.b16 %v3004
  %v4254 = vunpack.c.l.b16 %v3005
  %v4255 = vunpack.c.h.b16 %v3005
  %v4256 = vunpack.c.l.b16 %v3006
  %v4257 = vunpack.c.l.b16 %v3007
  %v4258 = vunpack.c.h.b16 %v3007
  %v4259 = vunpack.c.l.b16 %v3008
  %v4260 = vunpack.c.h.b16 %v3008
  %v4261 = vunpack.c.l.b16 %v3009
  %v4262 = vunpack.c.h.b16 %v3009
  %v4263 = vunpack.c.l.b16 %v3010
  %v4264 = vunpack.c.l.b16 %v3011
  %v4265 = vunpack.c.h.b16 %v3011
  %v4266 = vunpack.c.l.b16 %v3012
  %v4267 = vunpack.c.h.b16 %v3012
  %v4268 = vunpack.c.l.b16 %v3013
  %v4269 = vunpack.c.h.b16 %v3013
  %v4270 = vunpack.c.l.b16 %v3014
  %v4271 = vunpack.c.l.b16 %v3015
  %v4272 = vunpack.c.h.b16 %v3015
  %v4273 = vunpack.c.l.b16 %v3016
  %v4274 = vunpack.c.h.b16 %v3016
  %v4275 = vunpack.c.l.b16 %v3017
  %v4276 = vunpack.c.h.b16 %v3017
  %v4277 = vunpack.c.l.b16 %v3018
  %v4278 = vunpack.c.l.b16 %v3019
  %v4279 = vunpack.c.h.b16 %v3019
  %v4280 = vunpack.c.l.b16 %v3020
  %v4281 = vunpack.c.h.b16 %v3020
  %v4282 = vunpack.c.l.b16 %v3021
  %v4283 = vunpack.c.h.b16 %v3021
  %v4284 = vunpack.c.l.b16 %v3022
  %v4285 = vunpack.c.l.b16 %v3023
  %v4286 = vunpack.c.h.b16 %v3023
  %v4287 = vunpack.c.l.b16 %v3024
  %v4288 = vunpack.c.h.b16 %v3024
  %v4289 = vunpack.c.l.b16 %v3025
  %v4290 = vunpack.c.h.b16 %v3025
  %v4291 = vunpack.c.l.b16 %v3026
  %v4292 = vunpack.c.l.b16 %v3027
  %v4293 = vunpack.c.h.b16 %v3027
  %v4294 = vunpack.c.l.b16 %v3028
  %v4295 = vunpack.c.h.b16 %v3028
  %v4296 = vunpack.c.l.b16 %v3029
  %v4297 = vunpack.c.h.b16 %v3029
  %v4298 = vunpack.c.l.b16 %v3030
  %v4299 = vunpack.c.l.b16 %v3031
  %v4300 = vunpack.c.h.b16 %v3031
  %v4301 = vunpack.c.l.b16 %v3032
  %v4302 = vunpack.c.h.b16 %v3032
  %v4303 = vunpack.c.l.b16 %v3033
  %v4304 = vunpack.c.h.b16 %v3033
  %v4305 = vunpack.c.l.b16 %v3034
  %v4306 = vunpack.c.l.b16 %v3035
  %v4307 = vunpack.c.h.b16 %v3035
  %v4308 = vunpack.c.l.b16 %v3036
  %v4309 = vunpack.c.h.b16 %v3036
  %v4310 = vunpack.c.l.b16 %v3037
  %v4311 = vunpack.c.h.b16 %v3037
  %v4312 = vunpack.c.l.b16 %v3038
  %v4313 = vunpack.c.l.b16 %v3039
  %v4314 = vunpack.c.h.b16 %v3039
  %v4315 = vunpack.c.l.b16 %v3040
  %v4316 = vunpack.c.h.b16 %v3040
  %v4317 = vunpack.c.l.b16 %v3041
  %v4318 = vunpack.c.h.b16 %v3041
  %v4319 = vunpack.c.l.b16 %v3042
  %v4320 = vunpack.c.l.b16 %v3043
  %v4321 = vunpack.c.h.b16 %v3043
  %v4322 = vunpack.c.l.b16 %v3044
  %v4323 = vunpack.c.h.b16 %v3044
  %v4324 = vunpack.c.l.b16 %v3045
  %v4325 = vunpack.c.h.b16 %v3045
  %v4326 = vunpack.c.l.b16 %v3046
  %v4327 = vunpack.c.l.b16 %v3047
  %v4328 = vunpack.c.h.b16 %v3047
  %v4329 = vunpack.c.l.b16 %v3048
  %v4330 = vunpack.c.h.b16 %v3048
  %v4331 = vunpack.c.l.b16 %v3049
  %v4332 = vunpack.c.h.b16 %v3049
  %v4333 = vunpack.c.l.b16 %v3050
  %v4334 = vunpack.c.l.b16 %v3051
  %v4335 = vunpack.c.h.b16 %v3051
  %v4336 = vunpack.c.l.b16 %v3052
  %v4337 = vunpack.c.h.b16 %v3052
  %v4338 = vunpack.c.l.b16 %v3053
  %v4339 = vunpack.c.h.b16 %v3053
  %v4340 = vunpack.c.l.b16 %v3054
  %v4341 = vunpack.c.l.b16 %v3055
  %v4342 = vunpack.c.h.b16 %v3055
  %v4343 = vunpack.c.l.b16 %v3056
  %v4344 = vunpack.c.h.b16 %v3056
  %v4345 = vunpack.c.l.b16 %v3057
  %v4346 = vunpack.c.h.b16 %v3057
  %v4347 = vunpack.c.l.b16 %v3058
  %v4348 = vunpack.c.l.b16 %v3059
  %v4349 = vunpack.c.h.b16 %v3059
  %v4350 = vunpack.c.l.b16 %v3060
  %v4351 = vunpack.c.h.b16 %v3060
  %v4352 = vunpack.c.l.b16 %v3061
  %v4353 = vunpack.c.h.b16 %v3061
  %v4354 = vunpack.c.l.b16 %v3062
  %v4355 = vunpack.c.l.b16 %v3063
  %v4356 = vunpack.c.h.b16 %v3063
  %v4357 = vunpack.c.l.b16 %v3064
  %v4358 = vunpack.c.h.b16 %v3064
  %v4359 = vunpack.c.l.b16 %v3065
  %v4360 = vunpack.c.h.b16 %v3065
  %v4361 = vunpack.c.l.b16 %v3066
  %v4362 = vunpack.c.l.b16 %v3067
  %v4363 = vunpack.c.h.b16 %v3067
  %v4364 = vunpack.c.l.b16 %v3068
  %v4365 = vunpack.c.h.b16 %v3068
  %v4366 = vunpack.c.l.b16 %v3069
  %v4367 = vunpack.c.h.b16 %v3069
  %v4368 = vunpack.c.l.b16 %v3070
  %v4369 = vunpack.c.l.b16 %v3071
  %v4370 = vunpack.c.h.b16 %v3071
  %v4371 = vunpack.c.l.b16 %v3072
  %v4372 = vunpack.c.h.b16 %v3072
  %v4373 = vunpack.c.l.b16 %v3073
  %v4374 = vunpack.c.h.b16 %v3073
  %v4375 = vunpack.c.l.b16 %v3074
  %v4376 = vunpack.c.l.b16 %v3075
  %v4377 = vunpack.c.h.b16 %v3075
  %v4378 = vunpack.c.l.b16 %v3076
  %v4379 = vunpack.c.h.b16 %v3076
  %v4380 = vunpack.c.l.b16 %v3077
  %v4381 = vunpack.c.h.b16 %v3077
  %v4382 = vunpack.c.l.b16 %v3078
  %v4383 = vunpack.c.l.b16 %v3079
  %v4384 = vunpack.c.h.b16 %v3079
  %v4385 = vunpack.c.l.b16 %v3080
  %v4386 = vunpack.c.h.b16 %v3080
  %v4387 = vunpack.c.l.b16 %v3081
  %v4388 = vunpack.c.h.b16 %v3081
  %v4389 = vunpack.c.l.b16 %v3082
  %v4390 = vunpack.c.l.b16 %v3083
  %v4391 = vunpack.c.h.b16 %v3083
  %v4392 = vunpack.c.l.b16 %v3084
  %v4393 = vunpack.c.h.b16 %v3084
  %v4394 = vunpack.c.l.b16 %v3085
  %v4395 = vunpack.c.h.b16 %v3085
  %v4396 = vunpack.c.l.b16 %v3086
  %v4397 = vunpack.c.l.b16 %v3087
  %v4398 = vunpack.c.h.b16 %v3087
  %v4399 = vunpack.c.l.b16 %v3088
  %v4400 = vunpack.c.h.b16 %v3088
  %v4401 = vunpack.c.l.b16 %v3089
  %v4402 = vunpack.c.h.b16 %v3089
  %v4403 = vunpack.c.l.b16 %v3090
  %v4404 = vunpack.c.l.b16 %v3091
  %v4405 = vunpack.c.h.b16 %v3091
  %v4406 = vunpack.c.l.b16 %v3092
  %v4407 = vunpack.c.h.b16 %v3092
  %v4408 = vunpack.c.l.b16 %v3093
  %v4409 = vunpack.c.h.b16 %v3093
  %v4410 = vunpack.c.l.b16 %v3094
  %v4411 = vunpack.c.l.b16 %v3095
  %v4412 = vunpack.c.h.b16 %v3095
  %v4413 = vunpack.c.l.b16 %v3096
  %v4414 = vunpack.c.h.b16 %v3096
  %v4415 = vunpack.c.l.b16 %v3097
  %v4416 = vunpack.c.h.b16 %v3097
  %v4417 = vunpack.c.l.b16 %v3098
  %v4418 = vunpack.c.l.b16 %v3099
  %v4419 = vunpack.c.h.b16 %v3099
  %v4420 = vunpack.c.l.b16 %v3100
  %v4421 = vunpack.c.h.b16 %v3100
  %v4422 = vunpack.c.l.b16 %v3101
  %v4423 = vunpack.c.h.b16 %v3101
  %v4424 = vunpack.c.l.b16 %v3102
  %v4425 = vunpack.c.l.b16 %v3103
  %v4426 = vunpack.c.h.b16 %v3103
  %v4427 = vunpack.c.l.b16 %v3104
  %v4428 = vunpack.c.h.b16 %v3104
  %v4429 = vunpack.c.l.b16 %v3105
  %v4430 = vunpack.c.h.b16 %v3105
  %v4431 = vunpack.c.l.b16 %v3106
  %v4432 = vunpack.c.l.b16 %v3107
  %v4433 = vunpack.c.h.b16 %v3107
  %v4434 = vunpack.c.l.b16 %v3108
  %v4435 = vunpack.c.h.b16 %v3108
  %v4436 = vunpack.c.l.b16 %v3109
  %v4437 = vunpack.c.h.b16 %v3109
  %v4438 = vunpack.c.l.b16 %v3110
  %v4439 = vunpack.c.l.b16 %v3111
  %v4440 = vunpack.c.h.b16 %v3111
  %v4441 = vunpack.c.l.b16 %v3112
  %v4442 = vunpack.c.h.b16 %v3112
  %v4443 = vunpack.c.l.b16 %v3113
  %v4444 = vunpack.c.h.b16 %v3113
  %v4445 = vunpack.c.l.b16 %v3114
  %v4446 = vunpack.c.l.b16 %v3115
  %v4447 = vunpack.c.h.b16 %v3115
  %v4448 = vunpack.c.l.b16 %v3116
  %v4449 = vunpack.c.h.b16 %v3116
  %v4450 = vunpack.c.l.b16 %v3117
  %v4451 = vunpack.c.h.b16 %v3117
  %v4452 = vunpack.c.l.b16 %v3118
  %v4453 = vunpack.c.l.b16 %v3119
  %v4454 = vunpack.c.h.b16 %v3119
  %v4455 = vunpack.c.l.b16 %v3120
  %v4456 = vunpack.c.h.b16 %v3120
  %v4457 = vunpack.c.l.b16 %v3121
  %v4458 = vunpack.c.h.b16 %v3121
  %v4459 = vunpack.c.l.b16 %v3122
  %v4460 = vunpack.c.l.b16 %v3123
  %v4461 = vunpack.c.h.b16 %v3123
  %v4462 = vunpack.c.l.b16 %v3124
  %v4463 = vunpack.c.h.b16 %v3124
  %v4464 = vunpack.c.l.b16 %v3125
  %v4465 = vunpack.c.h.b16 %v3125
  %v4466 = vunpack.c.l.b16 %v3126
  %v4467 = vunpack.c.l.b16 %v3127
  %v4468 = vunpack.c.h.b16 %v3127
  %v4469 = vunpack.c.l.b16 %v3128
  %v4470 = vunpack.c.h.b16 %v3128
  %v4471 = vunpack.c.l.b16 %v3129
  %v4472 = vunpack.c.h.b16 %v3129
  %v4473 = vunpack.c.l.b16 %v3130
  %v4474 = vunpack.c.l.b16 %v3131
  %v4475 = vunpack.c.h.b16 %v3131
  %v4476 = vunpack.c.l.b16 %v3132
  %v4477 = vunpack.c.h.b16 %v3132
  %v4478 = vunpack.c.l.b16 %v3133
  %v4479 = vunpack.c.h.b16 %v3133
  %v4480 = vunpack.c.l.b16 %v3134
  %v4481 = vunpack.c.l.b16 %v3135
  %v4482 = vunpack.c.h.b16 %v3135
  %v4483 = vunpack.c.l.b16 %v3136
  %v4484 = vunpack.c.h.b16 %v3136
  %v4485 = vunpack.c.l.b16 %v3137
  %v4486 = vunpack.c.h.b16 %v3137
  %v4487 = vunpack.c.l.b16 %v3138
  %v4488 = vunpack.c.l.b16 %v3139
  %v4489 = vunpack.c.h.b16 %v3139
  %v4490 = vunpack.c.l.b16 %v3140
  %v4491 = vunpack.c.h.b16 %v3140
  %v4492 = vunpack.c.l.b16 %v3141
  %v4493 = vunpack.c.h.b16 %v3141
  %v4494 = vunpack.c.l.b16 %v3142
  %v4495 = vunpack.c.l.b16 %v3143
  %v4496 = vunpack.c.h.b16 %v3143
  %v4497 = vunpack.c.l.b16 %v3144
  %v4498 = vunpack.c.h.b16 %v3144
  %v4499 = vunpack.c.l.b16 %v3145
  %v4500 = vunpack.c.h.b16 %v3145
  %v4501 = vunpack.c.l.b16 %v3146
  %v4502 = vunpack.c.l.b16 %v3147
  %v4503 = vunpack.c.h.b16 %v3147
  %v4504 = vunpack.c.l.b16 %v3148
  %v4505 = vunpack.c.h.b16 %v3148
  %v4506 = vunpack.c.l.b16 %v3149
  %v4507 = vunpack.c.h.b16 %v3149
  %v4508 = vunpack.c.l.b16 %v3150
  %v4509 = vunpack.c.l.b16 %v3151
  %v4510 = vunpack.c.h.b16 %v3151
  %v4511 = vunpack.c.l.b16 %v3152
  %v4512 = vunpack.c.h.b16 %v3152
  %v4513 = vunpack.c.l.b16 %v3153
  %v4514 = vunpack.c.h.b16 %v3153
  %v4515 = vunpack.c.l.b16 %v3154
  %v4516 = vunpack.c.l.b16 %v3155
  %v4517 = vunpack.c.h.b16 %v3155
  %v4518 = vunpack.c.l.b16 %v3156
  %v4519 = vunpack.c.h.b16 %v3156
  %v4520 = vunpack.c.l.b16 %v3157
  %v4521 = vunpack.c.h.b16 %v3157
  %v4522 = vunpack.c.l.b16 %v3158
  %v4523 = vunpack.c.l.b16 %v3159
  %v4524 = vunpack.c.h.b16 %v3159
  %v4525 = vunpack.c.l.b16 %v3160
  %v4526 = vunpack.c.h.b16 %v3160
  %v4527 = vunpack.c.l.b16 %v3161
  %v4528 = vunpack.c.h.b16 %v3161
  %v4529 = vunpack.c.l.b16 %v3162
  %v4530 = vunpack.c.l.b16 %v3163
  %v4531 = vunpack.c.h.b16 %v3163
  %v4532 = vunpack.c.l.b16 %v3164
  %v4533 = vunpack.c.h.b16 %v3164
  %v4534 = vunpack.c.l.b16 %v3165
  %v4535 = vunpack.c.h.b16 %v3165
  %v4536 = vunpack.c.l.b16 %v3166
  %v4537 = vunpack.c.l.b16 %v3167
  %v4538 = vunpack.c.h.b16 %v3167
  %v4539 = vunpack.c.l.b16 %v3168
  %v4540 = vunpack.c.h.b16 %v3168
  %v4541 = vunpack.c.l.b16 %v3169
  %v4542 = vunpack.c.h.b16 %v3169
  %v4543 = vunpack.c.l.b16 %v3170
  %v4544 = vunpack.c.l.b16 %v3171
  %v4545 = vunpack.c.h.b16 %v3171
  %v4546 = vunpack.c.l.b16 %v3172
  %v4547 = vunpack.c.h.b16 %v3172
  %v4548 = vunpack.c.l.b16 %v3173
  %v4549 = vunpack.c.h.b16 %v3173
  %v4550 = vunpack.c.l.b16 %v3174
  %v4551 = vunpack.c.l.b16 %v3175
  %v4552 = vunpack.c.h.b16 %v3175
  %v4553 = vunpack.c.l.b16 %v3176
  %v4554 = vunpack.c.h.b16 %v3176
  %v4555 = vunpack.c.l.b16 %v3177
  %v4556 = vunpack.c.h.b16 %v3177
  %v4557 = vunpack.c.l.b16 %v3178
  %v4558 = vunpack.c.l.b16 %v3179
  %v4559 = vunpack.c.h.b16 %v3179
  %v4560 = vunpack.c.l.b16 %v3180
  %v4561 = vunpack.c.h.b16 %v3180
  %v4562 = vunpack.c.l.b16 %v3181
  %v4563 = vunpack.c.h.b16 %v3181
  %v4564 = vunpack.c.l.b16 %v3182
  %v4565 = vunpack.c.l.b16 %v3183
  %v4566 = vunpack.c.h.b16 %v3183
  %v4567 = vunpack.c.l.b16 %v3184
  %v4568 = vunpack.c.h.b16 %v3184
  %v4569 = vunpack.c.l.b16 %v3185
  %v4570 = vunpack.c.h.b16 %v3185
  %v4571 = vunpack.c.l.b16 %v3186
  %v4572 = vunpack.c.l.b16 %v3187
  %v4573 = vunpack.c.h.b16 %v3187
  %v4574 = vunpack.c.l.b16 %v3188
  %v4575 = vunpack.c.h.b16 %v3188
  %v4576 = vunpack.c.l.b16 %v3189
  %v4577 = vunpack.c.h.b16 %v3189
  %v4578 = vunpack.c.l.b16 %v3190
  %v4579 = vunpack.c.l.b16 %v3191
  %v4580 = vunpack.c.h.b16 %v3191
  %v4581 = vunpack.c.l.b16 %v3192
  %v4582 = vunpack.c.h.b16 %v3192
  %v4583 = vunpack.c.l.b16 %v3193
  %v4584 = vunpack.c.h.b16 %v3193
  %v4585 = vunpack.c.l.b16 %v3194
  %v4586 = vunpack.c.l.b16 %v3195
  %v4587 = vunpack.c.h.b16 %v3195
  %v4588 = vunpack.c.l.b16 %v3196
  %v4589 = vunpack.c.h.b16 %v3196
  %v4590 = vunpack.c.l.b16 %v3197
  %v4591 = vunpack.c.h.b16 %v3197
  %v4592 = vunpack.c.l.b16 %v3198
  %v4593 = vunpack.c.l.b16 %v3199
  %v4594 = vunpack.c.h.b16 %v3199
  %v4595 = vunpack.c.l.b16 %v3200
  %v4596 = vunpack.c.h.b16 %v3200
  %v4597 = vunpack.c.l.b16 %v3201
  %v4598 = vunpack.c.h.b16 %v3201
  %v4599 = vunpack.c.l.b16 %v3202
  %v4600 = vunpack.c.l.b16 %v3203
  %v4601 = vunpack.c.h.b16 %v3203
  %v4602 = vunpack.c.l.b16 %v3204
  %v4603 = vunpack.c.h.b16 %v3204
  %v4604 = vunpack.c.l.b16 %v3205
  %v4605 = vunpack.c.h.b16 %v3205
  %v4606 = vunpack.c.l.b16 %v3206
  %v4607 = vunpack.c.l.b16 %v3207
  %v4608 = vunpack.c.h.b16 %v3207
  %v4609 = vunpack.c.l.b16 %v3208
  %v4610 = vunpack.c.h.b16 %v3208
  %v4611 = vunpack.c.l.b16 %v3209
  %v4612 = vunpack.c.h.b16 %v3209
  %v4613 = vunpack.c.l.b16 %v3210
  %v4614 = vunpack.c.l.b16 %v3211
  %v4615 = vunpack.c.h.b16 %v3211
  %v4616 = vunpack.c.l.b16 %v3212
  %v4617 = vunpack.c.h.b16 %v3212
  %v4618 = vunpack.c.l.b16 %v3213
  %v4619 = vunpack.c.h.b16 %v3213
  %v4620 = vunpack.c.l.b16 %v3214
  %v4621 = vunpack.c.l.b16 %v3215
  %v4622 = vunpack.c.h.b16 %v3215
  %v4623 = vunpack.c.l.b16 %v3216
  %v4624 = vunpack.c.h.b16 %v3216
  %v4625 = vunpack.c.l.b16 %v3217
  %v4626 = vunpack.c.h.b16 %v3217
  %v4627 = vunpack.c.l.b16 %v3218
  %v4628 = vunpack.c.l.b16 %v3219
  %v4629 = vunpack.c.h.b16 %v3219
  %v4630 = vunpack.c.l.b16 %v3220
  %v4631 = vunpack.c.h.b16 %v3220
  %v4632 = vunpack.c.l.b16 %v3221
  %v4633 = vunpack.c.h.b16 %v3221
  %v4634 = vunpack.c.l.b16 %v3222
  %v4635 = vunpack.c.l.b16 %v3223
  %v4636 = vunpack.c.h.b16 %v3223
  %v4637 = vunpack.c.l.b16 %v3224
  %v4638 = vunpack.c.h.b16 %v3224
  %v4639 = vunpack.c.l.b16 %v3225
  %v4640 = vunpack.c.h.b16 %v3225
  %v4641 = vunpack.c.l.b16 %v3226
  %v4642 = vunpack.c.l.b16 %v3227
  %v4643 = vunpack.c.h.b16 %v3227
  %v4644 = vunpack.c.l.b16 %v3228
  %v4645 = vunpack.c.h.b16 %v3228
  %v4646 = vunpack.c.l.b16 %v3229
  %v4647 = vunpack.c.h.b16 %v3229
  %v4648 = vunpack.c.l.b16 %v3230
  %v4649 = vunpack.c.l.b16 %v3231
  %v4650 = vunpack.c.h.b16 %v3231
  %v4651 = vunpack.c.l.b16 %v3232
  %v4652 = vunpack.c.h.b16 %v3232
  %v4653 = vunpack.c.l.b16 %v3233
  %v4654 = vunpack.c.h.b16 %v3233
  %v4655 = vunpack.c.l.b16 %v3234
  %v4656 = vunpack.c.l.b16 %v3235
  %v4657 = vunpack.c.h.b16 %v3235
  %v4658 = vunpack.c.l.b16 %v3236
  %v4659 = vunpack.c.h.b16 %v3236
  %v4660 = vunpack.c.l.b16 %v3237
  %v4661 = vunpack.c.h.b16 %v3237
  %v4662 = vunpack.c.l.b16 %v3238
  %v4663 = vunpack.c.l.b16 %v3239
  %v4664 = vunpack.c.h.b16 %v3239
  %v4665 = vunpack.c.l.b16 %v3240
  %v4666 = vunpack.c.h.b16 %v3240
  %v4667 = vunpack.c.l.b16 %v3241
  %v4668 = vunpack.c.h.b16 %v3241
  %v4669 = vunpack.c.l.b16 %v3242
  %v4670 = vunpack.c.l.b16 %v3243
  %v4671 = vunpack.c.h.b16 %v3243
  %v4672 = vunpack.c.l.b16 %v3244
  %v4673 = vunpack.c.h.b16 %v3244
  %v4674 = vunpack.c.l.b16 %v3245
  %v4675 = vunpack.c.h.b16 %v3245
  %v4676 = vunpack.c.l.b16 %v3246
  %v4677 = vunpack.c.l.b16 %v3247
  %v4678 = vunpack.c.h.b16 %v3247
  %v4679 = vunpack.c.l.b16 %v3248
  %v4680 = vunpack.c.h.b16 %v3248
  %v4681 = vunpack.c.l.b16 %v3249
  %v4682 = vunpack.c.h.b16 %v3249
  %v4683 = vunpack.c.l.b16 %v3250
  %v4684 = vunpack.c.l.b16 %v3251
  %v4685 = vunpack.c.h.b16 %v3251
  %v4686 = vunpack.c.l.b16 %v3252
  %v4687 = vunpack.c.h.b16 %v3252
  %v4688 = vunpack.c.l.b16 %v3253
  %v4689 = vunpack.c.h.b16 %v3253
  %v4690 = vunpack.c.l.b16 %v3254
  %v4691 = vunpack.c.l.b16 %v3255
  %v4692 = vunpack.c.h.b16 %v3255
  %v4693 = vunpack.c.l.b16 %v3256
  %v4694 = vunpack.c.h.b16 %v3256
  %v4695 = vunpack.c.l.b16 %v3257
  %v4696 = vunpack.c.h.b16 %v3257
  %v4697 = vunpack.c.l.b16 %v3258
  %v4698 = vunpack.c.l.b16 %v3259
  %v4699 = vunpack.c.h.b16 %v3259
  %v4700 = vunpack.c.l.b16 %v3260
  %v4701 = vunpack.c.h.b16 %v3260
  %v4702 = vunpack.c.l.b16 %v3261
  %v4703 = vunpack.c.h.b16 %v3261
  %v4704 = vunpack.c.l.b16 %v3262
  %v4705 = vunpack.c.l.b16 %v3263
  %v4706 = vunpack.c.h.b16 %v3263
  %v4707 = vunpack.c.l.b16 %v3264
  %v4708 = vunpack.c.h.b16 %v3264
  %v4709 = vunpack.c.l.b16 %v3265
  %v4710 = vunpack.c.h.b16 %v3265
  %v4711 = vunpack.c.l.b16 %v3266
  %v4712 = vpack.c.b16 %v3823, %v3816
  %v4713 = vpack.c.b16 %v3824, %v3817
  %v4714 = vpack.c.b16 %v3825, %v3818
  %v4715 = vpack.c.b16 %v3826, %v3819
  %v4716 = vpack.c.b16 %v3827, %v3820
  %v4717 = vpack.c.b16 %v3828, %v3821
  %v4718 = vpack.c.b16 %v3829, %v3822
  %v4719 = vpack.c.b16 %v3837, %v3830
  %v4720 = vpack.c.b16 %v3838, %v3831
  %v4721 = vpack.c.b16 %v3839, %v3832
  %v4722 = vpack.c.b16 %v3840, %v3833
  %v4723 = vpack.c.b16 %v3841, %v3834
  %v4724 = vpack.c.b16 %v3842, %v3835
  %v4725 = vpack.c.b16 %v3843, %v3836
  %v4726 = vpack.c.b16 %v3851, %v3844
  %v4727 = vpack.c.b16 %v3852, %v3845
  %v4728 = vpack.c.b16 %v3853, %v3846
  %v4729 = vpack.c.b16 %v3854, %v3847
  %v4730 = vpack.c.b16 %v3855, %v3848
  %v4731 = vpack.c.b16 %v3856, %v3849
  %v4732 = vpack.c.b16 %v3857, %v3850
  %v4733 = vpack.c.b16 %v3865, %v3858
  %v4734 = vpack.c.b16 %v3866, %v3859
  %v4735 = vpack.c.b16 %v3867, %v3860
  %v4736 = vpack.c.b16 %v3868, %v3861
  %v4737 = vpack.c.b16 %v3869, %v3862
  %v4738 = vpack.c.b16 %v3870, %v3863
  %v4739 = vpack.c.b16 %v3871, %v3864
  %v4740 = vpack.c.b16 %v3879, %v3872
  %v4741 = vpack.c.b16 %v3880, %v3873
  %v4742 = vpack.c.b16 %v3881, %v3874
  %v4743 = vpack.c.b16 %v3882, %v3875
  %v4744 = vpack.c.b16 %v3883, %v3876
  %v4745 = vpack.c.b16 %v3884, %v3877
  %v4746 = vpack.c.b16 %v3885, %v3878
  %v4747 = vpack.c.b16 %v3893, %v3886
  %v4748 = vpack.c.b16 %v3894, %v3887
  %v4749 = vpack.c.b16 %v3895, %v3888
  %v4750 = vpack.c.b16 %v3896, %v3889
  %v4751 = vpack.c.b16 %v3897, %v3890
  %v4752 = vpack.c.b16 %v3898, %v3891
  %v4753 = vpack.c.b16 %v3899, %v3892
  %v4754 = vpack.c.b16 %v3907, %v3900
  %v4755 = vpack.c.b16 %v3908, %v3901
  %v4756 = vpack.c.b16 %v3909, %v3902
  %v4757 = vpack.c.b16 %v3910, %v3903
  %v4758 = vpack.c.b16 %v3911, %v3904
  %v4759 = vpack.c.b16 %v3912, %v3905
  %v4760 = vpack.c.b16 %v3913, %v3906
  %v4761 = vpack.c.b16 %v3921, %v3914
  %v4762 = vpack.c.b16 %v3922, %v3915
  %v4763 = vpack.c.b16 %v3923, %v3916
  %v4764 = vpack.c.b16 %v3924, %v3917
  %v4765 = vpack.c.b16 %v3925, %v3918
  %v4766 = vpack.c.b16 %v3926, %v3919
  %v4767 = vpack.c.b16 %v3927, %v3920
  %v4768 = vpack.c.b16 %v3935, %v3928
  %v4769 = vpack.c.b16 %v3936, %v3929
  %v4770 = vpack.c.b16 %v3937, %v3930
  %v4771 = vpack.c.b16 %v3938, %v3931
  %v4772 = vpack.c.b16 %v3939, %v3932
  %v4773 = vpack.c.b16 %v3940, %v3933
  %v4774 = vpack.c.b16 %v3941, %v3934
  %v4775 = vpack.c.b16 %v3949, %v3942
  %v4776 = vpack.c.b16 %v3950, %v3943
  %v4777 = vpack.c.b16 %v3951, %v3944
  %v4778 = vpack.c.b16 %v3952, %v3945
  %v4779 = vpack.c.b16 %v3953, %v3946
  %v4780 = vpack.c.b16 %v3954, %v3947
  %v4781 = vpack.c.b16 %v3955, %v3948
  %v4782 = vpack.c.b16 %v3963, %v3956
  %v4783 = vpack.c.b16 %v3964, %v3957
  %v4784 = vpack.c.b16 %v3965, %v3958
  %v4785 = vpack.c.b16 %v3966, %v3959
  %v4786 = vpack.c.b16 %v3967, %v3960
  %v4787 = vpack.c.b16 %v3968, %v3961
  %v4788 = vpack.c.b16 %v3969, %v3962
  %v4789 = vpack.c.b16 %v3977, %v3970
  %v4790 = vpack.c.b16 %v3978, %v3971
  %v4791 = vpack.c.b16 %v3979, %v3972
  %v4792 = vpack.c.b16 %v3980, %v3973
  %v4793 = vpack.c.b16 %v3981, %v3974
  %v4794 = vpack.c.b16 %v3982, %v3975
  %v4795 = vpack.c.b16 %v3983, %v3976
  %v4796 = vpack.c.b16 %v3991, %v3984
  %v4797 = vpack.c.b16 %v3992, %v3985
  %v4798 = vpack.c.b16 %v3993, %v3986
  %v4799 = vpack.c.b16 %v3994, %v3987
  %v4800 = vpack.c.b16 %v3995, %v3988
  %v4801 = vpack.c.b16 %v3996, %v3989
  %v4802 = vpack.c.b16 %v3997, %v3990
  %v4803 = vpack.c.b16 %v4005, %v3998
  %v4804 = vpack.c.b16 %v4006, %v3999
  %v4805 = vpack.c.b16 %v4007, %v4000
  %v4806 = vpack.c.b16 %v4008, %v4001
  %v4807 = vpack.c.b16 %v4009, %v4002
  %v4808 = vpack.c.b16 %v4010, %v4003
  %v4809 = vpack.c.b16 %v4011, %v4004
  %v4810 = vpack.c.b16 %v4019, %v4012
  %v4811 = vpack.c.b16 %v4020, %v4013
  %v4812 = vpack.c.b16 %v4021, %v4014
  %v4813 = vpack.c.b16 %v4022, %v4015
  %v4814 = vpack.c.b16 %v4023, %v4016
  %v4815 = vpack.c.b16 %v4024, %v4017
  %v4816 = vpack.c.b16 %v4025, %v4018
  %v4817 = vpack.c.b16 %v4033, %v4026
  %v4818 = vpack.c.b16 %v4034, %v4027
  %v4819 = vpack.c.b16 %v4035, %v4028
  %v4820 = vpack.c.b16 %v4036, %v4029
  %v4821 = vpack.c.b16 %v4037, %v4030
  %v4822 = vpack.c.b16 %v4038, %v4031
  %v4823 = vpack.c.b16 %v4039, %v4032
  %v4824 = vpack.c.b16 %v4047, %v4040
  %v4825 = vpack.c.b16 %v4048, %v4041
  %v4826 = vpack.c.b16 %v4049, %v4042
  %v4827 = vpack.c.b16 %v4050, %v4043
  %v4828 = vpack.c.b16 %v4051, %v4044
  %v4829 = vpack.c.b16 %v4052, %v4045
  %v4830 = vpack.c.b16 %v4053, %v4046
  %v4831 = vpack.c.b16 %v4061, %v4054
  %v4832 = vpack.c.b16 %v4062, %v4055
  %v4833 = vpack.c.b16 %v4063, %v4056
  %v4834 = vpack.c.b16 %v4064, %v4057
  %v4835 = vpack.c.b16 %v4065, %v4058
  %v4836 = vpack.c.b16 %v4066, %v4059
  %v4837 = vpack.c.b16 %v4067, %v4060
  %v4838 = vpack.c.b16 %v4075, %v4068
  %v4839 = vpack.c.b16 %v4076, %v4069
  %v4840 = vpack.c.b16 %v4077, %v4070
  %v4841 = vpack.c.b16 %v4078, %v4071
  %v4842 = vpack.c.b16 %v4079, %v4072
  %v4843 = vpack.c.b16 %v4080, %v4073
  %v4844 = vpack.c.b16 %v4081, %v4074
  %v4845 = vpack.c.b16 %v4089, %v4082
  %v4846 = vpack.c.b16 %v4090, %v4083
  %v4847 = vpack.c.b16 %v4091, %v4084
  %v4848 = vpack.c.b16 %v4092, %v4085
  %v4849 = vpack.c.b16 %v4093, %v4086
  %v4850 = vpack.c.b16 %v4094, %v4087
  %v4851 = vpack.c.b16 %v4095, %v4088
  %v4852 = vpack.c.b16 %v4103, %v4096
  %v4853 = vpack.c.b16 %v4104, %v4097
  %v4854 = vpack.c.b16 %v4105, %v4098
  %v4855 = vpack.c.b16 %v4106, %v4099
  %v4856 = vpack.c.b16 %v4107, %v4100
  %v4857 = vpack.c.b16 %v4108, %v4101
  %v4858 = vpack.c.b16 %v4109, %v4102
  %v4859 = vpack.c.b16 %v4117, %v4110
  %v4860 = vpack.c.b16 %v4118, %v4111
  %v4861 = vpack.c.b16 %v4119, %v4112
  %v4862 = vpack.c.b16 %v4120, %v4113
  %v4863 = vpack.c.b16 %v4121, %v4114
  %v4864 = vpack.c.b16 %v4122, %v4115
  %v4865 = vpack.c.b16 %v4123, %v4116
  %v4866 = vpack.c.b16 %v4131, %v4124
  %v4867 = vpack.c.b16 %v4132, %v4125
  %v4868 = vpack.c.b16 %v4133, %v4126
  %v4869 = vpack.c.b16 %v4134, %v4127
  %v4870 = vpack.c.b16 %v4135, %v4128
  %v4871 = vpack.c.b16 %v4136, %v4129
  %v4872 = vpack.c.b16 %v4137, %v4130
  %v4873 = vpack.c.b16 %v4145, %v4138
  %v4874 = vpack.c.b16 %v4146, %v4139
  %v4875 = vpack.c.b16 %v4147, %v4140
  %v4876 = vpack.c.b16 %v4148, %v4141
  %v4877 = vpack.c.b16 %v4149, %v4142
  %v4878 = vpack.c.b16 %v4150, %v4143
  %v4879 = vpack.c.b16 %v4151, %v4144
  %v4880 = vpack.c.b16 %v4159, %v4152
  %v4881 = vpack.c.b16 %v4160, %v4153
  %v4882 = vpack.c.b16 %v4161, %v4154
  %v4883 = vpack.c.b16 %v4162, %v4155
  %v4884 = vpack.c.b16 %v4163, %v4156
  %v4885 = vpack.c.b16 %v4164, %v4157
  %v4886 = vpack.c.b16 %v4165, %v4158
  %v4887 = vpack.c.b16 %v4173, %v4166
  %v4888 = vpack.c.b16 %v4174, %v4167
  %v4889 = vpack.c.b16 %v4175, %v4168
  %v4890 = vpack.c.b16 %v4176, %v4169
  %v4891 = vpack.c.b16 %v4177, %v4170
  %v4892 = vpack.c.b16 %v4178, %v4171
  %v4893 = vpack.c.b16 %v4179, %v4172
  %v4894 = vpack.c.b16 %v4187, %v4180
  %v4895 = vpack.c.b16 %v4188, %v4181
  %v4896 = vpack.c.b16 %v4189, %v4182
  %v4897 = vpack.c.b16 %v4190, %v4183
  %v4898 = vpack.c.b16 %v4191, %v4184
  %v4899 = vpack.c.b16 %v4192, %v4185
  %v4900 = vpack.c.b16 %v4193, %v4186
  %v4901 = vpack.c.b16 %v4201, %v4194
  %v4902 = vpack.c.b16 %v4202, %v4195
  %v4903 = vpack.c.b16 %v4203, %v4196
  %v4904 = vpack.c.b16 %v4204, %v4197
  %v4905 = vpack.c.b16 %v4205, %v4198
  %v4906 = vpack.c.b16 %v4206, %v4199
  %v4907 = vpack.c.b16 %v4207, %v4200
  %v4908 = vpack.c.b16 %v4215, %v4208
  %v4909 = vpack.c.b16 %v4216, %v4209
  %v4910 = vpack.c.b16 %v4217, %v4210
  %v4911 = vpack.c.b16 %v4218, %v4211
  %v4912 = vpack.c.b16 %v4219, %v4212
  %v4913 = vpack.c.b16 %v4220, %v4213
  %v4914 = vpack.c.b16 %v4221, %v4214
  %v4915 = vpack.c.b16 %v4229, %v4222
  %v4916 = vpack.c.b16 %v4230, %v4223
  %v4917 = vpack.c.b16 %v4231, %v4224
  %v4918 = vpack.c.b16 %v4232, %v4225
  %v4919 = vpack.c.b16 %v4233, %v4226
  %v4920 = vpack.c.b16 %v4234, %v4227
  %v4921 = vpack.c.b16 %v4235, %v4228
  %v4922 = vpack.c.b16 %v4243, %v4236
  %v4923 = vpack.c.b16 %v4244, %v4237
  %v4924 = vpack.c.b16 %v4245, %v4238
  %v4925 = vpack.c.b16 %v4246, %v4239
  %v4926 = vpack.c.b16 %v4247, %v4240
  %v4927 = vpack.c.b16 %v4248, %v4241
  %v4928 = vpack.c.b16 %v4249, %v4242
  %v4929 = vpack.c.b16 %v4257, %v4250
  %v4930 = vpack.c.b16 %v4258, %v4251
  %v4931 = vpack.c.b16 %v4259, %v4252
  %v4932 = vpack.c.b16 %v4260, %v4253
  %v4933 = vpack.c.b16 %v4261, %v4254
  %v4934 = vpack.c.b16 %v4262, %v4255
  %v4935 = vpack.c.b16 %v4263, %v4256
  %v4936 = vpack.c.b16 %v4271, %v4264
  %v4937 = vpack.c.b16 %v4272, %v4265
  %v4938 = vpack.c.b16 %v4273, %v4266
  %v4939 = vpack.c.b16 %v4274, %v4267
  %v4940 = vpack.c.b16 %v4275, %v4268
  %v4941 = vpack.c.b16 %v4276, %v4269
  %v4942 = vpack.c.b16 %v4277, %v4270
  %v4943 = vpack.c.b16 %v4285, %v4278
  %v4944 = vpack.c.b16 %v4286, %v4279
  %v4945 = vpack.c.b16 %v4287, %v4280
  %v4946 = vpack.c.b16 %v4288, %v4281
  %v4947 = vpack.c.b16 %v4289, %v4282
  %v4948 = vpack.c.b16 %v4290, %v4283
  %v4949 = vpack.c.b16 %v4291, %v4284
  %v4950 = vpack.c.b16 %v4299, %v4292
  %v4951 = vpack.c.b16 %v4300, %v4293
  %v4952 = vpack.c.b16 %v4301, %v4294
  %v4953 = vpack.c.b16 %v4302, %v4295
  %v4954 = vpack.c.b16 %v4303, %v4296
  %v4955 = vpack.c.b16 %v4304, %v4297
  %v4956 = vpack.c.b16 %v4305, %v4298
  %v4957 = vpack.c.b16 %v4313, %v4306
  %v4958 = vpack.c.b16 %v4314, %v4307
  %v4959 = vpack.c.b16 %v4315, %v4308
  %v4960 = vpack.c.b16 %v4316, %v4309
  %v4961 = vpack.c.b16 %v4317, %v4310
  %v4962 = vpack.c.b16 %v4318, %v4311
  %v4963 = vpack.c.b16 %v4319, %v4312
  %v4964 = vpack.c.b16 %v4327, %v4320
  %v4965 = vpack.c.b16 %v4328, %v4321
  %v4966 = vpack.c.b16 %v4329, %v4322
  %v4967 = vpack.c.b16 %v4330, %v4323
  %v4968 = vpack.c.b16 %v4331, %v4324
  %v4969 = vpack.c.b16 %v4332, %v4325
  %v4970 = vpack.c.b16 %v4333, %v4326
  %v4971 = vpack.c.b16 %v4341, %v4334
  %v4972 = vpack.c.b16 %v4342, %v4335
  %v4973 = vpack.c.b16 %v4343, %v4336
  %v4974 = vpack.c.b16 %v4344, %v4337
  %v4975 = vpack.c.b16 %v4345, %v4338
  %v4976 = vpack.c.b16 %v4346, %v4339
  %v4977 = vpack.c.b16 %v4347, %v4340
  %v4978 = vpack.c.b16 %v4355, %v4348
  %v4979 = vpack.c.b16 %v4356, %v4349
  %v4980 = vpack.c.b16 %v4357, %v4350
  %v4981 = vpack.c.b16 %v4358, %v4351
  %v4982 = vpack.c.b16 %v4359, %v4352
  %v4983 = vpack.c.b16 %v4360, %v4353
  %v4984 = vpack.c.b16 %v4361, %v4354
  %v4985 = vpack.c.b16 %v4369, %v4362
  %v4986 = vpack.c.b16 %v4370, %v4363
  %v4987 = vpack.c.b16 %v4371, %v4364
  %v4988 = vpack.c.b16 %v4372, %v4365
  %v4989 = vpack.c.b16 %v4373, %v4366
  %v4990 = vpack.c.b16 %v4374, %v4367
  %v4991 = vpack.c.b16 %v4375, %v4368
  %v4992 = vpack.c.b16 %v4383, %v4376
  %v4993 = vpack.c.b16 %v4384, %v4377
  %v4994 = vpack.c.b16 %v4385, %v4378
  %v4995 = vpack.c.b16 %v4386, %v4379
  %v4996 = vpack.c.b16 %v4387, %v4380
  %v4997 = vpack.c.b16 %v4388, %v4381
  %v4998 = vpack.c.b16 %v4389, %v4382
  %v4999 = vpack.c.b16 %v4397, %v4390
  %v5000 = vpack.c.b16 %v4398, %v4391
  %v5001 = vpack.c.b16 %v4399, %v4392
  %v5002 = vpack.c.b16 %v4400, %v4393
  %v5003 = vpack.c.b16 %v4401, %v4394
  %v5004 = vpack.c.b16 %v4402, %v4395
  %v5005 = vpack.c.b16 %v4403, %v4396
  %v5006 = vpack.c.b16 %v4411, %v4404
  %v5007 = vpack.c.b16 %v4412, %v4405
  %v5008 = vpack.c.b16 %v4413, %v4406
  %v5009 = vpack.c.b16 %v4414, %v4407
  %v5010 = vpack.c.b16 %v4415, %v4408
  %v5011 = vpack.c.b16 %v4416, %v4409
  %v5012 = vpack.c.b16 %v4417, %v4410
  %v5013 = vpack.c.b16 %v4425, %v4418
  %v5014 = vpack.c.b16 %v4426, %v4419
  %v5015 = vpack.c.b16 %v4427, %v4420
  %v5016 = vpack.c.b16 %v4428, %v4421
  %v5017 = vpack.c.b16 %v4429, %v4422
  %v5018 = vpack.c.b16 %v4430, %v4423
  %v5019 = vpack.c.b16 %v4431, %v4424
  %v5020 = vpack.c.b16 %v4439, %v4432
  %v5021 = vpack.c.b16 %v4440, %v4433
  %v5022 = vpack.c.b16 %v4441, %v4434
  %v5023 = vpack.c.b16 %v4442, %v4435
  %v5024 = vpack.c.b16 %v4443, %v4436
  %v5025 = vpack.c.b16 %v4444, %v4437
  %v5026 = vpack.c.b16 %v4445, %v4438
  %v5027 = vpack.c.b16 %v4453, %v4446
  %v5028 = vpack.c.b16 %v4454, %v4447
  %v5029 = vpack.c.b16 %v4455, %v4448
  %v5030 = vpack.c.b16 %v4456, %v4449
  %v5031 = vpack.c.b16 %v4457, %v4450
  %v5032 = vpack.c.b16 %v4458, %v4451
  %v5033 = vpack.c.b16 %v4459, %v4452
  %v5034 = vpack.c.b16 %v4467, %v4460
  %v5035 = vpack.c.b16 %v4468, %v4461
  %v5036 = vpack.c.b16 %v4469, %v4462
  %v5037 = vpack.c.b16 %v4470, %v4463
  %v5038 = vpack.c.b16 %v4471, %v4464
  %v5039 = vpack.c.b16 %v4472, %v4465
  %v5040 = vpack.c.b16 %v4473, %v4466
  %v5041 = vpack.c.b16 %v4481, %v4474
  %v5042 = vpack.c.b16 %v4482, %v4475
  %v5043 = vpack.c.b16 %v4483, %v4476
  %v5044 = vpack.c.b16 %v4484, %v4477
  %v5045 = vpack.c.b16 %v4485, %v4478
  %v5046 = vpack.c.b16 %v4486, %v4479
  %v5047 = vpack.c.b16 %v4487, %v4480
  %v5048 = vpack.c.b16 %v4495, %v4488
  %v5049 = vpack.c.b16 %v4496, %v4489
  %v5050 = vpack.c.b16 %v4497, %v4490
  %v5051 = vpack.c.b16 %v4498, %v4491
  %v5052 = vpack.c.b16 %v4499, %v4492
  %v5053 = vpack.c.b16 %v4500, %v4493
  %v5054 = vpack.c.b16 %v4501, %v4494
  %v5055 = vpack.c.b16 %v4509, %v4502
  %v5056 = vpack.c.b16 %v4510, %v4503
  %v5057 = vpack.c.b16 %v4511, %v4504
  %v5058 = vpack.c.b16 %v4512, %v4505
  %v5059 = vpack.c.b16 %v4513, %v4506
  %v5060 = vpack.c.b16 %v4514, %v4507
  %v5061 = vpack.c.b16 %v4515, %v4508
  %v5062 = vpack.c.b16 %v4523, %v4516
  %v5063 = vpack.c.b16 %v4524, %v4517
  %v5064 = vpack.c.b16 %v4525, %v4518
  %v5065 = vpack.c.b16 %v4526, %v4519
  %v5066 = vpack.c.b16 %v4527, %v4520
  %v5067 = vpack.c.b16 %v4528, %v4521
  %v5068 = vpack.c.b16 %v4529, %v4522
  %v5069 = vpack.c.b16 %v4537, %v4530
  %v5070 = vpack.c.b16 %v4538, %v4531
  %v5071 = vpack.c.b16 %v4539, %v4532
  %v5072 = vpack.c.b16 %v4540, %v4533
  %v5073 = vpack.c.b16 %v4541, %v4534
  %v5074 = vpack.c.b16 %v4542, %v4535
  %v5075 = vpack.c.b16 %v4543, %v4536
  %v5076 = vpack.c.b16 %v4551, %v4544
  %v5077 = vpack.c.b16 %v4552, %v4545
  %v5078 = vpack.c.b16 %v4553, %v4546
  %v5079 = vpack.c.b16 %v4554, %v4547
  %v5080 = vpack.c.b16 %v4555, %v4548
  %v5081 = vpack.c.b16 %v4556, %v4549
  %v5082 = vpack.c.b16 %v4557, %v4550
  %v5083 = vpack.c.b16 %v4565, %v4558
  %v5084 = vpack.c.b16 %v4566, %v4559
  %v5085 = vpack.c.b16 %v4567, %v4560
  %v5086 = vpack.c.b16 %v4568, %v4561
  %v5087 = vpack.c.b16 %v4569, %v4562
  %v5088 = vpack.c.b16 %v4570, %v4563
  %v5089 = vpack.c.b16 %v4571, %v4564
  %v5090 = vpack.c.b16 %v4579, %v4572
  %v5091 = vpack.c.b16 %v4580, %v4573
  %v5092 = vpack.c.b16 %v4581, %v4574
  %v5093 = vpack.c.b16 %v4582, %v4575
  %v5094 = vpack.c.b16 %v4583, %v4576
  %v5095 = vpack.c.b16 %v4584, %v4577
  %v5096 = vpack.c.b16 %v4585, %v4578
  %v5097 = vpack.c.b16 %v4593, %v4586
  %v5098 = vpack.c.b16 %v4594, %v4587
  %v5099 = vpack.c.b16 %v4595, %v4588
  %v5100 = vpack.c.b16 %v4596, %v4589
  %v5101 = vpack.c.b16 %v4597, %v4590
  %v5102 = vpack.c.b16 %v4598, %v4591
  %v5103 = vpack.c.b16 %v4599, %v4592
  %v5104 = vpack.c.b16 %v4607, %v4600
  %v5105 = vpack.c.b16 %v4608, %v4601
  %v5106 = vpack.c.b16 %v4609, %v4602
  %v5107 = vpack.c.b16 %v4610, %v4603
  %v5108 = vpack.c.b16 %v4611, %v4604
  %v5109 = vpack.c.b16 %v4612, %v4605
  %v5110 = vpack.c.b16 %v4613, %v4606
  %v5111 = vpack.c.b16 %v4621, %v4614
  %v5112 = vpack.c.b16 %v4622, %v4615
  %v5113 = vpack.c.b16 %v4623, %v4616
  %v5114 = vpack.c.b16 %v4624, %v4617
  %v5115 = vpack.c.b16 %v4625, %v4618
  %v5116 = vpack.c.b16 %v4626, %v4619
  %v5117 = vpack.c.b16 %v4627, %v4620
  %v5118 = vpack.c.b16 %v4635, %v4628
  %v5119 = vpack.c.b16 %v4636, %v4629
  %v5120 = vpack.c.b16 %v4637, %v4630
  %v5121 = vpack.c.b16 %v4638, %v4631
  %v5122 = vpack.c.b16 %v4639, %v4632
  %v5123 = vpack.c.b16 %v4640, %v4633
  %v5124 = vpack.c.b16 %v4641, %v4634
  %v5125 = vpack.c.b16 %v4649, %v4642
  %v5126 = vpack.c.b16 %v4650, %v4643
  %v5127 = vpack.c.b16 %v4651, %v4644
  %v5128 = vpack.c.b16 %v4652, %v4645
  %v5129 = vpack.c.b16 %v4653, %v4646
  %v5130 = vpack.c.b16 %v4654, %v4647
  %v5131 = vpack.c.b16 %v4655, %v4648
  %v5132 = vpack.c.b16 %v4663, %v4656
  %v5133 = vpack.c.b16 %v4664, %v4657
  %v5134 = vpack.c.b16 %v4665, %v4658
  %v5135 = vpack.c.b16 %v4666, %v4659
  %v5136 = vpack.c.b16 %v4667, %v4660
  %v5137 = vpack.c.b16 %v4668, %v4661
  %v5138 = vpack.c.b16 %v4669, %v4662
  %v5139 = vpack.c.b16 %v4677, %v4670
  %v5140 = vpack.c.b16 %v4678, %v4671
  %v5141 = vpack.c.b16 %v4679, %v4672
  %v5142 = vpack.c.b16 %v4680, %v4673
  %v5143 = vpack.c.b16 %v4681, %v4674
  %v5144 = vpack.c.b16 %v4682, %v4675
  %v5145 = vpack.c.b16 %v4683, %v4676
  %v5146 = vpack.c.b16 %v4691, %v4684
  %v5147 = vpack.c.b16 %v4692, %v4685
  %v5148 = vpack.c.b16 %v4693, %v4686
  %v5149 = vpack.c.b16 %v4694, %v4687
  %v5150 = vpack.c.b16 %v4695, %v4688
  %v5151 = vpack.c.b16 %v4696, %v4689
  %v5152 = vpack.c.b16 %v4697, %v4690
  %v5153 = vpack.c.b16 %v4705, %v4698
  %v5154 = vpack.c.b16 %v4706, %v4699
  %v5155 = vpack.c.b16 %v4707, %v4700
  %v5156 = vpack.c.b16 %v4708, %v4701
  %v5157 = vpack.c.b16 %v4709, %v4702
  %v5158 = vpack.c.b16 %v4710, %v4703
  %v5159 = vpack.c.b16 %v4711, %v4704
  %5608 = vmatprep.subr.bf16.mxu0 %v4713
  %5609 = vmatpush1.bf16.msra.mxu0 %v4712
  %5610 = vmatprep.subr.bf16.mxu0 %v4720
  %5611 = vmatpush1.bf16.msra.mxu0 %v4719
  %5612 = vmatprep.subr.bf16.mxu0 %v4727
  %5613 = vmatpush1.bf16.msra.mxu0 %v4726
  %5614 = vmatprep.subr.bf16.mxu0 %v4734
  %5615 = vmatpush1.bf16.msra.mxu0 %v4733
  %5616 = vmatprep.subr.bf16.mxu0 %v4741
  %5617 = vmatpush1.bf16.msra.mxu0 %v4740
  %5618 = vmatprep.subr.bf16.mxu0 %v4748
  %5619 = vmatpush1.bf16.msra.mxu0 %v4747
  %5620 = vmatprep.subr.bf16.mxu0 %v4755
  %5621 = vmatpush1.bf16.msra.mxu0 %v4754
  %5622 = vmatprep.subr.bf16.mxu0 %v4762
  %5623 = vmatpush1.bf16.msra.mxu0 %v4761
  %5624 = vmatprep.subr.bf16.mxu0 %v4769
  %5625 = vmatpush1.bf16.msra.mxu0 %v4768
  %5626 = vmatprep.subr.bf16.mxu0 %v4776
  %5627 = vmatpush1.bf16.msra.mxu0 %v4775
  %5628 = vmatprep.subr.bf16.mxu0 %v4783
  %5629 = vmatpush1.bf16.msra.mxu0 %v4782
  %5630 = vmatprep.subr.bf16.mxu0 %v4790
  %5631 = vmatpush1.bf16.msra.mxu0 %v4789
  %5632 = vmatprep.subr.bf16.mxu0 %v4797
  %5633 = vmatpush1.bf16.msra.mxu0 %v4796
  %5634 = vmatprep.subr.bf16.mxu0 %v4804
  %5635 = vmatpush1.bf16.msra.mxu0 %v4803
  %5636 = vmatprep.subr.bf16.mxu0 %v4811
  %5637 = vmatpush1.bf16.msra.mxu0 %v4810
  %5638 = vmatprep.subr.bf16.mxu0 %v4818
  %5639 = vmatpush1.bf16.msra.mxu0 %v4817
  %5640 = vmatprep.mubr.bf16.mxu0 %v2748
  %5641 = vmatmul.mubr.bf16.gmra.mrb[0].mxu0 %v2747
  %v5642 = vpop.f32.mrb[0].mxu0
  %v5643 = vadd.f32 %v3272, %v5642
  %v5644 = vpop.f32.mrb[0].mxu0
  %v5645 = vadd.f32 %v3276, %v5644
  %v5646 = vpop.f32.mrb[0].mxu0
  %v5647 = vpop.f32.mrb[0].mxu0
  %5648 = vdwg.mxu0
  %5649 = vmatprep.subr.bf16.mxu0 %v4825
  %5650 = vmatpush1.bf16.msra.mxu0 %v4824
  %5651 = vmatprep.subr.bf16.mxu0 %v4832
  %5652 = vmatpush1.bf16.msra.mxu0 %v4831
  %5653 = vmatprep.subr.bf16.mxu0 %v4839
  %5654 = vmatpush1.bf16.msra.mxu0 %v4838
  %5655 = vmatprep.subr.bf16.mxu0 %v4846
  %5656 = vmatpush1.bf16.msra.mxu0 %v4845
  %5657 = vmatprep.subr.bf16.mxu0 %v4853
  %5658 = vmatpush1.bf16.msra.mxu0 %v4852
  %5659 = vmatprep.subr.bf16.mxu0 %v4860
  %5660 = vmatpush1.bf16.msra.mxu0 %v4859
  %5661 = vmatprep.subr.bf16.mxu0 %v4867
  %5662 = vmatpush1.bf16.msra.mxu0 %v4866
  %5663 = vmatprep.subr.bf16.mxu0 %v4874
  %5664 = vmatpush1.bf16.msra.mxu0 %v4873
  %5665 = vmatprep.subr.bf16.mxu0 %v4881
  %5666 = vmatpush1.bf16.msra.mxu0 %v4880
  %5667 = vmatprep.subr.bf16.mxu0 %v4888
  %5668 = vmatpush1.bf16.msra.mxu0 %v4887
  %5669 = vmatprep.subr.bf16.mxu0 %v4895
  %5670 = vmatpush1.bf16.msra.mxu0 %v4894
  %5671 = vmatprep.subr.bf16.mxu0 %v4902
  %5672 = vmatpush1.bf16.msra.mxu0 %v4901
  %5673 = vmatprep.subr.bf16.mxu0 %v4909
  %5674 = vmatpush1.bf16.msra.mxu0 %v4908
  %5675 = vmatprep.subr.bf16.mxu0 %v4916
  %5676 = vmatpush1.bf16.msra.mxu0 %v4915
  %5677 = vmatprep.subr.bf16.mxu0 %v4923
  %5678 = vmatpush1.bf16.msra.mxu0 %v4922
  %5679 = vmatprep.subr.bf16.mxu0 %v4930
  %5680 = vmatpush1.bf16.msra.mxu0 %v4929
  %5681 = vmatprep.mubr.bf16.mxu0 %v2750
  %5682 = vmatmul.mubr.bf16.gmra.mrb[0].mxu0 %v2749
  %v5683 = vpop.f32.mrb[0].mxu0
  %v5684 = vadd.f32 %v5643, %v5683
  %v5685 = vpop.f32.mrb[0].mxu0
  %v5686 = vadd.f32 %v5645, %v5685
  %v5687 = vpop.f32.mrb[0].mxu0
  %v5688 = vpop.f32.mrb[0].mxu0
  %5689 = vdwg.mxu0
  %5690 = vmatprep.subr.bf16.mxu0 %v4937
  %5691 = vmatpush1.bf16.msra.mxu0 %v4936
  %5692 = vmatprep.subr.bf16.mxu0 %v4944
  %5693 = vmatpush1.bf16.msra.mxu0 %v4943
  %5694 = vmatprep.subr.bf16.mxu0 %v4951
  %5695 = vmatpush1.bf16.msra.mxu0 %v4950
  %5696 = vmatprep.subr.bf16.mxu0 %v4958
  %5697 = vmatpush1.bf16.msra.mxu0 %v4957
  %5698 = vmatprep.subr.bf16.mxu0 %v4965
  %5699 = vmatpush1.bf16.msra.mxu0 %v4964
  %5700 = vmatprep.subr.bf16.mxu0 %v4972
  %5701 = vmatpush1.bf16.msra.mxu0 %v4971
  %5702 = vmatprep.subr.bf16.mxu0 %v4979
  %5703 = vmatpush1.bf16.msra.mxu0 %v4978
  %5704 = vmatprep.subr.bf16.mxu0 %v4986
  %5705 = vmatpush1.bf16.msra.mxu0 %v4985
  %5706 = vmatprep.subr.bf16.mxu0 %v4993
  %5707 = vmatpush1.bf16.msra.mxu0 %v4992
  %5708 = vmatprep.subr.bf16.mxu0 %v5000
  %5709 = vmatpush1.bf16.msra.mxu0 %v4999
  %5710 = vmatprep.subr.bf16.mxu0 %v5007
  %5711 = vmatpush1.bf16.msra.mxu0 %v5006
  %5712 = vmatprep.subr.bf16.mxu0 %v5014
  %5713 = vmatpush1.bf16.msra.mxu0 %v5013
  %5714 = vmatprep.subr.bf16.mxu0 %v5021
  %5715 = vmatpush1.bf16.msra.mxu0 %v5020
  %5716 = vmatprep.subr.bf16.mxu0 %v5028
  %5717 = vmatpush1.bf16.msra.mxu0 %v5027
  %5718 = vmatprep.subr.bf16.mxu0 %v5035
  %5719 = vmatpush1.bf16.msra.mxu0 %v5034
  %5720 = vmatprep.subr.bf16.mxu0 %v5042
  %5721 = vmatpush1.bf16.msra.mxu0 %v5041
  %5722 = vmatprep.mubr.bf16.mxu0 %v2752
  %5723 = vmatmul.mubr.bf16.gmra.mrb[0].mxu0 %v2751
  %v5724 = vpop.f32.mrb[0].mxu0
  %v5725 = vadd.f32 %v5684, %v5724
  %v5726 = vpop.f32.mrb[0].mxu0
  %v5727 = vadd.f32 %v5686, %v5726
  %v5728 = vpop.f32.mrb[0].mxu0
  %v5729 = vpop.f32.mrb[0].mxu0
  %5730 = vdwg.mxu0
  %5731 = vmatprep.subr.bf16.mxu0 %v5049
  %5732 = vmatpush1.bf16.msra.mxu0 %v5048
  %5733 = vmatprep.subr.bf16.mxu0 %v5056
  %5734 = vmatpush1.bf16.msra.mxu0 %v5055
  %5735 = vmatprep.subr.bf16.mxu0 %v5063
  %5736 = vmatpush1.bf16.msra.mxu0 %v5062
  %5737 = vmatprep.subr.bf16.mxu0 %v5070
  %5738 = vmatpush1.bf16.msra.mxu0 %v5069
  %5739 = vmatprep.subr.bf16.mxu0 %v5077
  %5740 = vmatpush1.bf16.msra.mxu0 %v5076
  %5741 = vmatprep.subr.bf16.mxu0 %v5084
  %5742 = vmatpush1.bf16.msra.mxu0 %v5083
  %5743 = vmatprep.subr.bf16.mxu0 %v5091
  %5744 = vmatpush1.bf16.msra.mxu0 %v5090
  %5745 = vmatprep.subr.bf16.mxu0 %v5098
  %5746 = vmatpush1.bf16.msra.mxu0 %v5097
  %5747 = vmatprep.subr.bf16.mxu0 %v5105
  %5748 = vmatpush1.bf16.msra.mxu0 %v5104
  %5749 = vmatprep.subr.bf16.mxu0 %v5112
  %5750 = vmatpush1.bf16.msra.mxu0 %v5111
  %5751 = vmatprep.subr.bf16.mxu0 %v5119
  %5752 = vmatpush1.bf16.msra.mxu0 %v5118
  %5753 = vmatprep.subr.bf16.mxu0 %v5126
  %5754 = vmatpush1.bf16.msra.mxu0 %v5125
  %5755 = vmatprep.subr.bf16.mxu0 %v5133
  %5756 = vmatpush1.bf16.msra.mxu0 %v5132
  %5757 = vmatprep.subr.bf16.mxu0 %v5140
  %5758 = vmatpush1.bf16.msra.mxu0 %v5139
  %5759 = vmatprep.subr.bf16.mxu0 %v5147
  %5760 = vmatpush1.bf16.msra.mxu0 %v5146
  %5761 = vmatprep.subr.bf16.mxu0 %v5154
  %5762 = vmatpush1.bf16.msra.mxu0 %v5153
  %5763 = vmatprep.mubr.bf16.mxu0 %v2754
  %5764 = vmatmul.mubr.bf16.gmra.mrb[0].mxu0 %v2753
  %v5765 = vpop.f32.mrb[0].mxu0
  %v5766 = vadd.f32 %v5725, %v5765
  %v5767 = vpop.f32.mrb[0].mxu0
  %v5768 = vadd.f32 %v5727, %v5767
  %v5769 = vpop.f32.mrb[0].mxu0
  %v5770 = vpop.f32.mrb[0].mxu0
  %5771 = vdwg.mxu0
  %5772 = vmatprep.subr.bf16.mxu0 %v4715
  %5773 = vmatpush1.bf16.msra.mxu0 %v4714
  %5774 = vmatprep.subr.bf16.mxu0 %v4722
  %5775 = vmatpush1.bf16.msra.mxu0 %v4721
  %5776 = vmatprep.subr.bf16.mxu0 %v4729
  %5777 = vmatpush1.bf16.msra.mxu0 %v4728
  %5778 = vmatprep.subr.bf16.mxu0 %v4736
  %5779 = vmatpush1.bf16.msra.mxu0 %v4735
  %5780 = vmatprep.subr.bf16.mxu0 %v4743
  %5781 = vmatpush1.bf16.msra.mxu0 %v4742
  %5782 = vmatprep.subr.bf16.mxu0 %v4750
  %5783 = vmatpush1.bf16.msra.mxu0 %v4749
  %5784 = vmatprep.subr.bf16.mxu0 %v4757
  %5785 = vmatpush1.bf16.msra.mxu0 %v4756
  %5786 = vmatprep.subr.bf16.mxu0 %v4764
  %5787 = vmatpush1.bf16.msra.mxu0 %v4763
  %5788 = vmatprep.subr.bf16.mxu0 %v4771
  %5789 = vmatpush1.bf16.msra.mxu0 %v4770
  %5790 = vmatprep.subr.bf16.mxu0 %v4778
  %5791 = vmatpush1.bf16.msra.mxu0 %v4777
  %5792 = vmatprep.subr.bf16.mxu0 %v4785
  %5793 = vmatpush1.bf16.msra.mxu0 %v4784
  %5794 = vmatprep.subr.bf16.mxu0 %v4792
  %5795 = vmatpush1.bf16.msra.mxu0 %v4791
  %5796 = vmatprep.subr.bf16.mxu0 %v4799
  %5797 = vmatpush1.bf16.msra.mxu0 %v4798
  %5798 = vmatprep.subr.bf16.mxu0 %v4806
  %5799 = vmatpush1.bf16.msra.mxu0 %v4805
  %5800 = vmatprep.subr.bf16.mxu0 %v4813
  %5801 = vmatpush1.bf16.msra.mxu0 %v4812
  %5802 = vmatprep.subr.bf16.mxu0 %v4820
  %5803 = vmatpush1.bf16.msra.mxu0 %v4819
  %5804 = vmatprep.mubr.bf16.mxu0 %v2748
  %5805 = vmatmul.mubr.bf16.gmra.mrb[0].mxu0 %v2747
  %v5806 = vpop.f32.mrb[0].mxu0
  %v5807 = vadd.f32 %v3280, %v5806
  %v5808 = vpop.f32.mrb[0].mxu0
  %v5809 = vadd.f32 %v3284, %v5808
  %v5810 = vpop.f32.mrb[0].mxu0
  %v5811 = vpop.f32.mrb[0].mxu0
  %5812 = vdwg.mxu0
  %5813 = vmatprep.subr.bf16.mxu0 %v4827
  %5814 = vmatpush1.bf16.msra.mxu0 %v4826
  %5815 = vmatprep.subr.bf16.mxu0 %v4834
  %5816 = vmatpush1.bf16.msra.mxu0 %v4833
  %5817 = vmatprep.subr.bf16.mxu0 %v4841
  %5818 = vmatpush1.bf16.msra.mxu0 %v4840
  %5819 = vmatprep.subr.bf16.mxu0 %v4848
  %5820 = vmatpush1.bf16.msra.mxu0 %v4847
  %5821 = vmatprep.subr.bf16.mxu0 %v4855
  %5822 = vmatpush1.bf16.msra.mxu0 %v4854
  %5823 = vmatprep.subr.bf16.mxu0 %v4862
  %5824 = vmatpush1.bf16.msra.mxu0 %v4861
  %5825 = vmatprep.subr.bf16.mxu0 %v4869
  %5826 = vmatpush1.bf16.msra.mxu0 %v4868
  %5827 = vmatprep.subr.bf16.mxu0 %v4876
  %5828 = vmatpush1.bf16.msra.mxu0 %v4875
  %5829 = vmatprep.subr.bf16.mxu0 %v4883
  %5830 = vmatpush1.bf16.msra.mxu0 %v4882
  %5831 = vmatprep.subr.bf16.mxu0 %v4890
  %5832 = vmatpush1.bf16.msra.mxu0 %v4889
  %5833 = vmatprep.subr.bf16.mxu0 %v4897
  %5834 = vmatpush1.bf16.msra.mxu0 %v4896
  %5835 = vmatprep.subr.bf16.mxu0 %v4904
  %5836 = vmatpush1.bf16.msra.mxu0 %v4903
  %5837 = vmatprep.subr.bf16.mxu0 %v4911
  %5838 = vmatpush1.bf16.msra.mxu0 %v4910
  %5839 = vmatprep.subr.bf16.mxu0 %v4918
  %5840 = vmatpush1.bf16.msra.mxu0 %v4917
  %5841 = vmatprep.subr.bf16.mxu0 %v4925
  %5842 = vmatpush1.bf16.msra.mxu0 %v4924
  %5843 = vmatprep.subr.bf16.mxu0 %v4932
  %5844 = vmatpush1.bf16.msra.mxu0 %v4931
  %5845 = vmatprep.mubr.bf16.mxu0 %v2750
  %5846 = vmatmul.mubr.bf16.gmra.mrb[0].mxu0 %v2749
  %v5847 = vpop.f32.mrb[0].mxu0
  %v5848 = vadd.f32 %v5807, %v5847
  %v5849 = vpop.f32.mrb[0].mxu0
  %v5850 = vadd.f32 %v5809, %v5849
  %v5851 = vpop.f32.mrb[0].mxu0
  %v5852 = vpop.f32.mrb[0].mxu0
  %5853 = vdwg.mxu0
  %5854 = vmatprep.subr.bf16.mxu0 %v4939
  %5855 = vmatpush1.bf16.msra.mxu0 %v4938
  %5856 = vmatprep.subr.bf16.mxu0 %v4946
  %5857 = vmatpush1.bf16.msra.mxu0 %v4945
  %5858 = vmatprep.subr.bf16.mxu0 %v4953
  %5859 = vmatpush1.bf16.msra.mxu0 %v4952
  %5860 = vmatprep.subr.bf16.mxu0 %v4960
  %5861 = vmatpush1.bf16.msra.mxu0 %v4959
  %5862 = vmatprep.subr.bf16.mxu0 %v4967
  %5863 = vmatpush1.bf16.msra.mxu0 %v4966
  %5864 = vmatprep.subr.bf16.mxu0 %v4974
  %5865 = vmatpush1.bf16.msra.mxu0 %v4973
  %5866 = vmatprep.subr.bf16.mxu0 %v4981
  %5867 = vmatpush1.bf16.msra.mxu0 %v4980
  %5868 = vmatprep.subr.bf16.mxu0 %v4988
  %5869 = vmatpush1.bf16.msra.mxu0 %v4987
  %5870 = vmatprep.subr.bf16.mxu0 %v4995
  %5871 = vmatpush1.bf16.msra.mxu0 %v4994
  %5872 = vmatprep.subr.bf16.mxu0 %v5002
  %5873 = vmatpush1.bf16.msra.mxu0 %v5001
  %5874 = vmatprep.subr.bf16.mxu0 %v5009
  %5875 = vmatpush1.bf16.msra.mxu0 %v5008
  %5876 = vmatprep.subr.bf16.mxu0 %v5016
  %5877 = vmatpush1.bf16.msra.mxu0 %v5015
  %5878 = vmatprep.subr.bf16.mxu0 %v5023
  %5879 = vmatpush1.bf16.msra.mxu0 %v5022
  %5880 = vmatprep.subr.bf16.mxu0 %v5030
  %5881 = vmatpush1.bf16.msra.mxu0 %v5029
  %5882 = vmatprep.subr.bf16.mxu0 %v5037
  %5883 = vmatpush1.bf16.msra.mxu0 %v5036
  %5884 = vmatprep.subr.bf16.mxu0 %v5044
  %5885 = vmatpush1.bf16.msra.mxu0 %v5043
  %5886 = vmatprep.mubr.bf16.mxu0 %v2752
  %5887 = vmatmul.mubr.bf16.gmra.mrb[0].mxu0 %v2751
  %v5888 = vpop.f32.mrb[0].mxu0
  %v5889 = vadd.f32 %v5848, %v5888
  %v5890 = vpop.f32.mrb[0].mxu0
  %v5891 = vadd.f32 %v5850, %v5890
  %v5892 = vpop.f32.mrb[0].mxu0
  %v5893 = vpop.f32.mrb[0].mxu0
  %5894 = vdwg.mxu0
  %5895 = vmatprep.subr.bf16.mxu0 %v5051
  %5896 = vmatpush1.bf16.msra.mxu0 %v5050
  %5897 = vmatprep.subr.bf16.mxu0 %v5058
  %5898 = vmatpush1.bf16.msra.mxu0 %v5057
  %5899 = vmatprep.subr.bf16.mxu0 %v5065
  %5900 = vmatpush1.bf16.msra.mxu0 %v5064
  %5901 = vmatprep.subr.bf16.mxu0 %v5072
  %5902 = vmatpush1.bf16.msra.mxu0 %v5071
  %5903 = vmatprep.subr.bf16.mxu0 %v5079
  %5904 = vmatpush1.bf16.msra.mxu0 %v5078
  %5905 = vmatprep.subr.bf16.mxu0 %v5086
  %5906 = vmatpush1.bf16.msra.mxu0 %v5085
  %5907 = vmatprep.subr.bf16.mxu0 %v5093
  %5908 = vmatpush1.bf16.msra.mxu0 %v5092
  %5909 = vmatprep.subr.bf16.mxu0 %v5100
  %5910 = vmatpush1.bf16.msra.mxu0 %v5099
  %5911 = vmatprep.subr.bf16.mxu0 %v5107
  %5912 = vmatpush1.bf16.msra.mxu0 %v5106
  %5913 = vmatprep.subr.bf16.mxu0 %v5114
  %5914 = vmatpush1.bf16.msra.mxu0 %v5113
  %5915 = vmatprep.subr.bf16.mxu0 %v5121
  %5916 = vmatpush1.bf16.msra.mxu0 %v5120
  %5917 = vmatprep.subr.bf16.mxu0 %v5128
  %5918 = vmatpush1.bf16.msra.mxu0 %v5127
  %5919 = vmatprep.subr.bf16.mxu0 %v5135
  %5920 = vmatpush1.bf16.msra.mxu0 %v5134
  %5921 = vmatprep.subr.bf16.mxu0 %v5142
  %5922 = vmatpush1.bf16.msra.mxu0 %v5141
  %5923 = vmatprep.subr.bf16.mxu0 %v5149
  %5924 = vmatpush1.bf16.msra.mxu0 %v5148
  %5925 = vmatprep.subr.bf16.mxu0 %v5156
  %5926 = vmatpush1.bf16.msra.mxu0 %v5155
  %5927 = vmatprep.mubr.bf16.mxu0 %v2754
  %5928 = vmatmul.mubr.bf16.gmra.mrb[0].mxu0 %v2753
  %v5929 = vpop.f32.mrb[0].mxu0
  %v5930 = vadd.f32 %v5889, %v5929
  %v5931 = vpop.f32.mrb[0].mxu0
  %v5932 = vadd.f32 %v5891, %v5931
  %v5933 = vpop.f32.mrb[0].mxu0
  %v5934 = vpop.f32.mrb[0].mxu0
  %5935 = vdwg.mxu0
  %5936 = vmatprep.subr.bf16.mxu0 %v4717
  %5937 = vmatpush1.bf16.msra.mxu0 %v4716
  %5938 = vmatprep.subr.bf16.mxu0 %v4724
  %5939 = vmatpush1.bf16.msra.mxu0 %v4723
  %5940 = vmatprep.subr.bf16.mxu0 %v4731
  %5941 = vmatpush1.bf16.msra.mxu0 %v4730
  %5942 = vmatprep.subr.bf16.mxu0 %v4738
  %5943 = vmatpush1.bf16.msra.mxu0 %v4737
  %5944 = vmatprep.subr.bf16.mxu0 %v4745
  %5945 = vmatpush1.bf16.msra.mxu0 %v4744
  %5946 = vmatprep.subr.bf16.mxu0 %v4752
  %5947 = vmatpush1.bf16.msra.mxu0 %v4751
  %5948 = vmatprep.subr.bf16.mxu0 %v4759
  %5949 = vmatpush1.bf16.msra.mxu0 %v4758
  %5950 = vmatprep.subr.bf16.mxu0 %v4766
  %5951 = vmatpush1.bf16.msra.mxu0 %v4765
  %5952 = vmatprep.subr.bf16.mxu0 %v4773
  %5953 = vmatpush1.bf16.msra.mxu0 %v4772
  %5954 = vmatprep.subr.bf16.mxu0 %v4780
  %5955 = vmatpush1.bf16.msra.mxu0 %v4779
  %5956 = vmatprep.subr.bf16.mxu0 %v4787
  %5957 = vmatpush1.bf16.msra.mxu0 %v4786
  %5958 = vmatprep.subr.bf16.mxu0 %v4794
  %5959 = vmatpush1.bf16.msra.mxu0 %v4793
  %5960 = vmatprep.subr.bf16.mxu0 %v4801
  %5961 = vmatpush1.bf16.msra.mxu0 %v4800
  %5962 = vmatprep.subr.bf16.mxu0 %v4808
  %5963 = vmatpush1.bf16.msra.mxu0 %v4807
  %5964 = vmatprep.subr.bf16.mxu0 %v4815
  %5965 = vmatpush1.bf16.msra.mxu0 %v4814
  %5966 = vmatprep.subr.bf16.mxu0 %v4822
  %5967 = vmatpush1.bf16.msra.mxu0 %v4821
  %5968 = vmatprep.mubr.bf16.mxu0 %v2748
  %5969 = vmatmul.mubr.bf16.gmra.mrb[0].mxu0 %v2747
  %v5970 = vpop.f32.mrb[0].mxu0
  %v5971 = vadd.f32 %v3288, %v5970
  %v5972 = vpop.f32.mrb[0].mxu0
  %v5973 = vadd.f32 %v3292, %v5972
  %v5974 = vpop.f32.mrb[0].mxu0
  %v5975 = vpop.f32.mrb[0].mxu0
  %5976 = vdwg.mxu0
  %5977 = vmatprep.subr.bf16.mxu0 %v4829
  %5978 = vmatpush1.bf16.msra.mxu0 %v4828
  %5979 = vmatprep.subr.bf16.mxu0 %v4836
  %5980 = vmatpush1.bf16.msra.mxu0 %v4835
  %5981 = vmatprep.subr.bf16.mxu0 %v4843
  %5982 = vmatpush1.bf16.msra.mxu0 %v4842
  %5983 = vmatprep.subr.bf16.mxu0 %v4850
  %5984 = vmatpush1.bf16.msra.mxu0 %v4849
  %5985 = vmatprep.subr.bf16.mxu0 %v4857
  %5986 = vmatpush1.bf16.msra.mxu0 %v4856
  %5987 = vmatprep.subr.bf16.mxu0 %v4864
  %5988 = vmatpush1.bf16.msra.mxu0 %v4863
  %5989 = vmatprep.subr.bf16.mxu0 %v4871
  %5990 = vmatpush1.bf16.msra.mxu0 %v4870
  %5991 = vmatprep.subr.bf16.mxu0 %v4878
  %5992 = vmatpush1.bf16.msra.mxu0 %v4877
  %5993 = vmatprep.subr.bf16.mxu0 %v4885
  %5994 = vmatpush1.bf16.msra.mxu0 %v4884
  %5995 = vmatprep.subr.bf16.mxu0 %v4892
  %5996 = vmatpush1.bf16.msra.mxu0 %v4891
  %5997 = vmatprep.subr.bf16.mxu0 %v4899
  %5998 = vmatpush1.bf16.msra.mxu0 %v4898
  %5999 = vmatprep.subr.bf16.mxu0 %v4906
  %6000 = vmatpush1.bf16.msra.mxu0 %v4905
  %6001 = vmatprep.subr.bf16.mxu0 %v4913
  %6002 = vmatpush1.bf16.msra.mxu0 %v4912
  %6003 = vmatprep.subr.bf16.mxu0 %v4920
  %6004 = vmatpush1.bf16.msra.mxu0 %v4919
  %6005 = vmatprep.subr.bf16.mxu0 %v4927
  %6006 = vmatpush1.bf16.msra.mxu0 %v4926
  %6007 = vmatprep.subr.bf16.mxu0 %v4934
  %6008 = vmatpush1.bf16.msra.mxu0 %v4933
  %6009 = vmatprep.mubr.bf16.mxu0 %v2750
  %6010 = vmatmul.mubr.bf16.gmra.mrb[0].mxu0 %v2749
  %v6011 = vpop.f32.mrb[0].mxu0
  %v6012 = vadd.f32 %v5971, %v6011
  %v6013 = vpop.f32.mrb[0].mxu0
  %v6014 = vadd.f32 %v5973, %v6013
  %v6015 = vpop.f32.mrb[0].mxu0
  %v6016 = vpop.f32.mrb[0].mxu0
  %6017 = vdwg.mxu0
  %6018 = vmatprep.subr.bf16.mxu0 %v4941
  %6019 = vmatpush1.bf16.msra.mxu0 %v4940
  %6020 = vmatprep.subr.bf16.mxu0 %v4948
  %6021 = vmatpush1.bf16.msra.mxu0 %v4947
  %6022 = vmatprep.subr.bf16.mxu0 %v4955
  %6023 = vmatpush1.bf16.msra.mxu0 %v4954
  %6024 = vmatprep.subr.bf16.mxu0 %v4962
  %6025 = vmatpush1.bf16.msra.mxu0 %v4961
  %6026 = vmatprep.subr.bf16.mxu0 %v4969
  %6027 = vmatpush1.bf16.msra.mxu0 %v4968
  %6028 = vmatprep.subr.bf16.mxu0 %v4976
  %6029 = vmatpush1.bf16.msra.mxu0 %v4975
  %6030 = vmatprep.subr.bf16.mxu0 %v4983
  %6031 = vmatpush1.bf16.msra.mxu0 %v4982
  %6032 = vmatprep.subr.bf16.mxu0 %v4990
  %6033 = vmatpush1.bf16.msra.mxu0 %v4989
  %6034 = vmatprep.subr.bf16.mxu0 %v4997
  %6035 = vmatpush1.bf16.msra.mxu0 %v4996
  %6036 = vmatprep.subr.bf16.mxu0 %v5004
  %6037 = vmatpush1.bf16.msra.mxu0 %v5003
  %6038 = vmatprep.subr.bf16.mxu0 %v5011
  %6039 = vmatpush1.bf16.msra.mxu0 %v5010
  %6040 = vmatprep.subr.bf16.mxu0 %v5018
  %6041 = vmatpush1.bf16.msra.mxu0 %v5017
  %6042 = vmatprep.subr.bf16.mxu0 %v5025
  %6043 = vmatpush1.bf16.msra.mxu0 %v5024
  %6044 = vmatprep.subr.bf16.mxu0 %v5032
  %6045 = vmatpush1.bf16.msra.mxu0 %v5031
  %6046 = vmatprep.subr.bf16.mxu0 %v5039
  %6047 = vmatpush1.bf16.msra.mxu0 %v5038
  %6048 = vmatprep.subr.bf16.mxu0 %v5046
  %6049 = vmatpush1.bf16.msra.mxu0 %v5045
  %6050 = vmatprep.mubr.bf16.mxu0 %v2752
  %6051 = vmatmul.mubr.bf16.gmra.mrb[0].mxu0 %v2751
  %v6052 = vpop.f32.mrb[0].mxu0
  %v6053 = vadd.f32 %v6012, %v6052
  %v6054 = vpop.f32.mrb[0].mxu0
  %v6055 = vadd.f32 %v6014, %v6054
  %v6056 = vpop.f32.mrb[0].mxu0
  %v6057 = vpop.f32.mrb[0].mxu0
  %6058 = vdwg.mxu0
  %6059 = vmatprep.subr.bf16.mxu0 %v5053
  %6060 = vmatpush1.bf16.msra.mxu0 %v5052
  %6061 = vmatprep.subr.bf16.mxu0 %v5060
  %6062 = vmatpush1.bf16.msra.mxu0 %v5059
  %6063 = vmatprep.subr.bf16.mxu0 %v5067
  %6064 = vmatpush1.bf16.msra.mxu0 %v5066
  %6065 = vmatprep.subr.bf16.mxu0 %v5074
  %6066 = vmatpush1.bf16.msra.mxu0 %v5073
  %6067 = vmatprep.subr.bf16.mxu0 %v5081
  %6068 = vmatpush1.bf16.msra.mxu0 %v5080
  %6069 = vmatprep.subr.bf16.mxu0 %v5088
  %6070 = vmatpush1.bf16.msra.mxu0 %v5087
  %6071 = vmatprep.subr.bf16.mxu0 %v5095
  %6072 = vmatpush1.bf16.msra.mxu0 %v5094
  %6073 = vmatprep.subr.bf16.mxu0 %v5102
  %6074 = vmatpush1.bf16.msra.mxu0 %v5101
  %6075 = vmatprep.subr.bf16.mxu0 %v5109
  %6076 = vmatpush1.bf16.msra.mxu0 %v5108
  %6077 = vmatprep.subr.bf16.mxu0 %v5116
  %6078 = vmatpush1.bf16.msra.mxu0 %v5115
  %6079 = vmatprep.subr.bf16.mxu0 %v5123
  %6080 = vmatpush1.bf16.msra.mxu0 %v5122
  %6081 = vmatprep.subr.bf16.mxu0 %v5130
  %6082 = vmatpush1.bf16.msra.mxu0 %v5129
  %6083 = vmatprep.subr.bf16.mxu0 %v5137
  %6084 = vmatpush1.bf16.msra.mxu0 %v5136
  %6085 = vmatprep.subr.bf16.mxu0 %v5144
  %6086 = vmatpush1.bf16.msra.mxu0 %v5143
  %6087 = vmatprep.subr.bf16.mxu0 %v5151
  %6088 = vmatpush1.bf16.msra.mxu0 %v5150
  %6089 = vmatprep.subr.bf16.mxu0 %v5158
  %6090 = vmatpush1.bf16.msra.mxu0 %v5157
  %6091 = vmatprep.mubr.bf16.mxu0 %v2754
  %6092 = vmatmul.mubr.bf16.gmra.mrb[0].mxu0 %v2753
  %v6093 = vpop.f32.mrb[0].mxu0
  %v6094 = vadd.f32 %v6053, %v6093
  %v6095 = vpop.f32.mrb[0].mxu0
  %v6096 = vadd.f32 %v6055, %v6095
  %v6097 = vpop.f32.mrb[0].mxu0
  %v6098 = vpop.f32.mrb[0].mxu0
  %6099 = vdwg.mxu0
  %6100 = vmatprep.subr.bf16.mxu0 0
  %6101 = vmatpush1.bf16.msra.mxu0 %v4718
  %6102 = vmatprep.subr.bf16.mxu0 0
  %6103 = vmatpush1.bf16.msra.mxu0 %v4725
  %6104 = vmatprep.subr.bf16.mxu0 0
  %6105 = vmatpush1.bf16.msra.mxu0 %v4732
  %6106 = vmatprep.subr.bf16.mxu0 0
  %6107 = vmatpush1.bf16.msra.mxu0 %v4739
  %6108 = vmatprep.subr.bf16.mxu0 0
  %6109 = vmatpush1.bf16.msra.mxu0 %v4746
  %6110 = vmatprep.subr.bf16.mxu0 0
  %6111 = vmatpush1.bf16.msra.mxu0 %v4753
  %6112 = vmatprep.subr.bf16.mxu0 0
  %6113 = vmatpush1.bf16.msra.mxu0 %v4760
  %6114 = vmatprep.subr.bf16.mxu0 0
  %6115 = vmatpush1.bf16.msra.mxu0 %v4767
  %6116 = vmatprep.subr.bf16.mxu0 0
  %6117 = vmatpush1.bf16.msra.mxu0 %v4774
  %6118 = vmatprep.subr.bf16.mxu0 0
  %6119 = vmatpush1.bf16.msra.mxu0 %v4781
  %6120 = vmatprep.subr.bf16.mxu0 0
  %6121 = vmatpush1.bf16.msra.mxu0 %v4788
  %6122 = vmatprep.subr.bf16.mxu0 0
  %6123 = vmatpush1.bf16.msra.mxu0 %v4795
  %6124 = vmatprep.subr.bf16.mxu0 0
  %6125 = vmatpush1.bf16.msra.mxu0 %v4802
  %6126 = vmatprep.subr.bf16.mxu0 0
  %6127 = vmatpush1.bf16.msra.mxu0 %v4809
  %6128 = vmatprep.subr.bf16.mxu0 0
  %6129 = vmatpush1.bf16.msra.mxu0 %v4816
  %6130 = vmatprep.subr.bf16.mxu0 0
  %6131 = vmatpush1.bf16.msra.mxu0 %v4823
  %6132 = vmatprep.mubr.bf16.mxu0 %v2748
  %6133 = vmatmul.mubr.bf16.gmra.mrb[0].mxu0 %v2747
  %v6134 = vpop.f32.mrb[0].mxu0
  %v6135 = vadd.f32 %v3296, %v6134
  %v6136 = vpop.f32.mrb[0].mxu0
  %v6137 = vpop.f32.mrb[0].mxu0
  %v6138 = vpop.f32.mrb[0].mxu0
  %6139 = vdwg.mxu0
  %6140 = vmatprep.subr.bf16.mxu0 0
  %6141 = vmatpush1.bf16.msra.mxu0 %v4830
  %6142 = vmatprep.subr.bf16.mxu0 0
  %6143 = vmatpush1.bf16.msra.mxu0 %v4837
  %6144 = vmatprep.subr.bf16.mxu0 0
  %6145 = vmatpush1.bf16.msra.mxu0 %v4844
  %6146 = vmatprep.subr.bf16.mxu0 0
  %6147 = vmatpush1.bf16.msra.mxu0 %v4851
  %6148 = vmatprep.subr.bf16.mxu0 0
  %6149 = vmatpush1.bf16.msra.mxu0 %v4858
  %6150 = vmatprep.subr.bf16.mxu0 0
  %6151 = vmatpush1.bf16.msra.mxu0 %v4865
  %6152 = vmatprep.subr.bf16.mxu0 0
  %6153 = vmatpush1.bf16.msra.mxu0 %v4872
  %6154 = vmatprep.subr.bf16.mxu0 0
  %6155 = vmatpush1.bf16.msra.mxu0 %v4879
  %6156 = vmatprep.subr.bf16.mxu0 0
  %6157 = vmatpush1.bf16.msra.mxu0 %v4886
  %6158 = vmatprep.subr.bf16.mxu0 0
  %6159 = vmatpush1.bf16.msra.mxu0 %v4893
  %6160 = vmatprep.subr.bf16.mxu0 0
  %6161 = vmatpush1.bf16.msra.mxu0 %v4900
  %6162 = vmatprep.subr.bf16.mxu0 0
  %6163 = vmatpush1.bf16.msra.mxu0 %v4907
  %6164 = vmatprep.subr.bf16.mxu0 0
  %6165 = vmatpush1.bf16.msra.mxu0 %v4914
  %6166 = vmatprep.subr.bf16.mxu0 0
  %6167 = vmatpush1.bf16.msra.mxu0 %v4921
  %6168 = vmatprep.subr.bf16.mxu0 0
  %6169 = vmatpush1.bf16.msra.mxu0 %v4928
  %6170 = vmatprep.subr.bf16.mxu0 0
  %6171 = vmatpush1.bf16.msra.mxu0 %v4935
  %6172 = vmatprep.mubr.bf16.mxu0 %v2750
  %6173 = vmatmul.mubr.bf16.gmra.mrb[0].mxu0 %v2749
  %v6174 = vpop.f32.mrb[0].mxu0
  %v6175 = vadd.f32 %v6135, %v6174
  %v6176 = vpop.f32.mrb[0].mxu0
  %v6177 = vpop.f32.mrb[0].mxu0
  %v6178 = vpop.f32.mrb[0].mxu0
  %6179 = vdwg.mxu0
  %6180 = vmatprep.subr.bf16.mxu0 0
  %6181 = vmatpush1.bf16.msra.mxu0 %v4942
  %6182 = vmatprep.subr.bf16.mxu0 0
  %6183 = vmatpush1.bf16.msra.mxu0 %v4949
  %6184 = vmatprep.subr.bf16.mxu0 0
  %6185 = vmatpush1.bf16.msra.mxu0 %v4956
  %6186 = vmatprep.subr.bf16.mxu0 0
  %6187 = vmatpush1.bf16.msra.mxu0 %v4963
  %6188 = vmatprep.subr.bf16.mxu0 0
  %6189 = vmatpush1.bf16.msra.mxu0 %v4970
  %6190 = vmatprep.subr.bf16.mxu0 0
  %6191 = vmatpush1.bf16.msra.mxu0 %v4977
  %6192 = vmatprep.subr.bf16.mxu0 0
  %6193 = vmatpush1.bf16.msra.mxu0 %v4984
  %6194 = vmatprep.subr.bf16.mxu0 0
  %6195 = vmatpush1.bf16.msra.mxu0 %v4991
  %6196 = vmatprep.subr.bf16.mxu0 0
  %6197 = vmatpush1.bf16.msra.mxu0 %v4998
  %6198 = vmatprep.subr.bf16.mxu0 0
  %6199 = vmatpush1.bf16.msra.mxu0 %v5005
  %6200 = vmatprep.subr.bf16.mxu0 0
  %6201 = vmatpush1.bf16.msra.mxu0 %v5012
  %6202 = vmatprep.subr.bf16.mxu0 0
  %6203 = vmatpush1.bf16.msra.mxu0 %v5019
  %6204 = vmatprep.subr.bf16.mxu0 0
  %6205 = vmatpush1.bf16.msra.mxu0 %v5026
  %6206 = vmatprep.subr.bf16.mxu0 0
  %6207 = vmatpush1.bf16.msra.mxu0 %v5033
  %6208 = vmatprep.subr.bf16.mxu0 0
  %6209 = vmatpush1.bf16.msra.mxu0 %v5040
  %6210 = vmatprep.subr.bf16.mxu0 0
  %6211 = vmatpush1.bf16.msra.mxu0 %v5047
  %6212 = vmatprep.mubr.bf16.mxu0 %v2752
  %6213 = vmatmul.mubr.bf16.gmra.mrb[0].mxu0 %v2751
  %v6214 = vpop.f32.mrb[0].mxu0
  %v6215 = vadd.f32 %v6175, %v6214
  %v6216 = vpop.f32.mrb[0].mxu0
  %v6217 = vpop.f32.mrb[0].mxu0
  %v6218 = vpop.f32.mrb[0].mxu0
  %6219 = vdwg.mxu0
  %6220 = vmatprep.subr.bf16.mxu0 0
  %6221 = vmatpush1.bf16.msra.mxu0 %v5054
  %6222 = vmatprep.subr.bf16.mxu0 0
  %6223 = vmatpush1.bf16.msra.mxu0 %v5061
  %6224 = vmatprep.subr.bf16.mxu0 0
  %6225 = vmatpush1.bf16.msra.mxu0 %v5068
  %6226 = vmatprep.subr.bf16.mxu0 0
  %6227 = vmatpush1.bf16.msra.mxu0 %v5075
  %6228 = vmatprep.subr.bf16.mxu0 0
  %6229 = vmatpush1.bf16.msra.mxu0 %v5082
  %6230 = vmatprep.subr.bf16.mxu0 0
  %6231 = vmatpush1.bf16.msra.mxu0 %v5089
  %6232 = vmatprep.subr.bf16.mxu0 0
  %6233 = vmatpush1.bf16.msra.mxu0 %v5096
  %6234 = vmatprep.subr.bf16.mxu0 0
  %6235 = vmatpush1.bf16.msra.mxu0 %v5103
  %6236 = vmatprep.subr.bf16.mxu0 0
  %6237 = vmatpush1.bf16.msra.mxu0 %v5110
  %6238 = vmatprep.subr.bf16.mxu0 0
  %6239 = vmatpush1.bf16.msra.mxu0 %v5117
  %6240 = vmatprep.subr.bf16.mxu0 0
  %6241 = vmatpush1.bf16.msra.mxu0 %v5124
  %6242 = vmatprep.subr.bf16.mxu0 0
  %6243 = vmatpush1.bf16.msra.mxu0 %v5131
  %6244 = vmatprep.subr.bf16.mxu0 0
  %6245 = vmatpush1.bf16.msra.mxu0 %v5138
  %6246 = vmatprep.subr.bf16.mxu0 0
  %6247 = vmatpush1.bf16.msra.mxu0 %v5145
  %6248 = vmatprep.subr.bf16.mxu0 0
  %6249 = vmatpush1.bf16.msra.mxu0 %v5152
  %6250 = vmatprep.subr.bf16.mxu0 0
  %6251 = vmatpush1.bf16.msra.mxu0 %v5159
  %6252 = vmatprep.mubr.bf16.mxu0 %v2754
  %6253 = vmatmul.mubr.bf16.gmra.mrb[0].mxu0 %v2753
  %v6254 = vpop.f32.mrb[0].mxu0
  %v6255 = vadd.f32 %v6215, %v6254
  %v6256 = vpop.f32.mrb[0].mxu0
  %v6257 = vpop.f32.mrb[0].mxu0
  %v6258 = vpop.f32.mrb[0].mxu0
  %6259 = vdwg.mxu0
  %v6260 = vtanh.pop %v5766
  %v6261 = vtanh.pop %v5768
  %v6262 = vtanh.pop %v5930
  %v6263 = vtanh.pop %v5932
  %v6264 = vtanh.pop %v6094
  %v6265 = vtanh.pop %v6096
  %v6266 = vtanh.pop %v6255
  %6267 = vst [vmem:[%s11] sm:$0xff] %v6260
  %6268 = vst [vmem:[%s11 + $0x8] sm:$0xff] %v6261
  %6269 = vst [vmem:[%s11 + $0x10] sm:$0xff] %v6262
  %6270 = vst [vmem:[%s11 + $0x18] sm:$0xff] %v6263
  %6271 = vst [vmem:[%s11 + $0x20] sm:$0xff] %v6264
  %6272 = vst [vmem:[%s11 + $0x28] sm:$0xff] %v6265
  %vm6273 = vcmask 130048
  %6274 = vst.msk [vmem:[%s11 + $0x30] sm:$0xff] %vm6273, %v6266
  // Predicated region
  $region46: #{generator_forward.1} parent=0 // pred_check
    _
  $region47: #{generator_forward.1} parent=0 // pred_check_branch
    %6276 = sbr.rel (0) target = $region49
  $region48: #{generator_forward.1} parent=0 // pred_region
    _
  $region49: #{generator_forward.1} parent=0 // pred_fallthru
    _
  // Predicated region
  $region50: #{generator_forward.1} parent=0 // pred_check
    _
  $region51: #{generator_forward.1} parent=0 // pred_check_branch
    %6278 = sbr.rel (0) target = $region53
  $region52: #{generator_forward.1} parent=0 // pred_region
    _
  $region53: #{generator_forward.1} parent=0 // pred_fallthru
    _

</llo_original>
